<compile_context>
chip_gen: v5e
topology: v5e:2x2
jax: 0.10.0
libtpu: 0.0.40
codegen_flags: <defaults>
</compile_context>

<pallas_src>
import math

import jax
import jax.numpy as jnp
from jax.experimental import pallas as pl
from jax.experimental.pallas import tpu as pltpu


# -----------------------------------------------------------------------------
# Fused Pallas kernel: one grid point == one full stream (Linear + 3-layer LSTM)
# -----------------------------------------------------------------------------
def _make_nslstm_kernel(T, B, In, H, L):
    def kernel(x_ref,       # (1, T*B, In)   stream input, time-major rows
               hin_ref,     # (1, L*B, In)   raw initial state (pre-Linear)
               lin_w_ref,   # (1, In, H)     Linear weight (transposed)
               lin_b_ref,   # (1, 1, H)      Linear bias
               wih0_ref,    # (1, In, 4H)    layer-0 input weights (transposed)
               wih12_ref,   # (1, L-1, H, 4H) layer-1..L-1 input weights
               whh_ref,     # (1, L, H, 4H)  recurrent weights (transposed)
               bias_ref,    # (1, L, 1, 4H)  folded b_ih + b_hh
               y_ref,       # (1, T*B, H)    output (last layer hidden states)
               act_scr):    # VMEM (T*B, H)  inter-layer activations
        # Initial hidden/cell state for all layers of this stream:
        #   h0_all[l*B:(l+1)*B] == Linear(h_in[l])
        h0_all = (jnp.dot(hin_ref[0], lin_w_ref[0],
                          preferred_element_type=jnp.float32)
                  + lin_b_ref[0])                                   # (L*B, H)

        x2d = x_ref[0]                                              # (T*B, In)
        for l in range(L):
            w_ih = wih0_ref[0] if l == 0 else wih12_ref[0, l - 1]   # (·, 4H)
            w_hh = whh_ref[0, l]                                    # (H, 4H)
            b = bias_ref[0, l]                                      # (1, 4H)

            # Hoisted input projection for all T steps at once (one MXU op).
            gates_x = jnp.dot(x2d, w_ih,
                              preferred_element_type=jnp.float32) + b  # (T*B, 4H)

            h = h0_all[l * B:(l + 1) * B]                           # (B, H)
            c = h                                                   # c0 == h0
            last = (l == L - 1)
            for t in range(T):  # static unroll: short fixed trip count
                g = gates_x[t * B:(t + 1) * B] + jnp.dot(
                    h, w_hh, preferred_element_type=jnp.float32)    # (B, 4H)
                # PyTorch gate order: i, f, g, o
                i_g = jax.nn.sigmoid(g[:, 0 * H:1 * H])
                f_g = jax.nn.sigmoid(g[:, 1 * H:2 * H])
                g_g = jnp.tanh(g[:, 2 * H:3 * H])
                o_g = jax.nn.sigmoid(g[:, 3 * H:4 * H])
                c = f_g * c + i_g * g_g
                h = o_g * jnp.tanh(c)
                if last:
                    y_ref[0, t * B:(t + 1) * B, :] = h.astype(y_ref.dtype)
                else:
                    act_scr[t * B:(t + 1) * B, :] = h
            if not last:
                x2d = act_scr[...]                                  # next layer input

    return kernel


def nslstm_forward(params, uin, vin, pin, uh, vh, ph):
    """Fused NSLSTM forward. Returns (u, v, p), each (T, B, H)."""
    T, B, In = uin.shape
    L = len(params["u_lstm"])
    H = params["u_lin"][0].shape[1]
    names = ("u", "v", "p")

    # Stack the three independent streams along a leading axis and flatten to
    # lane-friendly 2-D row layouts (no reshapes needed inside the kernel).
    x = jnp.stack([uin, vin, pin]).reshape(3, T * B, In)
    hin = jnp.stack([uh, vh, ph]).reshape(3, L * B, In)
    lin_w = jnp.stack([params[n + "_lin"][0] for n in names])        # (3, In, H)
    lin_b = jnp.stack([params[n + "_lin"][1] for n in names])        # (3, 1, H)
    wih0 = jnp.stack([params[n + "_lstm"][0][0] for n in names])     # (3, In, 4H)
    wih12 = jnp.stack([jnp.stack([params[n + "_lstm"][l][0]
                                  for l in range(1, L)])
                       for n in names])                              # (3, L-1, H, 4H)
    whh = jnp.stack([jnp.stack([params[n + "_lstm"][l][1]
                                for l in range(L)])
                     for n in names])                                # (3, L, H, 4H)
    bias = jnp.stack([jnp.stack([params[n + "_lstm"][l][2]
                                 for l in range(L)])
                      for n in names])                               # (3, L, 1, 4H)

    kernel = _make_nslstm_kernel(T, B, In, H, L)
    y = pl.pallas_call(
        kernel,
        out_shape=jax.ShapeDtypeStruct((3, T * B, H), jnp.float32),
        grid=(3,),
        in_specs=[
            pl.BlockSpec((1, T * B, In), lambda s: (s, 0, 0)),
            pl.BlockSpec((1, L * B, In), lambda s: (s, 0, 0)),
            pl.BlockSpec((1, In, H), lambda s: (s, 0, 0)),
            pl.BlockSpec((1, 1, H), lambda s: (s, 0, 0)),
            pl.BlockSpec((1, In, 4 * H), lambda s: (s, 0, 0)),
            pl.BlockSpec((1, L - 1, H, 4 * H), lambda s: (s, 0, 0, 0)),
            pl.BlockSpec((1, L, H, 4 * H), lambda s: (s, 0, 0, 0)),
            pl.BlockSpec((1, L, 1, 4 * H), lambda s: (s, 0, 0, 0)),
        ],
        out_specs=pl.BlockSpec((1, T * B, H), lambda s: (s, 0, 0)),
        scratch_shapes=[pltpu.VMEM((T * B, H), jnp.float32)],
        compiler_params=pltpu.CompilerParams(
            dimension_semantics=("parallel",)),
    )(x, hin, lin_w, lin_b, wih0, wih12, whh, bias)

    y = y.reshape(3, T, B, H)
    return y[0], y[1], y[2]


# -----------------------------------------------------------------------------
# Parameter init (deterministic, mimics PyTorch default init ranges)
# -----------------------------------------------------------------------------
def init_lstm_params(key, in_size, hidden, num_layers=3):
    params = []
    bound = 1.0 / math.sqrt(hidden)
    for l in range(num_layers):
        inp = in_size if l == 0 else hidden
        key, k1, k2, k3, k4 = jax.random.split(key, 5)
        w_ih = jax.random.uniform(k1, (4 * hidden, inp), jnp.float32, -bound, bound)
        w_hh = jax.random.uniform(k2, (4 * hidden, hidden), jnp.float32, -bound, bound)
        b_ih = jax.random.uniform(k3, (4 * hidden,), jnp.float32, -bound, bound)
        b_hh = jax.random.uniform(k4, (4 * hidden,), jnp.float32, -bound, bound)
        # pre-transpose for x @ W layout; fold the two biases together
        params.append((w_ih.T, w_hh.T, (b_ih + b_hh)[None, :]))
    return key, params


def init_linear_params(key, in_size, out_size):
    bound = 1.0 / math.sqrt(in_size)
    key, k1, k2 = jax.random.split(key, 3)
    w = jax.random.uniform(k1, (out_size, in_size), jnp.float32, -bound, bound)
    b = jax.random.uniform(k2, (out_size,), jnp.float32, -bound, bound)
    return key, (w.T, b[None, :])


# -----------------------------------------------------------------------------
# Pure-JAX reference (for correctness check)
# -----------------------------------------------------------------------------
def _lstm_layer_ref(x, w_ih_t, w_hh_t, bias, h0, c0):
    def step(carry, xt):
        h, c = carry
        gates = xt @ w_ih_t + h @ w_hh_t + bias
        i, f, g, o = jnp.split(gates, 4, axis=-1)
        i = jax.nn.sigmoid(i)
        f = jax.nn.sigmoid(f)
        g = jnp.tanh(g)
        o = jax.nn.sigmoid(o)
        c = f * c + i * g
        h = o * jnp.tanh(c)
        return (h, c), h

    _, ys = jax.lax.scan(step, (h0, c0), x)
    return ys


def nslstm_forward_ref(params, uin, vin, pin, uh, vh, ph):
    outs = []
    for xin, h_in, name in ((uin, uh, "u"), (vin, vh, "v"), (pin, ph, "p")):
        w_t, b = params[name + "_lin"]
        h0 = h_in @ w_t + b
        x = xin
        for l, (w_ih_t, w_hh_t, bias) in enumerate(params[name + "_lstm"]):
            x = _lstm_layer_ref(x, w_ih_t, w_hh_t, bias, h0[l], h0[l])
        outs.append(x)
    return tuple(outs)


# -----------------------------------------------------------------------------
if __name__ == "__main__":
    IN_SIZE = 32
    OUT_SIZE = 32
    NUM_LAYERS = 3
    SEQ = 8
    BATCH = 4

    key = jax.random.PRNGKey(0)

    params = {}
    pkey = jax.random.PRNGKey(42)
    for name in ("u", "v", "p"):
        pkey, lstm_p = init_lstm_params(pkey, IN_SIZE, OUT_SIZE, NUM_LAYERS)
        pkey, lin_p = init_linear_params(pkey, IN_SIZE, OUT_SIZE)
        params[name + "_lstm"] = lstm_p
        params[name + "_lin"] = lin_p

    key, *ks = jax.random.split(key, 7)
    uin = jax.random.normal(ks[0], (SEQ, BATCH, IN_SIZE), jnp.float32)
    vin = jax.random.normal(ks[1], (SEQ, BATCH, IN_SIZE), jnp.float32)
    pin = jax.random.normal(ks[2], (SEQ, BATCH, IN_SIZE), jnp.float32)
    uh = jax.random.normal(ks[3], (NUM_LAYERS, BATCH, IN_SIZE), jnp.float32)
    vh = jax.random.normal(ks[4], (NUM_LAYERS, BATCH, IN_SIZE), jnp.float32)
    ph = jax.random.normal(ks[5], (NUM_LAYERS, BATCH, IN_SIZE), jnp.float32)

    fwd = jax.jit(nslstm_forward)
    u, v, p = fwd(params, uin, vin, pin, uh, vh, ph)
    jax.block_until_ready((u, v, p))

    u_ref, v_ref, p_ref = nslstm_forward_ref(params, uin, vin, pin, uh, vh, ph)
    for got, ref in ((u, u_ref), (v, v_ref), (p, p_ref)):
        assert got.shape == (SEQ, BATCH, OUT_SIZE)
        assert jnp.allclose(got, ref, atol=2e-3, rtol=2e-3), "mismatch vs JAX reference"

    print("KERNEL_OK")
</pallas_src>

<mosaic_0001>
module attributes {stable_mosaic.version = 11 : i64} {
  func.func @kernel(%arg0: i32, %arg1: memref<1x32x32xf32, #tpu.memory_space<vmem>>, %arg2: memref<1x12x32xf32, #tpu.memory_space<vmem>>, %arg3: memref<1x32x32xf32, #tpu.memory_space<vmem>>, %arg4: memref<1x1x32xf32, #tpu.memory_space<vmem>>, %arg5: memref<1x32x128xf32, #tpu.memory_space<vmem>>, %arg6: memref<1x2x32x128xf32, #tpu.memory_space<vmem>>, %arg7: memref<1x3x32x128xf32, #tpu.memory_space<vmem>>, %arg8: memref<1x3x1x128xf32, #tpu.memory_space<vmem>>, %arg9: memref<1x32x32xf32, #tpu.memory_space<vmem>>, %arg10: memref<32x32xf32, #tpu.memory_space<vmem>>) attributes {dimension_semantics = [#tpu.dimension_semantics<parallel>], iteration_bounds = array<i64: 3>, scalar_prefetch = 0 : i64, scratch_operands = 1 : i64, tpu.core_type = #tpu.core_type<tc>, window_params = [{transform_indices = @transform_0, window_bounds = array<i64: 1, 32, 32>}, {transform_indices = @transform_1, window_bounds = array<i64: 1, 12, 32>}, {transform_indices = @transform_2, window_bounds = array<i64: 1, 32, 32>}, {transform_indices = @transform_3, window_bounds = array<i64: 1, 1, 32>}, {transform_indices = @transform_4, window_bounds = array<i64: 1, 32, 128>}, {transform_indices = @transform_5, window_bounds = array<i64: 1, 2, 32, 128>}, {transform_indices = @transform_6, window_bounds = array<i64: 1, 3, 32, 128>}, {transform_indices = @transform_7, window_bounds = array<i64: 1, 3, 1, 128>}, {transform_indices = @transform_8, window_bounds = array<i64: 1, 32, 32>}]} {
    %c0 = arith.constant 0 : index
    %c0_0 = arith.constant 0 : index
    %c0_1 = arith.constant 0 : index
    %0 = vector.load %arg2[%c0, %c0_0, %c0_1] : memref<1x12x32xf32, #tpu.memory_space<vmem>>, vector<1x12x32xf32>
    %1 = vector.shape_cast %0 : vector<1x12x32xf32> to vector<12x32xf32>
    %c0_2 = arith.constant 0 : index
    %c0_3 = arith.constant 0 : index
    %c0_4 = arith.constant 0 : index
    %2 = vector.load %arg3[%c0_2, %c0_3, %c0_4] : memref<1x32x32xf32, #tpu.memory_space<vmem>>, vector<1x32x32xf32>
    %3 = vector.shape_cast %2 : vector<1x32x32xf32> to vector<32x32xf32>
    %cst = arith.constant dense<0.000000e+00> : vector<12x32xf32>
    %4 = tpu.matmul %1, %3, %cst {dimension_numbers = #tpu.dot_dimension_numbers<[1], [0], [0], [1], [0, 0, 1, 1], [], []>} : vector<12x32xf32>, vector<32x32xf32>, vector<12x32xf32> -> vector<12x32xf32>
    %c0_5 = arith.constant 0 : index
    %c0_6 = arith.constant 0 : index
    %c0_7 = arith.constant 0 : index
    %5 = vector.load %arg4[%c0_5, %c0_6, %c0_7] : memref<1x1x32xf32, #tpu.memory_space<vmem>>, vector<1x1x32xf32>
    %6 = vector.shape_cast %5 : vector<1x1x32xf32> to vector<1x32xf32>
    %7 = vector.broadcast %6 : vector<1x32xf32> to vector<12x32xf32>
    %8 = arith.addf %4, %7 : vector<12x32xf32>
    %c0_8 = arith.constant 0 : index
    %c0_9 = arith.constant 0 : index
    %c0_10 = arith.constant 0 : index
    %9 = vector.load %arg1[%c0_8, %c0_9, %c0_10] : memref<1x32x32xf32, #tpu.memory_space<vmem>>, vector<1x32x32xf32>
    %10 = vector.shape_cast %9 : vector<1x32x32xf32> to vector<32x32xf32>
    %c0_11 = arith.constant 0 : index
    %c0_12 = arith.constant 0 : index
    %c0_13 = arith.constant 0 : index
    %11 = vector.load %arg5[%c0_11, %c0_12, %c0_13] : memref<1x32x128xf32, #tpu.memory_space<vmem>>, vector<1x32x128xf32>
    %12 = vector.shape_cast %11 : vector<1x32x128xf32> to vector<32x128xf32>
    %c0_14 = arith.constant 0 : index
    %c0_15 = arith.constant 0 : index
    %c0_16 = arith.constant 0 : index
    %c0_17 = arith.constant 0 : index
    %13 = vector.load %arg7[%c0_14, %c0_15, %c0_16, %c0_17] : memref<1x3x32x128xf32, #tpu.memory_space<vmem>>, vector<1x1x32x128xf32>
    %14 = vector.shape_cast %13 : vector<1x1x32x128xf32> to vector<32x128xf32>
    %c0_18 = arith.constant 0 : index
    %c0_19 = arith.constant 0 : index
    %c0_20 = arith.constant 0 : index
    %c0_21 = arith.constant 0 : index
    %15 = vector.load %arg8[%c0_18, %c0_19, %c0_20, %c0_21] : memref<1x3x1x128xf32, #tpu.memory_space<vmem>>, vector<1x1x1x128xf32>
    %16 = vector.shape_cast %15 : vector<1x1x1x128xf32> to vector<1x128xf32>
    %cst_22 = arith.constant dense<0.000000e+00> : vector<32x128xf32>
    %17 = tpu.matmul %10, %12, %cst_22 {dimension_numbers = #tpu.dot_dimension_numbers<[1], [0], [0], [1], [0, 0, 1, 1], [], []>} : vector<32x32xf32>, vector<32x128xf32>, vector<32x128xf32> -> vector<32x128xf32>
    %18 = vector.broadcast %16 : vector<1x128xf32> to vector<32x128xf32>
    %19 = arith.addf %17, %18 : vector<32x128xf32>
    %20 = vector.extract_strided_slice %8 {offsets = [0, 0], sizes = [4, 32], strides = [1, 1]} : vector<12x32xf32> to vector<4x32xf32>
    %21 = vector.extract_strided_slice %19 {offsets = [0, 0], sizes = [4, 128], strides = [1, 1]} : vector<32x128xf32> to vector<4x128xf32>
    %cst_23 = arith.constant dense<0.000000e+00> : vector<4x128xf32>
    %22 = tpu.matmul %20, %14, %cst_23 {dimension_numbers = #tpu.dot_dimension_numbers<[1], [0], [0], [1], [0, 0, 1, 1], [], []>} : vector<4x32xf32>, vector<32x128xf32>, vector<4x128xf32> -> vector<4x128xf32>
    %23 = arith.addf %21, %22 : vector<4x128xf32>
    %24 = vector.extract_strided_slice %23 {offsets = [0, 0], sizes = [4, 32], strides = [1, 1]} : vector<4x128xf32> to vector<4x32xf32>
    %25 = arith.negf %24 : vector<4x32xf32>
    %26 = math.exp %25 : vector<4x32xf32>
    %cst_24 = arith.constant 1.000000e+00 : f32
    %27 = vector.broadcast %cst_24 : f32 to vector<4x32xf32>
    %28 = arith.addf %27, %26 : vector<4x32xf32>
    %29 = arith.divf %27, %28 : vector<4x32xf32>
    %30 = vector.extract_strided_slice %23 {offsets = [0, 32], sizes = [4, 32], strides = [1, 1]} : vector<4x128xf32> to vector<4x32xf32>
    %31 = arith.negf %30 : vector<4x32xf32>
    %32 = math.exp %31 : vector<4x32xf32>
    %cst_25 = arith.constant 1.000000e+00 : f32
    %33 = vector.broadcast %cst_25 : f32 to vector<4x32xf32>
    %34 = arith.addf %33, %32 : vector<4x32xf32>
    %35 = arith.divf %33, %34 : vector<4x32xf32>
    %36 = vector.extract_strided_slice %23 {offsets = [0, 64], sizes = [4, 32], strides = [1, 1]} : vector<4x128xf32> to vector<4x32xf32>
    %37 = math.tanh %36 : vector<4x32xf32>
    %38 = vector.extract_strided_slice %23 {offsets = [0, 96], sizes = [4, 32], strides = [1, 1]} : vector<4x128xf32> to vector<4x32xf32>
    %39 = arith.negf %38 : vector<4x32xf32>
    %40 = math.exp %39 : vector<4x32xf32>
    %cst_26 = arith.constant 1.000000e+00 : f32
    %41 = vector.broadcast %cst_26 : f32 to vector<4x32xf32>
    %42 = arith.addf %41, %40 : vector<4x32xf32>
    %43 = arith.divf %41, %42 : vector<4x32xf32>
    %44 = arith.mulf %35, %20 : vector<4x32xf32>
    %45 = arith.mulf %29, %37 : vector<4x32xf32>
    %46 = arith.addf %44, %45 : vector<4x32xf32>
    %47 = math.tanh %46 : vector<4x32xf32>
    %48 = arith.mulf %43, %47 : vector<4x32xf32>
    %c0_27 = arith.constant 0 : index
    %c0_28 = arith.constant 0 : index
    %49 = vector.load %arg10[%c0_27, %c0_28] : memref<32x32xf32, #tpu.memory_space<vmem>>, vector<4x32xf32>
    tpu.vector_store %arg10[%c0_27, %c0_28], %48 {strides = array<i32>} : memref<32x32xf32, #tpu.memory_space<vmem>>, vector<4x32xf32>,
    %50 = vector.extract_strided_slice %19 {offsets = [4, 0], sizes = [4, 128], strides = [1, 1]} : vector<32x128xf32> to vector<4x128xf32>
    %cst_29 = arith.constant dense<0.000000e+00> : vector<4x128xf32>
    %51 = tpu.matmul %48, %14, %cst_29 {dimension_numbers = #tpu.dot_dimension_numbers<[1], [0], [0], [1], [0, 0, 1, 1], [], []>} : vector<4x32xf32>, vector<32x128xf32>, vector<4x128xf32> -> vector<4x128xf32>
    %52 = arith.addf %50, %51 : vector<4x128xf32>
    %53 = vector.extract_strided_slice %52 {offsets = [0, 0], sizes = [4, 32], strides = [1, 1]} : vector<4x128xf32> to vector<4x32xf32>
    %54 = arith.negf %53 : vector<4x32xf32>
    %55 = math.exp %54 : vector<4x32xf32>
    %cst_30 = arith.constant 1.000000e+00 : f32
    %56 = vector.broadcast %cst_30 : f32 to vector<4x32xf32>
    %57 = arith.addf %56, %55 : vector<4x32xf32>
    %58 = arith.divf %56, %57 : vector<4x32xf32>
    %59 = vector.extract_strided_slice %52 {offsets = [0, 32], sizes = [4, 32], strides = [1, 1]} : vector<4x128xf32> to vector<4x32xf32>
    %60 = arith.negf %59 : vector<4x32xf32>
    %61 = math.exp %60 : vector<4x32xf32>
    %cst_31 = arith.constant 1.000000e+00 : f32
    %62 = vector.broadcast %cst_31 : f32 to vector<4x32xf32>
    %63 = arith.addf %62, %61 : vector<4x32xf32>
    %64 = arith.divf %62, %63 : vector<4x32xf32>
    %65 = vector.extract_strided_slice %52 {offsets = [0, 64], sizes = [4, 32], strides = [1, 1]} : vector<4x128xf32> to vector<4x32xf32>
    %66 = math.tanh %65 : vector<4x32xf32>
    %67 = vector.extract_strided_slice %52 {offsets = [0, 96], sizes = [4, 32], strides = [1, 1]} : vector<4x128xf32> to vector<4x32xf32>
    %68 = arith.negf %67 : vector<4x32xf32>
    %69 = math.exp %68 : vector<4x32xf32>
    %cst_32 = arith.constant 1.000000e+00 : f32
    %70 = vector.broadcast %cst_32 : f32 to vector<4x32xf32>
    %71 = arith.addf %70, %69 : vector<4x32xf32>
    %72 = arith.divf %70, %71 : vector<4x32xf32>
    %73 = arith.mulf %64, %46 : vector<4x32xf32>
    %74 = arith.mulf %58, %66 : vector<4x32xf32>
    %75 = arith.addf %73, %74 : vector<4x32xf32>
    %76 = math.tanh %75 : vector<4x32xf32>
    %77 = arith.mulf %72, %76 : vector<4x32xf32>
    %c4 = arith.constant 4 : index
    %c0_33 = arith.constant 0 : index
    %78 = vector.load %arg10[%c4, %c0_33] : memref<32x32xf32, #tpu.memory_space<vmem>>, vector<4x32xf32>
    tpu.vector_store %arg10[%c4, %c0_33], %77 {strides = array<i32>} : memref<32x32xf32, #tpu.memory_space<vmem>>, vector<4x32xf32>,
    %79 = vector.extract_strided_slice %19 {offsets = [8, 0], sizes = [4, 128], strides = [1, 1]} : vector<32x128xf32> to vector<4x128xf32>
    %cst_34 = arith.constant dense<0.000000e+00> : vector<4x128xf32>
    %80 = tpu.matmul %77, %14, %cst_34 {dimension_numbers = #tpu.dot_dimension_numbers<[1], [0], [0], [1], [0, 0, 1, 1], [], []>} : vector<4x32xf32>, vector<32x128xf32>, vector<4x128xf32> -> vector<4x128xf32>
    %81 = arith.addf %79, %80 : vector<4x128xf32>
    %82 = vector.extract_strided_slice %81 {offsets = [0, 0], sizes = [4, 32], strides = [1, 1]} : vector<4x128xf32> to vector<4x32xf32>
    %83 = arith.negf %82 : vector<4x32xf32>
    %84 = math.exp %83 : vector<4x32xf32>
    %cst_35 = arith.constant 1.000000e+00 : f32
    %85 = vector.broadcast %cst_35 : f32 to vector<4x32xf32>
    %86 = arith.addf %85, %84 : vector<4x32xf32>
    %87 = arith.divf %85, %86 : vector<4x32xf32>
    %88 = vector.extract_strided_slice %81 {offsets = [0, 32], sizes = [4, 32], strides = [1, 1]} : vector<4x128xf32> to vector<4x32xf32>
    %89 = arith.negf %88 : vector<4x32xf32>
    %90 = math.exp %89 : vector<4x32xf32>
    %cst_36 = arith.constant 1.000000e+00 : f32
    %91 = vector.broadcast %cst_36 : f32 to vector<4x32xf32>
    %92 = arith.addf %91, %90 : vector<4x32xf32>
    %93 = arith.divf %91, %92 : vector<4x32xf32>
    %94 = vector.extract_strided_slice %81 {offsets = [0, 64], sizes = [4, 32], strides = [1, 1]} : vector<4x128xf32> to vector<4x32xf32>
    %95 = math.tanh %94 : vector<4x32xf32>
    %96 = vector.extract_strided_slice %81 {offsets = [0, 96], sizes = [4, 32], strides = [1, 1]} : vector<4x128xf32> to vector<4x32xf32>
    %97 = arith.negf %96 : vector<4x32xf32>
    %98 = math.exp %97 : vector<4x32xf32>
    %cst_37 = arith.constant 1.000000e+00 : f32
    %99 = vector.broadcast %cst_37 : f32 to vector<4x32xf32>
    %100 = arith.addf %99, %98 : vector<4x32xf32>
    %101 = arith.divf %99, %100 : vector<4x32xf32>
    %102 = arith.mulf %93, %75 : vector<4x32xf32>
    %103 = arith.mulf %87, %95 : vector<4x32xf32>
    %104 = arith.addf %102, %103 : vector<4x32xf32>
    %105 = math.tanh %104 : vector<4x32xf32>
    %106 = arith.mulf %101, %105 : vector<4x32xf32>
    %c8 = arith.constant 8 : index
    %c0_38 = arith.constant 0 : index
    %107 = vector.load %arg10[%c8, %c0_38] : memref<32x32xf32, #tpu.memory_space<vmem>>, vector<4x32xf32>
    tpu.vector_store %arg10[%c8, %c0_38], %106 {strides = array<i32>} : memref<32x32xf32, #tpu.memory_space<vmem>>, vector<4x32xf32>,
    %108 = vector.extract_strided_slice %19 {offsets = [12, 0], sizes = [4, 128], strides = [1, 1]} : vector<32x128xf32> to vector<4x128xf32>
    %cst_39 = arith.constant dense<0.000000e+00> : vector<4x128xf32>
    %109 = tpu.matmul %106, %14, %cst_39 {dimension_numbers = #tpu.dot_dimension_numbers<[1], [0], [0], [1], [0, 0, 1, 1], [], []>} : vector<4x32xf32>, vector<32x128xf32>, vector<4x128xf32> -> vector<4x128xf32>
    %110 = arith.addf %108, %109 : vector<4x128xf32>
    %111 = vector.extract_strided_slice %110 {offsets = [0, 0], sizes = [4, 32], strides = [1, 1]} : vector<4x128xf32> to vector<4x32xf32>
    %112 = arith.negf %111 : vector<4x32xf32>
    %113 = math.exp %112 : vector<4x32xf32>
    %cst_40 = arith.constant 1.000000e+00 : f32
    %114 = vector.broadcast %cst_40 : f32 to vector<4x32xf32>
    %115 = arith.addf %114, %113 : vector<4x32xf32>
    %116 = arith.divf %114, %115 : vector<4x32xf32>
    %117 = vector.extract_strided_slice %110 {offsets = [0, 32], sizes = [4, 32], strides = [1, 1]} : vector<4x128xf32> to vector<4x32xf32>
    %118 = arith.negf %117 : vector<4x32xf32>
    %119 = math.exp %118 : vector<4x32xf32>
    %cst_41 = arith.constant 1.000000e+00 : f32
    %120 = vector.broadcast %cst_41 : f32 to vector<4x32xf32>
    %121 = arith.addf %120, %119 : vector<4x32xf32>
    %122 = arith.divf %120, %121 : vector<4x32xf32>
    %123 = vector.extract_strided_slice %110 {offsets = [0, 64], sizes = [4, 32], strides = [1, 1]} : vector<4x128xf32> to vector<4x32xf32>
    %124 = math.tanh %123 : vector<4x32xf32>
    %125 = vector.extract_strided_slice %110 {offsets = [0, 96], sizes = [4, 32], strides = [1, 1]} : vector<4x128xf32> to vector<4x32xf32>
    %126 = arith.negf %125 : vector<4x32xf32>
    %127 = math.exp %126 : vector<4x32xf32>
    %cst_42 = arith.constant 1.000000e+00 : f32
    %128 = vector.broadcast %cst_42 : f32 to vector<4x32xf32>
    %129 = arith.addf %128, %127 : vector<4x32xf32>
    %130 = arith.divf %128, %129 : vector<4x32xf32>
    %131 = arith.mulf %122, %104 : vector<4x32xf32>
    %132 = arith.mulf %116, %124 : vector<4x32xf32>
    %133 = arith.addf %131, %132 : vector<4x32xf32>
    %134 = math.tanh %133 : vector<4x32xf32>
    %135 = arith.mulf %130, %134 : vector<4x32xf32>
    %c12 = arith.constant 12 : index
    %c0_43 = arith.constant 0 : index
    %136 = vector.load %arg10[%c12, %c0_43] : memref<32x32xf32, #tpu.memory_space<vmem>>, vector<4x32xf32>
    tpu.vector_store %arg10[%c12, %c0_43], %135 {strides = array<i32>} : memref<32x32xf32, #tpu.memory_space<vmem>>, vector<4x32xf32>,
    %137 = vector.extract_strided_slice %19 {offsets = [16, 0], sizes = [4, 128], strides = [1, 1]} : vector<32x128xf32> to vector<4x128xf32>
    %cst_44 = arith.constant dense<0.000000e+00> : vector<4x128xf32>
    %138 = tpu.matmul %135, %14, %cst_44 {dimension_numbers = #tpu.dot_dimension_numbers<[1], [0], [0], [1], [0, 0, 1, 1], [], []>} : vector<4x32xf32>, vector<32x128xf32>, vector<4x128xf32> -> vector<4x128xf32>
    %139 = arith.addf %137, %138 : vector<4x128xf32>
    %140 = vector.extract_strided_slice %139 {offsets = [0, 0], sizes = [4, 32], strides = [1, 1]} : vector<4x128xf32> to vector<4x32xf32>
    %141 = arith.negf %140 : vector<4x32xf32>
    %142 = math.exp %141 : vector<4x32xf32>
    %cst_45 = arith.constant 1.000000e+00 : f32
    %143 = vector.broadcast %cst_45 : f32 to vector<4x32xf32>
    %144 = arith.addf %143, %142 : vector<4x32xf32>
    %145 = arith.divf %143, %144 : vector<4x32xf32>
    %146 = vector.extract_strided_slice %139 {offsets = [0, 32], sizes = [4, 32], strides = [1, 1]} : vector<4x128xf32> to vector<4x32xf32>
    %147 = arith.negf %146 : vector<4x32xf32>
    %148 = math.exp %147 : vector<4x32xf32>
    %cst_46 = arith.constant 1.000000e+00 : f32
    %149 = vector.broadcast %cst_46 : f32 to vector<4x32xf32>
    %150 = arith.addf %149, %148 : vector<4x32xf32>
    %151 = arith.divf %149, %150 : vector<4x32xf32>
    %152 = vector.extract_strided_slice %139 {offsets = [0, 64], sizes = [4, 32], strides = [1, 1]} : vector<4x128xf32> to vector<4x32xf32>
    %153 = math.tanh %152 : vector<4x32xf32>
    %154 = vector.extract_strided_slice %139 {offsets = [0, 96], sizes = [4, 32], strides = [1, 1]} : vector<4x128xf32> to vector<4x32xf32>
    %155 = arith.negf %154 : vector<4x32xf32>
    %156 = math.exp %155 : vector<4x32xf32>
    %cst_47 = arith.constant 1.000000e+00 : f32
    %157 = vector.broadcast %cst_47 : f32 to vector<4x32xf32>
    %158 = arith.addf %157, %156 : vector<4x32xf32>
    %159 = arith.divf %157, %158 : vector<4x32xf32>
    %160 = arith.mulf %151, %133 : vector<4x32xf32>
    %161 = arith.mulf %145, %153 : vector<4x32xf32>
    %162 = arith.addf %160, %161 : vector<4x32xf32>
    %163 = math.tanh %162 : vector<4x32xf32>
    %164 = arith.mulf %159, %163 : vector<4x32xf32>
    %c16 = arith.constant 16 : index
    %c0_48 = arith.constant 0 : index
    %165 = vector.load %arg10[%c16, %c0_48] : memref<32x32xf32, #tpu.memory_space<vmem>>, vector<4x32xf32>
    tpu.vector_store %arg10[%c16, %c0_48], %164 {strides = array<i32>} : memref<32x32xf32, #tpu.memory_space<vmem>>, vector<4x32xf32>,
    %166 = vector.extract_strided_slice %19 {offsets = [20, 0], sizes = [4, 128], strides = [1, 1]} : vector<32x128xf32> to vector<4x128xf32>
    %cst_49 = arith.constant dense<0.000000e+00> : vector<4x128xf32>
    %167 = tpu.matmul %164, %14, %cst_49 {dimension_numbers = #tpu.dot_dimension_numbers<[1], [0], [0], [1], [0, 0, 1, 1], [], []>} : vector<4x32xf32>, vector<32x128xf32>, vector<4x128xf32> -> vector<4x128xf32>
    %168 = arith.addf %166, %167 : vector<4x128xf32>
    %169 = vector.extract_strided_slice %168 {offsets = [0, 0], sizes = [4, 32], strides = [1, 1]} : vector<4x128xf32> to vector<4x32xf32>
    %170 = arith.negf %169 : vector<4x32xf32>
    %171 = math.exp %170 : vector<4x32xf32>
    %cst_50 = arith.constant 1.000000e+00 : f32
    %172 = vector.broadcast %cst_50 : f32 to vector<4x32xf32>
    %173 = arith.addf %172, %171 : vector<4x32xf32>
    %174 = arith.divf %172, %173 : vector<4x32xf32>
    %175 = vector.extract_strided_slice %168 {offsets = [0, 32], sizes = [4, 32], strides = [1, 1]} : vector<4x128xf32> to vector<4x32xf32>
    %176 = arith.negf %175 : vector<4x32xf32>
    %177 = math.exp %176 : vector<4x32xf32>
    %cst_51 = arith.constant 1.000000e+00 : f32
    %178 = vector.broadcast %cst_51 : f32 to vector<4x32xf32>
    %179 = arith.addf %178, %177 : vector<4x32xf32>
    %180 = arith.divf %178, %179 : vector<4x32xf32>
    %181 = vector.extract_strided_slice %168 {offsets = [0, 64], sizes = [4, 32], strides = [1, 1]} : vector<4x128xf32> to vector<4x32xf32>
    %182 = math.tanh %181 : vector<4x32xf32>
    %183 = vector.extract_strided_slice %168 {offsets = [0, 96], sizes = [4, 32], strides = [1, 1]} : vector<4x128xf32> to vector<4x32xf32>
    %184 = arith.negf %183 : vector<4x32xf32>
    %185 = math.exp %184 : vector<4x32xf32>
    %cst_52 = arith.constant 1.000000e+00 : f32
    %186 = vector.broadcast %cst_52 : f32 to vector<4x32xf32>
    %187 = arith.addf %186, %185 : vector<4x32xf32>
    %188 = arith.divf %186, %187 : vector<4x32xf32>
    %189 = arith.mulf %180, %162 : vector<4x32xf32>
    %190 = arith.mulf %174, %182 : vector<4x32xf32>
    %191 = arith.addf %189, %190 : vector<4x32xf32>
    %192 = math.tanh %191 : vector<4x32xf32>
    %193 = arith.mulf %188, %192 : vector<4x32xf32>
    %c20 = arith.constant 20 : index
    %c0_53 = arith.constant 0 : index
    %194 = vector.load %arg10[%c20, %c0_53] : memref<32x32xf32, #tpu.memory_space<vmem>>, vector<4x32xf32>
    tpu.vector_store %arg10[%c20, %c0_53], %193 {strides = array<i32>} : memref<32x32xf32, #tpu.memory_space<vmem>>, vector<4x32xf32>,
    %195 = vector.extract_strided_slice %19 {offsets = [24, 0], sizes = [4, 128], strides = [1, 1]} : vector<32x128xf32> to vector<4x128xf32>
    %cst_54 = arith.constant dense<0.000000e+00> : vector<4x128xf32>
    %196 = tpu.matmul %193, %14, %cst_54 {dimension_numbers = #tpu.dot_dimension_numbers<[1], [0], [0], [1], [0, 0, 1, 1], [], []>} : vector<4x32xf32>, vector<32x128xf32>, vector<4x128xf32> -> vector<4x128xf32>
    %197 = arith.addf %195, %196 : vector<4x128xf32>
    %198 = vector.extract_strided_slice %197 {offsets = [0, 0], sizes = [4, 32], strides = [1, 1]} : vector<4x128xf32> to vector<4x32xf32>
    %199 = arith.negf %198 : vector<4x32xf32>
    %200 = math.exp %199 : vector<4x32xf32>
    %cst_55 = arith.constant 1.000000e+00 : f32
    %201 = vector.broadcast %cst_55 : f32 to vector<4x32xf32>
    %202 = arith.addf %201, %200 : vector<4x32xf32>
    %203 = arith.divf %201, %202 : vector<4x32xf32>
    %204 = vector.extract_strided_slice %197 {offsets = [0, 32], sizes = [4, 32], strides = [1, 1]} : vector<4x128xf32> to vector<4x32xf32>
    %205 = arith.negf %204 : vector<4x32xf32>
    %206 = math.exp %205 : vector<4x32xf32>
    %cst_56 = arith.constant 1.000000e+00 : f32
    %207 = vector.broadcast %cst_56 : f32 to vector<4x32xf32>
    %208 = arith.addf %207, %206 : vector<4x32xf32>
    %209 = arith.divf %207, %208 : vector<4x32xf32>
    %210 = vector.extract_strided_slice %197 {offsets = [0, 64], sizes = [4, 32], strides = [1, 1]} : vector<4x128xf32> to vector<4x32xf32>
    %211 = math.tanh %210 : vector<4x32xf32>
    %212 = vector.extract_strided_slice %197 {offsets = [0, 96], sizes = [4, 32], strides = [1, 1]} : vector<4x128xf32> to vector<4x32xf32>
    %213 = arith.negf %212 : vector<4x32xf32>
    %214 = math.exp %213 : vector<4x32xf32>
    %cst_57 = arith.constant 1.000000e+00 : f32
    %215 = vector.broadcast %cst_57 : f32 to vector<4x32xf32>
    %216 = arith.addf %215, %214 : vector<4x32xf32>
    %217 = arith.divf %215, %216 : vector<4x32xf32>
    %218 = arith.mulf %209, %191 : vector<4x32xf32>
    %219 = arith.mulf %203, %211 : vector<4x32xf32>
    %220 = arith.addf %218, %219 : vector<4x32xf32>
    %221 = math.tanh %220 : vector<4x32xf32>
    %222 = arith.mulf %217, %221 : vector<4x32xf32>
    %c24 = arith.constant 24 : index
    %c0_58 = arith.constant 0 : index
    %223 = vector.load %arg10[%c24, %c0_58] : memref<32x32xf32, #tpu.memory_space<vmem>>, vector<4x32xf32>
    tpu.vector_store %arg10[%c24, %c0_58], %222 {strides = array<i32>} : memref<32x32xf32, #tpu.memory_space<vmem>>, vector<4x32xf32>,
    %224 = vector.extract_strided_slice %19 {offsets = [28, 0], sizes = [4, 128], strides = [1, 1]} : vector<32x128xf32> to vector<4x128xf32>
    %cst_59 = arith.constant dense<0.000000e+00> : vector<4x128xf32>
    %225 = tpu.matmul %222, %14, %cst_59 {dimension_numbers = #tpu.dot_dimension_numbers<[1], [0], [0], [1], [0, 0, 1, 1], [], []>} : vector<4x32xf32>, vector<32x128xf32>, vector<4x128xf32> -> vector<4x128xf32>
    %226 = arith.addf %224, %225 : vector<4x128xf32>
    %227 = vector.extract_strided_slice %226 {offsets = [0, 0], sizes = [4, 32], strides = [1, 1]} : vector<4x128xf32> to vector<4x32xf32>
    %228 = arith.negf %227 : vector<4x32xf32>
    %229 = math.exp %228 : vector<4x32xf32>
    %cst_60 = arith.constant 1.000000e+00 : f32
    %230 = vector.broadcast %cst_60 : f32 to vector<4x32xf32>
    %231 = arith.addf %230, %229 : vector<4x32xf32>
    %232 = arith.divf %230, %231 : vector<4x32xf32>
    %233 = vector.extract_strided_slice %226 {offsets = [0, 32], sizes = [4, 32], strides = [1, 1]} : vector<4x128xf32> to vector<4x32xf32>
    %234 = arith.negf %233 : vector<4x32xf32>
    %235 = math.exp %234 : vector<4x32xf32>
    %cst_61 = arith.constant 1.000000e+00 : f32
    %236 = vector.broadcast %cst_61 : f32 to vector<4x32xf32>
    %237 = arith.addf %236, %235 : vector<4x32xf32>
    %238 = arith.divf %236, %237 : vector<4x32xf32>
    %239 = vector.extract_strided_slice %226 {offsets = [0, 64], sizes = [4, 32], strides = [1, 1]} : vector<4x128xf32> to vector<4x32xf32>
    %240 = math.tanh %239 : vector<4x32xf32>
    %241 = vector.extract_strided_slice %226 {offsets = [0, 96], sizes = [4, 32], strides = [1, 1]} : vector<4x128xf32> to vector<4x32xf32>
    %242 = arith.negf %241 : vector<4x32xf32>
    %243 = math.exp %242 : vector<4x32xf32>
    %cst_62 = arith.constant 1.000000e+00 : f32
    %244 = vector.broadcast %cst_62 : f32 to vector<4x32xf32>
    %245 = arith.addf %244, %243 : vector<4x32xf32>
    %246 = arith.divf %244, %245 : vector<4x32xf32>
    %247 = arith.mulf %238, %220 : vector<4x32xf32>
    %248 = arith.mulf %232, %240 : vector<4x32xf32>
    %249 = arith.addf %247, %248 : vector<4x32xf32>
    %250 = math.tanh %249 : vector<4x32xf32>
    %251 = arith.mulf %246, %250 : vector<4x32xf32>
    %c28 = arith.constant 28 : index
    %c0_63 = arith.constant 0 : index
    %252 = vector.load %arg10[%c28, %c0_63] : memref<32x32xf32, #tpu.memory_space<vmem>>, vector<4x32xf32>
    tpu.vector_store %arg10[%c28, %c0_63], %251 {strides = array<i32>} : memref<32x32xf32, #tpu.memory_space<vmem>>, vector<4x32xf32>,
    %c0_64 = arith.constant 0 : index
    %c0_65 = arith.constant 0 : index
    %253 = vector.load %arg10[%c0_64, %c0_65] : memref<32x32xf32, #tpu.memory_space<vmem>>, vector<32x32xf32>
    %c0_66 = arith.constant 0 : index
    %c0_67 = arith.constant 0 : index
    %c0_68 = arith.constant 0 : index
    %c0_69 = arith.constant 0 : index
    %254 = vector.load %arg6[%c0_66, %c0_67, %c0_68, %c0_69] : memref<1x2x32x128xf32, #tpu.memory_space<vmem>>, vector<1x1x32x128xf32>
    %255 = vector.shape_cast %254 : vector<1x1x32x128xf32> to vector<32x128xf32>
    %c0_70 = arith.constant 0 : index
    %c1 = arith.constant 1 : index
    %c0_71 = arith.constant 0 : index
    %c0_72 = arith.constant 0 : index
    %256 = vector.load %arg7[%c0_70, %c1, %c0_71, %c0_72] : memref<1x3x32x128xf32, #tpu.memory_space<vmem>>, vector<1x1x32x128xf32>
    %257 = vector.shape_cast %256 : vector<1x1x32x128xf32> to vector<32x128xf32>
    %c0_73 = arith.constant 0 : index
    %c1_74 = arith.constant 1 : index
    %c0_75 = arith.constant 0 : index
    %c0_76 = arith.constant 0 : index
    %258 = vector.load %arg8[%c0_73, %c1_74, %c0_75, %c0_76] : memref<1x3x1x128xf32, #tpu.memory_space<vmem>>, vector<1x1x1x128xf32>
    %259 = vector.shape_cast %258 : vector<1x1x1x128xf32> to vector<1x128xf32>
    %cst_77 = arith.constant dense<0.000000e+00> : vector<32x128xf32>
    %260 = tpu.matmul %253, %255, %cst_77 {dimension_numbers = #tpu.dot_dimension_numbers<[1], [0], [0], [1], [0, 0, 1, 1], [], []>} : vector<32x32xf32>, vector<32x128xf32>, vector<32x128xf32> -> vector<32x128xf32>
    %261 = vector.broadcast %259 : vector<1x128xf32> to vector<32x128xf32>
    %262 = arith.addf %260, %261 : vector<32x128xf32>
    %263 = vector.extract_strided_slice %8 {offsets = [4, 0], sizes = [4, 32], strides = [1, 1]} : vector<12x32xf32> to vector<4x32xf32>
    %264 = vector.extract_strided_slice %262 {offsets = [0, 0], sizes = [4, 128], strides = [1, 1]} : vector<32x128xf32> to vector<4x128xf32>
    %cst_78 = arith.constant dense<0.000000e+00> : vector<4x128xf32>
    %265 = tpu.matmul %263, %257, %cst_78 {dimension_numbers = #tpu.dot_dimension_numbers<[1], [0], [0], [1], [0, 0, 1, 1], [], []>} : vector<4x32xf32>, vector<32x128xf32>, vector<4x128xf32> -> vector<4x128xf32>
    %266 = arith.addf %264, %265 : vector<4x128xf32>
    %267 = vector.extract_strided_slice %266 {offsets = [0, 0], sizes = [4, 32], strides = [1, 1]} : vector<4x128xf32> to vector<4x32xf32>
    %268 = arith.negf %267 : vector<4x32xf32>
    %269 = math.exp %268 : vector<4x32xf32>
    %cst_79 = arith.constant 1.000000e+00 : f32
    %270 = vector.broadcast %cst_79 : f32 to vector<4x32xf32>
    %271 = arith.addf %270, %269 : vector<4x32xf32>
    %272 = arith.divf %270, %271 : vector<4x32xf32>
    %273 = vector.extract_strided_slice %266 {offsets = [0, 32], sizes = [4, 32], strides = [1, 1]} : vector<4x128xf32> to vector<4x32xf32>
    %274 = arith.negf %273 : vector<4x32xf32>
    %275 = math.exp %274 : vector<4x32xf32>
    %cst_80 = arith.constant 1.000000e+00 : f32
    %276 = vector.broadcast %cst_80 : f32 to vector<4x32xf32>
    %277 = arith.addf %276, %275 : vector<4x32xf32>
    %278 = arith.divf %276, %277 : vector<4x32xf32>
    %279 = vector.extract_strided_slice %266 {offsets = [0, 64], sizes = [4, 32], strides = [1, 1]} : vector<4x128xf32> to vector<4x32xf32>
    %280 = math.tanh %279 : vector<4x32xf32>
    %281 = vector.extract_strided_slice %266 {offsets = [0, 96], sizes = [4, 32], strides = [1, 1]} : vector<4x128xf32> to vector<4x32xf32>
    %282 = arith.negf %281 : vector<4x32xf32>
    %283 = math.exp %282 : vector<4x32xf32>
    %cst_81 = arith.constant 1.000000e+00 : f32
    %284 = vector.broadcast %cst_81 : f32 to vector<4x32xf32>
    %285 = arith.addf %284, %283 : vector<4x32xf32>
    %286 = arith.divf %284, %285 : vector<4x32xf32>
    %287 = arith.mulf %278, %263 : vector<4x32xf32>
    %288 = arith.mulf %272, %280 : vector<4x32xf32>
    %289 = arith.addf %287, %288 : vector<4x32xf32>
    %290 = math.tanh %289 : vector<4x32xf32>
    %291 = arith.mulf %286, %290 : vector<4x32xf32>
    %c0_82 = arith.constant 0 : index
    %c0_83 = arith.constant 0 : index
    %292 = vector.load %arg10[%c0_82, %c0_83] : memref<32x32xf32, #tpu.memory_space<vmem>>, vector<4x32xf32>
    tpu.vector_store %arg10[%c0_82, %c0_83], %291 {strides = array<i32>} : memref<32x32xf32, #tpu.memory_space<vmem>>, vector<4x32xf32>,
    %293 = vector.extract_strided_slice %262 {offsets = [4, 0], sizes = [4, 128], strides = [1, 1]} : vector<32x128xf32> to vector<4x128xf32>
    %cst_84 = arith.constant dense<0.000000e+00> : vector<4x128xf32>
    %294 = tpu.matmul %291, %257, %cst_84 {dimension_numbers = #tpu.dot_dimension_numbers<[1], [0], [0], [1], [0, 0, 1, 1], [], []>} : vector<4x32xf32>, vector<32x128xf32>, vector<4x128xf32> -> vector<4x128xf32>
    %295 = arith.addf %293, %294 : vector<4x128xf32>
    %296 = vector.extract_strided_slice %295 {offsets = [0, 0], sizes = [4, 32], strides = [1, 1]} : vector<4x128xf32> to vector<4x32xf32>
    %297 = arith.negf %296 : vector<4x32xf32>
    %298 = math.exp %297 : vector<4x32xf32>
    %cst_85 = arith.constant 1.000000e+00 : f32
    %299 = vector.broadcast %cst_85 : f32 to vector<4x32xf32>
    %300 = arith.addf %299, %298 : vector<4x32xf32>
    %301 = arith.divf %299, %300 : vector<4x32xf32>
    %302 = vector.extract_strided_slice %295 {offsets = [0, 32], sizes = [4, 32], strides = [1, 1]} : vector<4x128xf32> to vector<4x32xf32>
    %303 = arith.negf %302 : vector<4x32xf32>
    %304 = math.exp %303 : vector<4x32xf32>
    %cst_86 = arith.constant 1.000000e+00 : f32
    %305 = vector.broadcast %cst_86 : f32 to vector<4x32xf32>
    %306 = arith.addf %305, %304 : vector<4x32xf32>
    %307 = arith.divf %305, %306 : vector<4x32xf32>
    %308 = vector.extract_strided_slice %295 {offsets = [0, 64], sizes = [4, 32], strides = [1, 1]} : vector<4x128xf32> to vector<4x32xf32>
    %309 = math.tanh %308 : vector<4x32xf32>
    %310 = vector.extract_strided_slice %295 {offsets = [0, 96], sizes = [4, 32], strides = [1, 1]} : vector<4x128xf32> to vector<4x32xf32>
    %311 = arith.negf %310 : vector<4x32xf32>
    %312 = math.exp %311 : vector<4x32xf32>
    %cst_87 = arith.constant 1.000000e+00 : f32
    %313 = vector.broadcast %cst_87 : f32 to vector<4x32xf32>
    %314 = arith.addf %313, %312 : vector<4x32xf32>
    %315 = arith.divf %313, %314 : vector<4x32xf32>
    %316 = arith.mulf %307, %289 : vector<4x32xf32>
    %317 = arith.mulf %301, %309 : vector<4x32xf32>
    %318 = arith.addf %316, %317 : vector<4x32xf32>
    %319 = math.tanh %318 : vector<4x32xf32>
    %320 = arith.mulf %315, %319 : vector<4x32xf32>
    %c4_88 = arith.constant 4 : index
    %c0_89 = arith.constant 0 : index
    %321 = vector.load %arg10[%c4_88, %c0_89] : memref<32x32xf32, #tpu.memory_space<vmem>>, vector<4x32xf32>
    tpu.vector_store %arg10[%c4_88, %c0_89], %320 {strides = array<i32>} : memref<32x32xf32, #tpu.memory_space<vmem>>, vector<4x32xf32>,
    %322 = vector.extract_strided_slice %262 {offsets = [8, 0], sizes = [4, 128], strides = [1, 1]} : vector<32x128xf32> to vector<4x128xf32>
    %cst_90 = arith.constant dense<0.000000e+00> : vector<4x128xf32>
    %323 = tpu.matmul %320, %257, %cst_90 {dimension_numbers = #tpu.dot_dimension_numbers<[1], [0], [0], [1], [0, 0, 1, 1], [], []>} : vector<4x32xf32>, vector<32x128xf32>, vector<4x128xf32> -> vector<4x128xf32>
    %324 = arith.addf %322, %323 : vector<4x128xf32>
    %325 = vector.extract_strided_slice %324 {offsets = [0, 0], sizes = [4, 32], strides = [1, 1]} : vector<4x128xf32> to vector<4x32xf32>
    %326 = arith.negf %325 : vector<4x32xf32>
    %327 = math.exp %326 : vector<4x32xf32>
    %cst_91 = arith.constant 1.000000e+00 : f32
    %328 = vector.broadcast %cst_91 : f32 to vector<4x32xf32>
    %329 = arith.addf %328, %327 : vector<4x32xf32>
    %330 = arith.divf %328, %329 : vector<4x32xf32>
    %331 = vector.extract_strided_slice %324 {offsets = [0, 32], sizes = [4, 32], strides = [1, 1]} : vector<4x128xf32> to vector<4x32xf32>
    %332 = arith.negf %331 : vector<4x32xf32>
    %333 = math.exp %332 : vector<4x32xf32>
    %cst_92 = arith.constant 1.000000e+00 : f32
    %334 = vector.broadcast %cst_92 : f32 to vector<4x32xf32>
    %335 = arith.addf %334, %333 : vector<4x32xf32>
    %336 = arith.divf %334, %335 : vector<4x32xf32>
    %337 = vector.extract_strided_slice %324 {offsets = [0, 64], sizes = [4, 32], strides = [1, 1]} : vector<4x128xf32> to vector<4x32xf32>
    %338 = math.tanh %337 : vector<4x32xf32>
    %339 = vector.extract_strided_slice %324 {offsets = [0, 96], sizes = [4, 32], strides = [1, 1]} : vector<4x128xf32> to vector<4x32xf32>
    %340 = arith.negf %339 : vector<4x32xf32>
    %341 = math.exp %340 : vector<4x32xf32>
    %cst_93 = arith.constant 1.000000e+00 : f32
    %342 = vector.broadcast %cst_93 : f32 to vector<4x32xf32>
    %343 = arith.addf %342, %341 : vector<4x32xf32>
    %344 = arith.divf %342, %343 : vector<4x32xf32>
    %345 = arith.mulf %336, %318 : vector<4x32xf32>
    %346 = arith.mulf %330, %338 : vector<4x32xf32>
    %347 = arith.addf %345, %346 : vector<4x32xf32>
    %348 = math.tanh %347 : vector<4x32xf32>
    %349 = arith.mulf %344, %348 : vector<4x32xf32>
    %c8_94 = arith.constant 8 : index
    %c0_95 = arith.constant 0 : index
    %350 = vector.load %arg10[%c8_94, %c0_95] : memref<32x32xf32, #tpu.memory_space<vmem>>, vector<4x32xf32>
    tpu.vector_store %arg10[%c8_94, %c0_95], %349 {strides = array<i32>} : memref<32x32xf32, #tpu.memory_space<vmem>>, vector<4x32xf32>,
    %351 = vector.extract_strided_slice %262 {offsets = [12, 0], sizes = [4, 128], strides = [1, 1]} : vector<32x128xf32> to vector<4x128xf32>
    %cst_96 = arith.constant dense<0.000000e+00> : vector<4x128xf32>
    %352 = tpu.matmul %349, %257, %cst_96 {dimension_numbers = #tpu.dot_dimension_numbers<[1], [0], [0], [1], [0, 0, 1, 1], [], []>} : vector<4x32xf32>, vector<32x128xf32>, vector<4x128xf32> -> vector<4x128xf32>
    %353 = arith.addf %351, %352 : vector<4x128xf32>
    %354 = vector.extract_strided_slice %353 {offsets = [0, 0], sizes = [4, 32], strides = [1, 1]} : vector<4x128xf32> to vector<4x32xf32>
    %355 = arith.negf %354 : vector<4x32xf32>
    %356 = math.exp %355 : vector<4x32xf32>
    %cst_97 = arith.constant 1.000000e+00 : f32
    %357 = vector.broadcast %cst_97 : f32 to vector<4x32xf32>
    %358 = arith.addf %357, %356 : vector<4x32xf32>
    %359 = arith.divf %357, %358 : vector<4x32xf32>
    %360 = vector.extract_strided_slice %353 {offsets = [0, 32], sizes = [4, 32], strides = [1, 1]} : vector<4x128xf32> to vector<4x32xf32>
    %361 = arith.negf %360 : vector<4x32xf32>
    %362 = math.exp %361 : vector<4x32xf32>
    %cst_98 = arith.constant 1.000000e+00 : f32
    %363 = vector.broadcast %cst_98 : f32 to vector<4x32xf32>
    %364 = arith.addf %363, %362 : vector<4x32xf32>
    %365 = arith.divf %363, %364 : vector<4x32xf32>
    %366 = vector.extract_strided_slice %353 {offsets = [0, 64], sizes = [4, 32], strides = [1, 1]} : vector<4x128xf32> to vector<4x32xf32>
    %367 = math.tanh %366 : vector<4x32xf32>
    %368 = vector.extract_strided_slice %353 {offsets = [0, 96], sizes = [4, 32], strides = [1, 1]} : vector<4x128xf32> to vector<4x32xf32>
    %369 = arith.negf %368 : vector<4x32xf32>
    %370 = math.exp %369 : vector<4x32xf32>
    %cst_99 = arith.constant 1.000000e+00 : f32
    %371 = vector.broadcast %cst_99 : f32 to vector<4x32xf32>
    %372 = arith.addf %371, %370 : vector<4x32xf32>
    %373 = arith.divf %371, %372 : vector<4x32xf32>
    %374 = arith.mulf %365, %347 : vector<4x32xf32>
    %375 = arith.mulf %359, %367 : vector<4x32xf32>
    %376 = arith.addf %374, %375 : vector<4x32xf32>
    %377 = math.tanh %376 : vector<4x32xf32>
    %378 = arith.mulf %373, %377 : vector<4x32xf32>
    %c12_100 = arith.constant 12 : index
    %c0_101 = arith.constant 0 : index
    %379 = vector.load %arg10[%c12_100, %c0_101] : memref<32x32xf32, #tpu.memory_space<vmem>>, vector<4x32xf32>
    tpu.vector_store %arg10[%c12_100, %c0_101], %378 {strides = array<i32>} : memref<32x32xf32, #tpu.memory_space<vmem>>, vector<4x32xf32>,
    %380 = vector.extract_strided_slice %262 {offsets = [16, 0], sizes = [4, 128], strides = [1, 1]} : vector<32x128xf32> to vector<4x128xf32>
    %cst_102 = arith.constant dense<0.000000e+00> : vector<4x128xf32>
    %381 = tpu.matmul %378, %257, %cst_102 {dimension_numbers = #tpu.dot_dimension_numbers<[1], [0], [0], [1], [0, 0, 1, 1], [], []>} : vector<4x32xf32>, vector<32x128xf32>, vector<4x128xf32> -> vector<4x128xf32>
    %382 = arith.addf %380, %381 : vector<4x128xf32>
    %383 = vector.extract_strided_slice %382 {offsets = [0, 0], sizes = [4, 32], strides = [1, 1]} : vector<4x128xf32> to vector<4x32xf32>
    %384 = arith.negf %383 : vector<4x32xf32>
    %385 = math.exp %384 : vector<4x32xf32>
    %cst_103 = arith.constant 1.000000e+00 : f32
    %386 = vector.broadcast %cst_103 : f32 to vector<4x32xf32>
    %387 = arith.addf %386, %385 : vector<4x32xf32>
    %388 = arith.divf %386, %387 : vector<4x32xf32>
    %389 = vector.extract_strided_slice %382 {offsets = [0, 32], sizes = [4, 32], strides = [1, 1]} : vector<4x128xf32> to vector<4x32xf32>
    %390 = arith.negf %389 : vector<4x32xf32>
    %391 = math.exp %390 : vector<4x32xf32>
    %cst_104 = arith.constant 1.000000e+00 : f32
    %392 = vector.broadcast %cst_104 : f32 to vector<4x32xf32>
    %393 = arith.addf %392, %391 : vector<4x32xf32>
    %394 = arith.divf %392, %393 : vector<4x32xf32>
    %395 = vector.extract_strided_slice %382 {offsets = [0, 64], sizes = [4, 32], strides = [1, 1]} : vector<4x128xf32> to vector<4x32xf32>
    %396 = math.tanh %395 : vector<4x32xf32>
    %397 = vector.extract_strided_slice %382 {offsets = [0, 96], sizes = [4, 32], strides = [1, 1]} : vector<4x128xf32> to vector<4x32xf32>
    %398 = arith.negf %397 : vector<4x32xf32>
    %399 = math.exp %398 : vector<4x32xf32>
    %cst_105 = arith.constant 1.000000e+00 : f32
    %400 = vector.broadcast %cst_105 : f32 to vector<4x32xf32>
    %401 = arith.addf %400, %399 : vector<4x32xf32>
    %402 = arith.divf %400, %401 : vector<4x32xf32>
    %403 = arith.mulf %394, %376 : vector<4x32xf32>
    %404 = arith.mulf %388, %396 : vector<4x32xf32>
    %405 = arith.addf %403, %404 : vector<4x32xf32>
    %406 = math.tanh %405 : vector<4x32xf32>
    %407 = arith.mulf %402, %406 : vector<4x32xf32>
    %c16_106 = arith.constant 16 : index
    %c0_107 = arith.constant 0 : index
    %408 = vector.load %arg10[%c16_106, %c0_107] : memref<32x32xf32, #tpu.memory_space<vmem>>, vector<4x32xf32>
    tpu.vector_store %arg10[%c16_106, %c0_107], %407 {strides = array<i32>} : memref<32x32xf32, #tpu.memory_space<vmem>>, vector<4x32xf32>,
    %409 = vector.extract_strided_slice %262 {offsets = [20, 0], sizes = [4, 128], strides = [1, 1]} : vector<32x128xf32> to vector<4x128xf32>
    %cst_108 = arith.constant dense<0.000000e+00> : vector<4x128xf32>
    %410 = tpu.matmul %407, %257, %cst_108 {dimension_numbers = #tpu.dot_dimension_numbers<[1], [0], [0], [1], [0, 0, 1, 1], [], []>} : vector<4x32xf32>, vector<32x128xf32>, vector<4x128xf32> -> vector<4x128xf32>
    %411 = arith.addf %409, %410 : vector<4x128xf32>
    %412 = vector.extract_strided_slice %411 {offsets = [0, 0], sizes = [4, 32], strides = [1, 1]} : vector<4x128xf32> to vector<4x32xf32>
    %413 = arith.negf %412 : vector<4x32xf32>
    %414 = math.exp %413 : vector<4x32xf32>
    %cst_109 = arith.constant 1.000000e+00 : f32
    %415 = vector.broadcast %cst_109 : f32 to vector<4x32xf32>
    %416 = arith.addf %415, %414 : vector<4x32xf32>
    %417 = arith.divf %415, %416 : vector<4x32xf32>
    %418 = vector.extract_strided_slice %411 {offsets = [0, 32], sizes = [4, 32], strides = [1, 1]} : vector<4x128xf32> to vector<4x32xf32>
    %419 = arith.negf %418 : vector<4x32xf32>
    %420 = math.exp %419 : vector<4x32xf32>
    %cst_110 = arith.constant 1.000000e+00 : f32
    %421 = vector.broadcast %cst_110 : f32 to vector<4x32xf32>
    %422 = arith.addf %421, %420 : vector<4x32xf32>
    %423 = arith.divf %421, %422 : vector<4x32xf32>
    %424 = vector.extract_strided_slice %411 {offsets = [0, 64], sizes = [4, 32], strides = [1, 1]} : vector<4x128xf32> to vector<4x32xf32>
    %425 = math.tanh %424 : vector<4x32xf32>
    %426 = vector.extract_strided_slice %411 {offsets = [0, 96], sizes = [4, 32], strides = [1, 1]} : vector<4x128xf32> to vector<4x32xf32>
    %427 = arith.negf %426 : vector<4x32xf32>
    %428 = math.exp %427 : vector<4x32xf32>
    %cst_111 = arith.constant 1.000000e+00 : f32
    %429 = vector.broadcast %cst_111 : f32 to vector<4x32xf32>
    %430 = arith.addf %429, %428 : vector<4x32xf32>
    %431 = arith.divf %429, %430 : vector<4x32xf32>
    %432 = arith.mulf %423, %405 : vector<4x32xf32>
    %433 = arith.mulf %417, %425 : vector<4x32xf32>
    %434 = arith.addf %432, %433 : vector<4x32xf32>
    %435 = math.tanh %434 : vector<4x32xf32>
    %436 = arith.mulf %431, %435 : vector<4x32xf32>
    %c20_112 = arith.constant 20 : index
    %c0_113 = arith.constant 0 : index
    %437 = vector.load %arg10[%c20_112, %c0_113] : memref<32x32xf32, #tpu.memory_space<vmem>>, vector<4x32xf32>
    tpu.vector_store %arg10[%c20_112, %c0_113], %436 {strides = array<i32>} : memref<32x32xf32, #tpu.memory_space<vmem>>, vector<4x32xf32>,
    %438 = vector.extract_strided_slice %262 {offsets = [24, 0], sizes = [4, 128], strides = [1, 1]} : vector<32x128xf32> to vector<4x128xf32>
    %cst_114 = arith.constant dense<0.000000e+00> : vector<4x128xf32>
    %439 = tpu.matmul %436, %257, %cst_114 {dimension_numbers = #tpu.dot_dimension_numbers<[1], [0], [0], [1], [0, 0, 1, 1], [], []>} : vector<4x32xf32>, vector<32x128xf32>, vector<4x128xf32> -> vector<4x128xf32>
    %440 = arith.addf %438, %439 : vector<4x128xf32>
    %441 = vector.extract_strided_slice %440 {offsets = [0, 0], sizes = [4, 32], strides = [1, 1]} : vector<4x128xf32> to vector<4x32xf32>
    %442 = arith.negf %441 : vector<4x32xf32>
    %443 = math.exp %442 : vector<4x32xf32>
    %cst_115 = arith.constant 1.000000e+00 : f32
    %444 = vector.broadcast %cst_115 : f32 to vector<4x32xf32>
    %445 = arith.addf %444, %443 : vector<4x32xf32>
    %446 = arith.divf %444, %445 : vector<4x32xf32>
    %447 = vector.extract_strided_slice %440 {offsets = [0, 32], sizes = [4, 32], strides = [1, 1]} : vector<4x128xf32> to vector<4x32xf32>
    %448 = arith.negf %447 : vector<4x32xf32>
    %449 = math.exp %448 : vector<4x32xf32>
    %cst_116 = arith.constant 1.000000e+00 : f32
    %450 = vector.broadcast %cst_116 : f32 to vector<4x32xf32>
    %451 = arith.addf %450, %449 : vector<4x32xf32>
    %452 = arith.divf %450, %451 : vector<4x32xf32>
    %453 = vector.extract_strided_slice %440 {offsets = [0, 64], sizes = [4, 32], strides = [1, 1]} : vector<4x128xf32> to vector<4x32xf32>
    %454 = math.tanh %453 : vector<4x32xf32>
    %455 = vector.extract_strided_slice %440 {offsets = [0, 96], sizes = [4, 32], strides = [1, 1]} : vector<4x128xf32> to vector<4x32xf32>
    %456 = arith.negf %455 : vector<4x32xf32>
    %457 = math.exp %456 : vector<4x32xf32>
    %cst_117 = arith.constant 1.000000e+00 : f32
    %458 = vector.broadcast %cst_117 : f32 to vector<4x32xf32>
    %459 = arith.addf %458, %457 : vector<4x32xf32>
    %460 = arith.divf %458, %459 : vector<4x32xf32>
    %461 = arith.mulf %452, %434 : vector<4x32xf32>
    %462 = arith.mulf %446, %454 : vector<4x32xf32>
    %463 = arith.addf %461, %462 : vector<4x32xf32>
    %464 = math.tanh %463 : vector<4x32xf32>
    %465 = arith.mulf %460, %464 : vector<4x32xf32>
    %c24_118 = arith.constant 24 : index
    %c0_119 = arith.constant 0 : index
    %466 = vector.load %arg10[%c24_118, %c0_119] : memref<32x32xf32, #tpu.memory_space<vmem>>, vector<4x32xf32>
    tpu.vector_store %arg10[%c24_118, %c0_119], %465 {strides = array<i32>} : memref<32x32xf32, #tpu.memory_space<vmem>>, vector<4x32xf32>,
    %467 = vector.extract_strided_slice %262 {offsets = [28, 0], sizes = [4, 128], strides = [1, 1]} : vector<32x128xf32> to vector<4x128xf32>
    %cst_120 = arith.constant dense<0.000000e+00> : vector<4x128xf32>
    %468 = tpu.matmul %465, %257, %cst_120 {dimension_numbers = #tpu.dot_dimension_numbers<[1], [0], [0], [1], [0, 0, 1, 1], [], []>} : vector<4x32xf32>, vector<32x128xf32>, vector<4x128xf32> -> vector<4x128xf32>
    %469 = arith.addf %467, %468 : vector<4x128xf32>
    %470 = vector.extract_strided_slice %469 {offsets = [0, 0], sizes = [4, 32], strides = [1, 1]} : vector<4x128xf32> to vector<4x32xf32>
    %471 = arith.negf %470 : vector<4x32xf32>
    %472 = math.exp %471 : vector<4x32xf32>
    %cst_121 = arith.constant 1.000000e+00 : f32
    %473 = vector.broadcast %cst_121 : f32 to vector<4x32xf32>
    %474 = arith.addf %473, %472 : vector<4x32xf32>
    %475 = arith.divf %473, %474 : vector<4x32xf32>
    %476 = vector.extract_strided_slice %469 {offsets = [0, 32], sizes = [4, 32], strides = [1, 1]} : vector<4x128xf32> to vector<4x32xf32>
    %477 = arith.negf %476 : vector<4x32xf32>
    %478 = math.exp %477 : vector<4x32xf32>
    %cst_122 = arith.constant 1.000000e+00 : f32
    %479 = vector.broadcast %cst_122 : f32 to vector<4x32xf32>
    %480 = arith.addf %479, %478 : vector<4x32xf32>
    %481 = arith.divf %479, %480 : vector<4x32xf32>
    %482 = vector.extract_strided_slice %469 {offsets = [0, 64], sizes = [4, 32], strides = [1, 1]} : vector<4x128xf32> to vector<4x32xf32>
    %483 = math.tanh %482 : vector<4x32xf32>
    %484 = vector.extract_strided_slice %469 {offsets = [0, 96], sizes = [4, 32], strides = [1, 1]} : vector<4x128xf32> to vector<4x32xf32>
    %485 = arith.negf %484 : vector<4x32xf32>
    %486 = math.exp %485 : vector<4x32xf32>
    %cst_123 = arith.constant 1.000000e+00 : f32
    %487 = vector.broadcast %cst_123 : f32 to vector<4x32xf32>
    %488 = arith.addf %487, %486 : vector<4x32xf32>
    %489 = arith.divf %487, %488 : vector<4x32xf32>
    %490 = arith.mulf %481, %463 : vector<4x32xf32>
    %491 = arith.mulf %475, %483 : vector<4x32xf32>
    %492 = arith.addf %490, %491 : vector<4x32xf32>
    %493 = math.tanh %492 : vector<4x32xf32>
    %494 = arith.mulf %489, %493 : vector<4x32xf32>
    %c28_124 = arith.constant 28 : index
    %c0_125 = arith.constant 0 : index
    %495 = vector.load %arg10[%c28_124, %c0_125] : memref<32x32xf32, #tpu.memory_space<vmem>>, vector<4x32xf32>
    tpu.vector_store %arg10[%c28_124, %c0_125], %494 {strides = array<i32>} : memref<32x32xf32, #tpu.memory_space<vmem>>, vector<4x32xf32>,
    %c0_126 = arith.constant 0 : index
    %c0_127 = arith.constant 0 : index
    %496 = vector.load %arg10[%c0_126, %c0_127] : memref<32x32xf32, #tpu.memory_space<vmem>>, vector<32x32xf32>
    %c0_128 = arith.constant 0 : index
    %c1_129 = arith.constant 1 : index
    %c0_130 = arith.constant 0 : index
    %c0_131 = arith.constant 0 : index
    %497 = vector.load %arg6[%c0_128, %c1_129, %c0_130, %c0_131] : memref<1x2x32x128xf32, #tpu.memory_space<vmem>>, vector<1x1x32x128xf32>
    %498 = vector.shape_cast %497 : vector<1x1x32x128xf32> to vector<32x128xf32>
    %c0_132 = arith.constant 0 : index
    %c2 = arith.constant 2 : index
    %c0_133 = arith.constant 0 : index
    %c0_134 = arith.constant 0 : index
    %499 = vector.load %arg7[%c0_132, %c2, %c0_133, %c0_134] : memref<1x3x32x128xf32, #tpu.memory_space<vmem>>, vector<1x1x32x128xf32>
    %500 = vector.shape_cast %499 : vector<1x1x32x128xf32> to vector<32x128xf32>
    %c0_135 = arith.constant 0 : index
    %c2_136 = arith.constant 2 : index
    %c0_137 = arith.constant 0 : index
    %c0_138 = arith.constant 0 : index
    %501 = vector.load %arg8[%c0_135, %c2_136, %c0_137, %c0_138] : memref<1x3x1x128xf32, #tpu.memory_space<vmem>>, vector<1x1x1x128xf32>
    %502 = vector.shape_cast %501 : vector<1x1x1x128xf32> to vector<1x128xf32>
    %cst_139 = arith.constant dense<0.000000e+00> : vector<32x128xf32>
    %503 = tpu.matmul %496, %498, %cst_139 {dimension_numbers = #tpu.dot_dimension_numbers<[1], [0], [0], [1], [0, 0, 1, 1], [], []>} : vector<32x32xf32>, vector<32x128xf32>, vector<32x128xf32> -> vector<32x128xf32>
    %504 = vector.broadcast %502 : vector<1x128xf32> to vector<32x128xf32>
    %505 = arith.addf %503, %504 : vector<32x128xf32>
    %506 = vector.extract_strided_slice %8 {offsets = [8, 0], sizes = [4, 32], strides = [1, 1]} : vector<12x32xf32> to vector<4x32xf32>
    %507 = vector.extract_strided_slice %505 {offsets = [0, 0], sizes = [4, 128], strides = [1, 1]} : vector<32x128xf32> to vector<4x128xf32>
    %cst_140 = arith.constant dense<0.000000e+00> : vector<4x128xf32>
    %508 = tpu.matmul %506, %500, %cst_140 {dimension_numbers = #tpu.dot_dimension_numbers<[1], [0], [0], [1], [0, 0, 1, 1], [], []>} : vector<4x32xf32>, vector<32x128xf32>, vector<4x128xf32> -> vector<4x128xf32>
    %509 = arith.addf %507, %508 : vector<4x128xf32>
    %510 = vector.extract_strided_slice %509 {offsets = [0, 0], sizes = [4, 32], strides = [1, 1]} : vector<4x128xf32> to vector<4x32xf32>
    %511 = arith.negf %510 : vector<4x32xf32>
    %512 = math.exp %511 : vector<4x32xf32>
    %cst_141 = arith.constant 1.000000e+00 : f32
    %513 = vector.broadcast %cst_141 : f32 to vector<4x32xf32>
    %514 = arith.addf %513, %512 : vector<4x32xf32>
    %515 = arith.divf %513, %514 : vector<4x32xf32>
    %516 = vector.extract_strided_slice %509 {offsets = [0, 32], sizes = [4, 32], strides = [1, 1]} : vector<4x128xf32> to vector<4x32xf32>
    %517 = arith.negf %516 : vector<4x32xf32>
    %518 = math.exp %517 : vector<4x32xf32>
    %cst_142 = arith.constant 1.000000e+00 : f32
    %519 = vector.broadcast %cst_142 : f32 to vector<4x32xf32>
    %520 = arith.addf %519, %518 : vector<4x32xf32>
    %521 = arith.divf %519, %520 : vector<4x32xf32>
    %522 = vector.extract_strided_slice %509 {offsets = [0, 64], sizes = [4, 32], strides = [1, 1]} : vector<4x128xf32> to vector<4x32xf32>
    %523 = math.tanh %522 : vector<4x32xf32>
    %524 = vector.extract_strided_slice %509 {offsets = [0, 96], sizes = [4, 32], strides = [1, 1]} : vector<4x128xf32> to vector<4x32xf32>
    %525 = arith.negf %524 : vector<4x32xf32>
    %526 = math.exp %525 : vector<4x32xf32>
    %cst_143 = arith.constant 1.000000e+00 : f32
    %527 = vector.broadcast %cst_143 : f32 to vector<4x32xf32>
    %528 = arith.addf %527, %526 : vector<4x32xf32>
    %529 = arith.divf %527, %528 : vector<4x32xf32>
    %530 = arith.mulf %521, %506 : vector<4x32xf32>
    %531 = arith.mulf %515, %523 : vector<4x32xf32>
    %532 = arith.addf %530, %531 : vector<4x32xf32>
    %533 = math.tanh %532 : vector<4x32xf32>
    %534 = arith.mulf %529, %533 : vector<4x32xf32>
    %c0_144 = arith.constant 0 : index
    %c0_145 = arith.constant 0 : index
    %c0_146 = arith.constant 0 : index
    %535 = vector.load %arg9[%c0_144, %c0_145, %c0_146] : memref<1x32x32xf32, #tpu.memory_space<vmem>>, vector<1x4x32xf32>
    %536 = vector.shape_cast %535 : vector<1x4x32xf32> to vector<4x32xf32>
    %537 = vector.shape_cast %534 : vector<4x32xf32> to vector<1x4x32xf32>
    tpu.vector_store %arg9[%c0_144, %c0_145, %c0_146], %537 {strides = array<i32>} : memref<1x32x32xf32, #tpu.memory_space<vmem>>, vector<1x4x32xf32>,
    %538 = vector.extract_strided_slice %505 {offsets = [4, 0], sizes = [4, 128], strides = [1, 1]} : vector<32x128xf32> to vector<4x128xf32>
    %cst_147 = arith.constant dense<0.000000e+00> : vector<4x128xf32>
    %539 = tpu.matmul %534, %500, %cst_147 {dimension_numbers = #tpu.dot_dimension_numbers<[1], [0], [0], [1], [0, 0, 1, 1], [], []>} : vector<4x32xf32>, vector<32x128xf32>, vector<4x128xf32> -> vector<4x128xf32>
    %540 = arith.addf %538, %539 : vector<4x128xf32>
    %541 = vector.extract_strided_slice %540 {offsets = [0, 0], sizes = [4, 32], strides = [1, 1]} : vector<4x128xf32> to vector<4x32xf32>
    %542 = arith.negf %541 : vector<4x32xf32>
    %543 = math.exp %542 : vector<4x32xf32>
    %cst_148 = arith.constant 1.000000e+00 : f32
    %544 = vector.broadcast %cst_148 : f32 to vector<4x32xf32>
    %545 = arith.addf %544, %543 : vector<4x32xf32>
    %546 = arith.divf %544, %545 : vector<4x32xf32>
    %547 = vector.extract_strided_slice %540 {offsets = [0, 32], sizes = [4, 32], strides = [1, 1]} : vector<4x128xf32> to vector<4x32xf32>
    %548 = arith.negf %547 : vector<4x32xf32>
    %549 = math.exp %548 : vector<4x32xf32>
    %cst_149 = arith.constant 1.000000e+00 : f32
    %550 = vector.broadcast %cst_149 : f32 to vector<4x32xf32>
    %551 = arith.addf %550, %549 : vector<4x32xf32>
    %552 = arith.divf %550, %551 : vector<4x32xf32>
    %553 = vector.extract_strided_slice %540 {offsets = [0, 64], sizes = [4, 32], strides = [1, 1]} : vector<4x128xf32> to vector<4x32xf32>
    %554 = math.tanh %553 : vector<4x32xf32>
    %555 = vector.extract_strided_slice %540 {offsets = [0, 96], sizes = [4, 32], strides = [1, 1]} : vector<4x128xf32> to vector<4x32xf32>
    %556 = arith.negf %555 : vector<4x32xf32>
    %557 = math.exp %556 : vector<4x32xf32>
    %cst_150 = arith.constant 1.000000e+00 : f32
    %558 = vector.broadcast %cst_150 : f32 to vector<4x32xf32>
    %559 = arith.addf %558, %557 : vector<4x32xf32>
    %560 = arith.divf %558, %559 : vector<4x32xf32>
    %561 = arith.mulf %552, %532 : vector<4x32xf32>
    %562 = arith.mulf %546, %554 : vector<4x32xf32>
    %563 = arith.addf %561, %562 : vector<4x32xf32>
    %564 = math.tanh %563 : vector<4x32xf32>
    %565 = arith.mulf %560, %564 : vector<4x32xf32>
    %c0_151 = arith.constant 0 : index
    %c4_152 = arith.constant 4 : index
    %c0_153 = arith.constant 0 : index
    %566 = vector.load %arg9[%c0_151, %c4_152, %c0_153] : memref<1x32x32xf32, #tpu.memory_space<vmem>>, vector<1x4x32xf32>
    %567 = vector.shape_cast %566 : vector<1x4x32xf32> to vector<4x32xf32>
    %568 = vector.shape_cast %565 : vector<4x32xf32> to vector<1x4x32xf32>
    tpu.vector_store %arg9[%c0_151, %c4_152, %c0_153], %568 {strides = array<i32>} : memref<1x32x32xf32, #tpu.memory_space<vmem>>, vector<1x4x32xf32>,
    %569 = vector.extract_strided_slice %505 {offsets = [8, 0], sizes = [4, 128], strides = [1, 1]} : vector<32x128xf32> to vector<4x128xf32>
    %cst_154 = arith.constant dense<0.000000e+00> : vector<4x128xf32>
    %570 = tpu.matmul %565, %500, %cst_154 {dimension_numbers = #tpu.dot_dimension_numbers<[1], [0], [0], [1], [0, 0, 1, 1], [], []>} : vector<4x32xf32>, vector<32x128xf32>, vector<4x128xf32> -> vector<4x128xf32>
    %571 = arith.addf %569, %570 : vector<4x128xf32>
    %572 = vector.extract_strided_slice %571 {offsets = [0, 0], sizes = [4, 32], strides = [1, 1]} : vector<4x128xf32> to vector<4x32xf32>
    %573 = arith.negf %572 : vector<4x32xf32>
    %574 = math.exp %573 : vector<4x32xf32>
    %cst_155 = arith.constant 1.000000e+00 : f32
    %575 = vector.broadcast %cst_155 : f32 to vector<4x32xf32>
    %576 = arith.addf %575, %574 : vector<4x32xf32>
    %577 = arith.divf %575, %576 : vector<4x32xf32>
    %578 = vector.extract_strided_slice %571 {offsets = [0, 32], sizes = [4, 32], strides = [1, 1]} : vector<4x128xf32> to vector<4x32xf32>
    %579 = arith.negf %578 : vector<4x32xf32>
    %580 = math.exp %579 : vector<4x32xf32>
    %cst_156 = arith.constant 1.000000e+00 : f32
    %581 = vector.broadcast %cst_156 : f32 to vector<4x32xf32>
    %582 = arith.addf %581, %580 : vector<4x32xf32>
    %583 = arith.divf %581, %582 : vector<4x32xf32>
    %584 = vector.extract_strided_slice %571 {offsets = [0, 64], sizes = [4, 32], strides = [1, 1]} : vector<4x128xf32> to vector<4x32xf32>
    %585 = math.tanh %584 : vector<4x32xf32>
    %586 = vector.extract_strided_slice %571 {offsets = [0, 96], sizes = [4, 32], strides = [1, 1]} : vector<4x128xf32> to vector<4x32xf32>
    %587 = arith.negf %586 : vector<4x32xf32>
    %588 = math.exp %587 : vector<4x32xf32>
    %cst_157 = arith.constant 1.000000e+00 : f32
    %589 = vector.broadcast %cst_157 : f32 to vector<4x32xf32>
    %590 = arith.addf %589, %588 : vector<4x32xf32>
    %591 = arith.divf %589, %590 : vector<4x32xf32>
    %592 = arith.mulf %583, %563 : vector<4x32xf32>
    %593 = arith.mulf %577, %585 : vector<4x32xf32>
    %594 = arith.addf %592, %593 : vector<4x32xf32>
    %595 = math.tanh %594 : vector<4x32xf32>
    %596 = arith.mulf %591, %595 : vector<4x32xf32>
    %c0_158 = arith.constant 0 : index
    %c8_159 = arith.constant 8 : index
    %c0_160 = arith.constant 0 : index
    %597 = vector.load %arg9[%c0_158, %c8_159, %c0_160] : memref<1x32x32xf32, #tpu.memory_space<vmem>>, vector<1x4x32xf32>
    %598 = vector.shape_cast %597 : vector<1x4x32xf32> to vector<4x32xf32>
    %599 = vector.shape_cast %596 : vector<4x32xf32> to vector<1x4x32xf32>
    tpu.vector_store %arg9[%c0_158, %c8_159, %c0_160], %599 {strides = array<i32>} : memref<1x32x32xf32, #tpu.memory_space<vmem>>, vector<1x4x32xf32>,
    %600 = vector.extract_strided_slice %505 {offsets = [12, 0], sizes = [4, 128], strides = [1, 1]} : vector<32x128xf32> to vector<4x128xf32>
    %cst_161 = arith.constant dense<0.000000e+00> : vector<4x128xf32>
    %601 = tpu.matmul %596, %500, %cst_161 {dimension_numbers = #tpu.dot_dimension_numbers<[1], [0], [0], [1], [0, 0, 1, 1], [], []>} : vector<4x32xf32>, vector<32x128xf32>, vector<4x128xf32> -> vector<4x128xf32>
    %602 = arith.addf %600, %601 : vector<4x128xf32>
    %603 = vector.extract_strided_slice %602 {offsets = [0, 0], sizes = [4, 32], strides = [1, 1]} : vector<4x128xf32> to vector<4x32xf32>
    %604 = arith.negf %603 : vector<4x32xf32>
    %605 = math.exp %604 : vector<4x32xf32>
    %cst_162 = arith.constant 1.000000e+00 : f32
    %606 = vector.broadcast %cst_162 : f32 to vector<4x32xf32>
    %607 = arith.addf %606, %605 : vector<4x32xf32>
    %608 = arith.divf %606, %607 : vector<4x32xf32>
    %609 = vector.extract_strided_slice %602 {offsets = [0, 32], sizes = [4, 32], strides = [1, 1]} : vector<4x128xf32> to vector<4x32xf32>
    %610 = arith.negf %609 : vector<4x32xf32>
    %611 = math.exp %610 : vector<4x32xf32>
    %cst_163 = arith.constant 1.000000e+00 : f32
    %612 = vector.broadcast %cst_163 : f32 to vector<4x32xf32>
    %613 = arith.addf %612, %611 : vector<4x32xf32>
    %614 = arith.divf %612, %613 : vector<4x32xf32>
    %615 = vector.extract_strided_slice %602 {offsets = [0, 64], sizes = [4, 32], strides = [1, 1]} : vector<4x128xf32> to vector<4x32xf32>
    %616 = math.tanh %615 : vector<4x32xf32>
    %617 = vector.extract_strided_slice %602 {offsets = [0, 96], sizes = [4, 32], strides = [1, 1]} : vector<4x128xf32> to vector<4x32xf32>
    %618 = arith.negf %617 : vector<4x32xf32>
    %619 = math.exp %618 : vector<4x32xf32>
    %cst_164 = arith.constant 1.000000e+00 : f32
    %620 = vector.broadcast %cst_164 : f32 to vector<4x32xf32>
    %621 = arith.addf %620, %619 : vector<4x32xf32>
    %622 = arith.divf %620, %621 : vector<4x32xf32>
    %623 = arith.mulf %614, %594 : vector<4x32xf32>
    %624 = arith.mulf %608, %616 : vector<4x32xf32>
    %625 = arith.addf %623, %624 : vector<4x32xf32>
    %626 = math.tanh %625 : vector<4x32xf32>
    %627 = arith.mulf %622, %626 : vector<4x32xf32>
    %c0_165 = arith.constant 0 : index
    %c12_166 = arith.constant 12 : index
    %c0_167 = arith.constant 0 : index
    %628 = vector.load %arg9[%c0_165, %c12_166, %c0_167] : memref<1x32x32xf32, #tpu.memory_space<vmem>>, vector<1x4x32xf32>
    %629 = vector.shape_cast %628 : vector<1x4x32xf32> to vector<4x32xf32>
    %630 = vector.shape_cast %627 : vector<4x32xf32> to vector<1x4x32xf32>
    tpu.vector_store %arg9[%c0_165, %c12_166, %c0_167], %630 {strides = array<i32>} : memref<1x32x32xf32, #tpu.memory_space<vmem>>, vector<1x4x32xf32>,
    %631 = vector.extract_strided_slice %505 {offsets = [16, 0], sizes = [4, 128], strides = [1, 1]} : vector<32x128xf32> to vector<4x128xf32>
    %cst_168 = arith.constant dense<0.000000e+00> : vector<4x128xf32>
    %632 = tpu.matmul %627, %500, %cst_168 {dimension_numbers = #tpu.dot_dimension_numbers<[1], [0], [0], [1], [0, 0, 1, 1], [], []>} : vector<4x32xf32>, vector<32x128xf32>, vector<4x128xf32> -> vector<4x128xf32>
    %633 = arith.addf %631, %632 : vector<4x128xf32>
    %634 = vector.extract_strided_slice %633 {offsets = [0, 0], sizes = [4, 32], strides = [1, 1]} : vector<4x128xf32> to vector<4x32xf32>
    %635 = arith.negf %634 : vector<4x32xf32>
    %636 = math.exp %635 : vector<4x32xf32>
    %cst_169 = arith.constant 1.000000e+00 : f32
    %637 = vector.broadcast %cst_169 : f32 to vector<4x32xf32>
    %638 = arith.addf %637, %636 : vector<4x32xf32>
    %639 = arith.divf %637, %638 : vector<4x32xf32>
    %640 = vector.extract_strided_slice %633 {offsets = [0, 32], sizes = [4, 32], strides = [1, 1]} : vector<4x128xf32> to vector<4x32xf32>
    %641 = arith.negf %640 : vector<4x32xf32>
    %642 = math.exp %641 : vector<4x32xf32>
    %cst_170 = arith.constant 1.000000e+00 : f32
    %643 = vector.broadcast %cst_170 : f32 to vector<4x32xf32>
    %644 = arith.addf %643, %642 : vector<4x32xf32>
    %645 = arith.divf %643, %644 : vector<4x32xf32>
    %646 = vector.extract_strided_slice %633 {offsets = [0, 64], sizes = [4, 32], strides = [1, 1]} : vector<4x128xf32> to vector<4x32xf32>
    %647 = math.tanh %646 : vector<4x32xf32>
    %648 = vector.extract_strided_slice %633 {offsets = [0, 96], sizes = [4, 32], strides = [1, 1]} : vector<4x128xf32> to vector<4x32xf32>
    %649 = arith.negf %648 : vector<4x32xf32>
    %650 = math.exp %649 : vector<4x32xf32>
    %cst_171 = arith.constant 1.000000e+00 : f32
    %651 = vector.broadcast %cst_171 : f32 to vector<4x32xf32>
    %652 = arith.addf %651, %650 : vector<4x32xf32>
    %653 = arith.divf %651, %652 : vector<4x32xf32>
    %654 = arith.mulf %645, %625 : vector<4x32xf32>
    %655 = arith.mulf %639, %647 : vector<4x32xf32>
    %656 = arith.addf %654, %655 : vector<4x32xf32>
    %657 = math.tanh %656 : vector<4x32xf32>
    %658 = arith.mulf %653, %657 : vector<4x32xf32>
    %c0_172 = arith.constant 0 : index
    %c16_173 = arith.constant 16 : index
    %c0_174 = arith.constant 0 : index
    %659 = vector.load %arg9[%c0_172, %c16_173, %c0_174] : memref<1x32x32xf32, #tpu.memory_space<vmem>>, vector<1x4x32xf32>
    %660 = vector.shape_cast %659 : vector<1x4x32xf32> to vector<4x32xf32>
    %661 = vector.shape_cast %658 : vector<4x32xf32> to vector<1x4x32xf32>
    tpu.vector_store %arg9[%c0_172, %c16_173, %c0_174], %661 {strides = array<i32>} : memref<1x32x32xf32, #tpu.memory_space<vmem>>, vector<1x4x32xf32>,
    %662 = vector.extract_strided_slice %505 {offsets = [20, 0], sizes = [4, 128], strides = [1, 1]} : vector<32x128xf32> to vector<4x128xf32>
    %cst_175 = arith.constant dense<0.000000e+00> : vector<4x128xf32>
    %663 = tpu.matmul %658, %500, %cst_175 {dimension_numbers = #tpu.dot_dimension_numbers<[1], [0], [0], [1], [0, 0, 1, 1], [], []>} : vector<4x32xf32>, vector<32x128xf32>, vector<4x128xf32> -> vector<4x128xf32>
    %664 = arith.addf %662, %663 : vector<4x128xf32>
    %665 = vector.extract_strided_slice %664 {offsets = [0, 0], sizes = [4, 32], strides = [1, 1]} : vector<4x128xf32> to vector<4x32xf32>
    %666 = arith.negf %665 : vector<4x32xf32>
    %667 = math.exp %666 : vector<4x32xf32>
    %cst_176 = arith.constant 1.000000e+00 : f32
    %668 = vector.broadcast %cst_176 : f32 to vector<4x32xf32>
    %669 = arith.addf %668, %667 : vector<4x32xf32>
    %670 = arith.divf %668, %669 : vector<4x32xf32>
    %671 = vector.extract_strided_slice %664 {offsets = [0, 32], sizes = [4, 32], strides = [1, 1]} : vector<4x128xf32> to vector<4x32xf32>
    %672 = arith.negf %671 : vector<4x32xf32>
    %673 = math.exp %672 : vector<4x32xf32>
    %cst_177 = arith.constant 1.000000e+00 : f32
    %674 = vector.broadcast %cst_177 : f32 to vector<4x32xf32>
    %675 = arith.addf %674, %673 : vector<4x32xf32>
    %676 = arith.divf %674, %675 : vector<4x32xf32>
    %677 = vector.extract_strided_slice %664 {offsets = [0, 64], sizes = [4, 32], strides = [1, 1]} : vector<4x128xf32> to vector<4x32xf32>
    %678 = math.tanh %677 : vector<4x32xf32>
    %679 = vector.extract_strided_slice %664 {offsets = [0, 96], sizes = [4, 32], strides = [1, 1]} : vector<4x128xf32> to vector<4x32xf32>
    %680 = arith.negf %679 : vector<4x32xf32>
    %681 = math.exp %680 : vector<4x32xf32>
    %cst_178 = arith.constant 1.000000e+00 : f32
    %682 = vector.broadcast %cst_178 : f32 to vector<4x32xf32>
    %683 = arith.addf %682, %681 : vector<4x32xf32>
    %684 = arith.divf %682, %683 : vector<4x32xf32>
    %685 = arith.mulf %676, %656 : vector<4x32xf32>
    %686 = arith.mulf %670, %678 : vector<4x32xf32>
    %687 = arith.addf %685, %686 : vector<4x32xf32>
    %688 = math.tanh %687 : vector<4x32xf32>
    %689 = arith.mulf %684, %688 : vector<4x32xf32>
    %c0_179 = arith.constant 0 : index
    %c20_180 = arith.constant 20 : index
    %c0_181 = arith.constant 0 : index
    %690 = vector.load %arg9[%c0_179, %c20_180, %c0_181] : memref<1x32x32xf32, #tpu.memory_space<vmem>>, vector<1x4x32xf32>
    %691 = vector.shape_cast %690 : vector<1x4x32xf32> to vector<4x32xf32>
    %692 = vector.shape_cast %689 : vector<4x32xf32> to vector<1x4x32xf32>
    tpu.vector_store %arg9[%c0_179, %c20_180, %c0_181], %692 {strides = array<i32>} : memref<1x32x32xf32, #tpu.memory_space<vmem>>, vector<1x4x32xf32>,
    %693 = vector.extract_strided_slice %505 {offsets = [24, 0], sizes = [4, 128], strides = [1, 1]} : vector<32x128xf32> to vector<4x128xf32>
    %cst_182 = arith.constant dense<0.000000e+00> : vector<4x128xf32>
    %694 = tpu.matmul %689, %500, %cst_182 {dimension_numbers = #tpu.dot_dimension_numbers<[1], [0], [0], [1], [0, 0, 1, 1], [], []>} : vector<4x32xf32>, vector<32x128xf32>, vector<4x128xf32> -> vector<4x128xf32>
    %695 = arith.addf %693, %694 : vector<4x128xf32>
    %696 = vector.extract_strided_slice %695 {offsets = [0, 0], sizes = [4, 32], strides = [1, 1]} : vector<4x128xf32> to vector<4x32xf32>
    %697 = arith.negf %696 : vector<4x32xf32>
    %698 = math.exp %697 : vector<4x32xf32>
    %cst_183 = arith.constant 1.000000e+00 : f32
    %699 = vector.broadcast %cst_183 : f32 to vector<4x32xf32>
    %700 = arith.addf %699, %698 : vector<4x32xf32>
    %701 = arith.divf %699, %700 : vector<4x32xf32>
    %702 = vector.extract_strided_slice %695 {offsets = [0, 32], sizes = [4, 32], strides = [1, 1]} : vector<4x128xf32> to vector<4x32xf32>
    %703 = arith.negf %702 : vector<4x32xf32>
    %704 = math.exp %703 : vector<4x32xf32>
    %cst_184 = arith.constant 1.000000e+00 : f32
    %705 = vector.broadcast %cst_184 : f32 to vector<4x32xf32>
    %706 = arith.addf %705, %704 : vector<4x32xf32>
    %707 = arith.divf %705, %706 : vector<4x32xf32>
    %708 = vector.extract_strided_slice %695 {offsets = [0, 64], sizes = [4, 32], strides = [1, 1]} : vector<4x128xf32> to vector<4x32xf32>
    %709 = math.tanh %708 : vector<4x32xf32>
    %710 = vector.extract_strided_slice %695 {offsets = [0, 96], sizes = [4, 32], strides = [1, 1]} : vector<4x128xf32> to vector<4x32xf32>
    %711 = arith.negf %710 : vector<4x32xf32>
    %712 = math.exp %711 : vector<4x32xf32>
    %cst_185 = arith.constant 1.000000e+00 : f32
    %713 = vector.broadcast %cst_185 : f32 to vector<4x32xf32>
    %714 = arith.addf %713, %712 : vector<4x32xf32>
    %715 = arith.divf %713, %714 : vector<4x32xf32>
    %716 = arith.mulf %707, %687 : vector<4x32xf32>
    %717 = arith.mulf %701, %709 : vector<4x32xf32>
    %718 = arith.addf %716, %717 : vector<4x32xf32>
    %719 = math.tanh %718 : vector<4x32xf32>
    %720 = arith.mulf %715, %719 : vector<4x32xf32>
    %c0_186 = arith.constant 0 : index
    %c24_187 = arith.constant 24 : index
    %c0_188 = arith.constant 0 : index
    %721 = vector.load %arg9[%c0_186, %c24_187, %c0_188] : memref<1x32x32xf32, #tpu.memory_space<vmem>>, vector<1x4x32xf32>
    %722 = vector.shape_cast %721 : vector<1x4x32xf32> to vector<4x32xf32>
    %723 = vector.shape_cast %720 : vector<4x32xf32> to vector<1x4x32xf32>
    tpu.vector_store %arg9[%c0_186, %c24_187, %c0_188], %723 {strides = array<i32>} : memref<1x32x32xf32, #tpu.memory_space<vmem>>, vector<1x4x32xf32>,
    %724 = vector.extract_strided_slice %505 {offsets = [28, 0], sizes = [4, 128], strides = [1, 1]} : vector<32x128xf32> to vector<4x128xf32>
    %cst_189 = arith.constant dense<0.000000e+00> : vector<4x128xf32>
    %725 = tpu.matmul %720, %500, %cst_189 {dimension_numbers = #tpu.dot_dimension_numbers<[1], [0], [0], [1], [0, 0, 1, 1], [], []>} : vector<4x32xf32>, vector<32x128xf32>, vector<4x128xf32> -> vector<4x128xf32>
    %726 = arith.addf %724, %725 : vector<4x128xf32>
    %727 = vector.extract_strided_slice %726 {offsets = [0, 0], sizes = [4, 32], strides = [1, 1]} : vector<4x128xf32> to vector<4x32xf32>
    %728 = arith.negf %727 : vector<4x32xf32>
    %729 = math.exp %728 : vector<4x32xf32>
    %cst_190 = arith.constant 1.000000e+00 : f32
    %730 = vector.broadcast %cst_190 : f32 to vector<4x32xf32>
    %731 = arith.addf %730, %729 : vector<4x32xf32>
    %732 = arith.divf %730, %731 : vector<4x32xf32>
    %733 = vector.extract_strided_slice %726 {offsets = [0, 32], sizes = [4, 32], strides = [1, 1]} : vector<4x128xf32> to vector<4x32xf32>
    %734 = arith.negf %733 : vector<4x32xf32>
    %735 = math.exp %734 : vector<4x32xf32>
    %cst_191 = arith.constant 1.000000e+00 : f32
    %736 = vector.broadcast %cst_191 : f32 to vector<4x32xf32>
    %737 = arith.addf %736, %735 : vector<4x32xf32>
    %738 = arith.divf %736, %737 : vector<4x32xf32>
    %739 = vector.extract_strided_slice %726 {offsets = [0, 64], sizes = [4, 32], strides = [1, 1]} : vector<4x128xf32> to vector<4x32xf32>
    %740 = math.tanh %739 : vector<4x32xf32>
    %741 = vector.extract_strided_slice %726 {offsets = [0, 96], sizes = [4, 32], strides = [1, 1]} : vector<4x128xf32> to vector<4x32xf32>
    %742 = arith.negf %741 : vector<4x32xf32>
    %743 = math.exp %742 : vector<4x32xf32>
    %cst_192 = arith.constant 1.000000e+00 : f32
    %744 = vector.broadcast %cst_192 : f32 to vector<4x32xf32>
    %745 = arith.addf %744, %743 : vector<4x32xf32>
    %746 = arith.divf %744, %745 : vector<4x32xf32>
    %747 = arith.mulf %738, %718 : vector<4x32xf32>
    %748 = arith.mulf %732, %740 : vector<4x32xf32>
    %749 = arith.addf %747, %748 : vector<4x32xf32>
    %750 = math.tanh %749 : vector<4x32xf32>
    %751 = arith.mulf %746, %750 : vector<4x32xf32>
    %c0_193 = arith.constant 0 : index
    %c28_194 = arith.constant 28 : index
    %c0_195 = arith.constant 0 : index
    %752 = vector.load %arg9[%c0_193, %c28_194, %c0_195] : memref<1x32x32xf32, #tpu.memory_space<vmem>>, vector<1x4x32xf32>
    %753 = vector.shape_cast %752 : vector<1x4x32xf32> to vector<4x32xf32>
    %754 = vector.shape_cast %751 : vector<4x32xf32> to vector<1x4x32xf32>
    tpu.vector_store %arg9[%c0_193, %c28_194, %c0_195], %754 {strides = array<i32>} : memref<1x32x32xf32, #tpu.memory_space<vmem>>, vector<1x4x32xf32>,
    return
  }
  func.func @transform_0(%arg0: i32) -> (i32, i32, i32) {
    %c0_i32 = arith.constant 0 : i32
    %c0_i32_0 = arith.constant 0 : i32
    %c0_i32_1 = arith.constant 0 : i32
    return %arg0, %c0_i32, %c0_i32_0 : i32, i32, i32
  }
  func.func @transform_1(%arg0: i32) -> (i32, i32, i32) {
    %c0_i32 = arith.constant 0 : i32
    %c0_i32_0 = arith.constant 0 : i32
    %c0_i32_1 = arith.constant 0 : i32
    return %arg0, %c0_i32, %c0_i32_0 : i32, i32, i32
  }
  func.func @transform_2(%arg0: i32) -> (i32, i32, i32) {
    %c0_i32 = arith.constant 0 : i32
    %c0_i32_0 = arith.constant 0 : i32
    %c0_i32_1 = arith.constant 0 : i32
    return %arg0, %c0_i32, %c0_i32_0 : i32, i32, i32
  }
  func.func @transform_3(%arg0: i32) -> (i32, i32, i32) {
    %c0_i32 = arith.constant 0 : i32
    %c0_i32_0 = arith.constant 0 : i32
    %c0_i32_1 = arith.constant 0 : i32
    return %arg0, %c0_i32, %c0_i32_0 : i32, i32, i32
  }
  func.func @transform_4(%arg0: i32) -> (i32, i32, i32) {
    %c0_i32 = arith.constant 0 : i32
    %c0_i32_0 = arith.constant 0 : i32
    %c0_i32_1 = arith.constant 0 : i32
    return %arg0, %c0_i32, %c0_i32_0 : i32, i32, i32
  }
  func.func @transform_5(%arg0: i32) -> (i32, i32, i32, i32) {
    %c0_i32 = arith.constant 0 : i32
    %c0_i32_0 = arith.constant 0 : i32
    %c0_i32_1 = arith.constant 0 : i32
    %c0_i32_2 = arith.constant 0 : i32
    return %arg0, %c0_i32, %c0_i32_0, %c0_i32_1 : i32, i32, i32, i32
  }
  func.func @transform_6(%arg0: i32) -> (i32, i32, i32, i32) {
    %c0_i32 = arith.constant 0 : i32
    %c0_i32_0 = arith.constant 0 : i32
    %c0_i32_1 = arith.constant 0 : i32
    %c0_i32_2 = arith.constant 0 : i32
    return %arg0, %c0_i32, %c0_i32_0, %c0_i32_1 : i32, i32, i32, i32
  }
  func.func @transform_7(%arg0: i32) -> (i32, i32, i32, i32) {
    %c0_i32 = arith.constant 0 : i32
    %c0_i32_0 = arith.constant 0 : i32
    %c0_i32_1 = arith.constant 0 : i32
    %c0_i32_2 = arith.constant 0 : i32
    return %arg0, %c0_i32, %c0_i32_0, %c0_i32_1 : i32, i32, i32, i32
  }
  func.func @transform_8(%arg0: i32) -> (i32, i32, i32) {
    %c0_i32 = arith.constant 0 : i32
    %c0_i32_0 = arith.constant 0 : i32
    %c0_i32_1 = arith.constant 0 : i32
    return %arg0, %c0_i32, %c0_i32_0 : i32, i32, i32
  }
}

</mosaic_0001>

<llo_original>
// kernel: nslstm_forward.1
$region0: #{nslstm_forward.1}
  #allocation0 [shape = 'u32[]', space=smem, size = 0x4, offset = 0x4, fixed_abs, tag = 'smem constant byte address 0x4 - core index']
  #allocation1 [shape = 'u32[72,128]{1,0:T(1,128)}', space=vmem, size = 0x9000, scoped, tag = 'internal scratch']
  #allocation2 [shape = 'f32[32,32]{1,0:T(8,128)}', space=vmem, size = 0x4000, scoped, tag = 'scratch operand']
  %s0 = inlined_call_operand.vmem [shape: f32[3,32,32], index: 0, kind: input, shape index: {}]
  %s1 = inlined_call_operand.vmem [shape: f32[3,12,32], index: 1, kind: input, shape index: {}]
  %s2 = inlined_call_operand.vmem [shape: f32[3,32,32], index: 2, kind: input, shape index: {}]
  %s3 = inlined_call_operand.vmem [shape: f32[3,1,32], index: 3, kind: input, shape index: {}]
  %s4 = inlined_call_operand.vmem [shape: f32[3,32,128], index: 4, kind: input, shape index: {}]
  %s5 = inlined_call_operand.vmem [shape: f32[3,2,32,128], index: 5, kind: input, shape index: {}]
  %s6 = inlined_call_operand.vmem [shape: f32[3,3,32,128], index: 6, kind: input, shape index: {}]
  %s7 = inlined_call_operand.vmem [shape: f32[3,3,1,128], index: 7, kind: input, shape index: {}]
  %s8 = inlined_call_operand.vmem [shape: f32[3,32,32], index: 8, kind: output, shape index: {}]
  %s9 = sld [smem:[#allocation0]]
  $region65: #{nslstm_forward.1} parent=0
    _
  %s11 = ssub.s32 1, %s9
  %s12 = scalar_select 0, %s11, %s9
  loop: start=0, step=1, limit=5
  $region2: #{nslstm_forward.1} parent=0 // loop_pre_header
    _
  $region3: #{nslstm_forward.1} parent=0 // loop_header
    %s14 = sphi 0, %s18
    %p15 = scmp.ge.s32.totalorder %s14, 5
    %s24 = sphi 0, %s26
    %s27 = sphi 0, %s24
    %s28 = sphi 0, %s27
    %s44 = sphi 0, %s28
    %s50 = sphi 0, %s52
    %s53 = sphi 0, %s50
    %s54 = sphi 0, %s53
    %s70 = sphi 0, %s54
    %s76 = sphi 0, %s78
    %s79 = sphi 0, %s76
    %s80 = sphi 0, %s79
    %s96 = sphi 0, %s80
    %s102 = sphi 0, %s104
    %s105 = sphi 0, %s102
    %s106 = sphi 0, %s105
    %s122 = sphi 0, %s106
    %s128 = sphi 0, %s130
    %s131 = sphi 0, %s128
    %s132 = sphi 0, %s131
    %s148 = sphi 0, %s132
    %s154 = sphi 0, %s156
    %s157 = sphi 0, %s154
    %s158 = sphi 0, %s157
    %s174 = sphi 0, %s158
    %s180 = sphi 0, %s182
    %s183 = sphi 0, %s180
    %s184 = sphi 0, %s183
    %s200 = sphi 0, %s184
    %s206 = sphi 0, %s208
    %s209 = sphi 0, %s206
    %s210 = sphi 0, %s209
    %s226 = sphi 0, %s210
    %s232 = sphi 0, %s234
    %s235 = sphi 0, %s232
    %s236 = sphi 0, %s235
    %s252 = sphi 0, %s236
  $region4: #{nslstm_forward.1} parent=0 // loop_header_branch
    %17 = sbr.rel (%p15) target = $region8
  $region5: #{nslstm_forward.1} parent=0 // loop_body
    %s19 = ssub.s32 %s14, 1
    %s20 = ssub.s32 %s14, 2
    %s21 = sadd.s32 %s14, 1
    %s22 = ssub.s32 %s14, %s21
    %p23 = scmp.eq.s32.totalorder %s22, 0
    %s25 = sadd.s32 %s24, 1
    %s26 = scalar_select %p23, %s24, %s25
    %p29 = pneg %p23
    %p30 = scmp.eq.s32.totalorder %s14, 2
    %p31 = por %p29, %p30
    %p32 = scmp.ne.s32.totalorder %s24, %s27
    %p33 = scmp.eq.s32.totalorder %s14, 0
    %p34 = por %p32, %p33
    %p35 = scmp.ne.s32.totalorder %s24, %s27
    %p36 = scmp.eq.s32.totalorder %s19, 2
    %p37 = por %p35, %p36
    %p38 = scmp.ne.s32.totalorder %s27, %s28
    %p39 = scmp.eq.s32.totalorder %s19, 0
    %p40 = por %p38, %p39
    %p41 = scmp.ne.s32.totalorder %s27, %s28
    %p42 = scmp.eq.s32.totalorder %s20, 2
    %p43 = por %p41, %p42
    %p45 = scmp.ne.s32.totalorder %s28, %s44
    %p46 = scmp.eq.s32.totalorder %s20, 0
    %p47 = por %p45, %p46
    %s48 = ssub.s32 %s14, %s21
    %p49 = scmp.eq.s32.totalorder %s48, 0
    %s51 = sadd.s32 %s50, 1
    %s52 = scalar_select %p49, %s50, %s51
    %p55 = pneg %p49
    %p56 = scmp.eq.s32.totalorder %s14, 2
    %p57 = por %p55, %p56
    %p58 = scmp.ne.s32.totalorder %s50, %s53
    %p59 = scmp.eq.s32.totalorder %s14, 0
    %p60 = por %p58, %p59
    %p61 = scmp.ne.s32.totalorder %s50, %s53
    %p62 = scmp.eq.s32.totalorder %s19, 2
    %p63 = por %p61, %p62
    %p64 = scmp.ne.s32.totalorder %s53, %s54
    %p65 = scmp.eq.s32.totalorder %s19, 0
    %p66 = por %p64, %p65
    %p67 = scmp.ne.s32.totalorder %s53, %s54
    %p68 = scmp.eq.s32.totalorder %s20, 2
    %p69 = por %p67, %p68
    %p71 = scmp.ne.s32.totalorder %s54, %s70
    %p72 = scmp.eq.s32.totalorder %s20, 0
    %p73 = por %p71, %p72
    %s74 = ssub.s32 %s14, %s21
    %p75 = scmp.eq.s32.totalorder %s74, 0
    %s77 = sadd.s32 %s76, 1
    %s78 = scalar_select %p75, %s76, %s77
    %p81 = pneg %p75
    %p82 = scmp.eq.s32.totalorder %s14, 2
    %p83 = por %p81, %p82
    %p84 = scmp.ne.s32.totalorder %s76, %s79
    %p85 = scmp.eq.s32.totalorder %s14, 0
    %p86 = por %p84, %p85
    %p87 = scmp.ne.s32.totalorder %s76, %s79
    %p88 = scmp.eq.s32.totalorder %s19, 2
    %p89 = por %p87, %p88
    %p90 = scmp.ne.s32.totalorder %s79, %s80
    %p91 = scmp.eq.s32.totalorder %s19, 0
    %p92 = por %p90, %p91
    %p93 = scmp.ne.s32.totalorder %s79, %s80
    %p94 = scmp.eq.s32.totalorder %s20, 2
    %p95 = por %p93, %p94
    %p97 = scmp.ne.s32.totalorder %s80, %s96
    %p98 = scmp.eq.s32.totalorder %s20, 0
    %p99 = por %p97, %p98
    %s100 = ssub.s32 %s14, %s21
    %p101 = scmp.eq.s32.totalorder %s100, 0
    %s103 = sadd.s32 %s102, 1
    %s104 = scalar_select %p101, %s102, %s103
    %p107 = pneg %p101
    %p108 = scmp.eq.s32.totalorder %s14, 2
    %p109 = por %p107, %p108
    %p110 = scmp.ne.s32.totalorder %s102, %s105
    %p111 = scmp.eq.s32.totalorder %s14, 0
    %p112 = por %p110, %p111
    %p113 = scmp.ne.s32.totalorder %s102, %s105
    %p114 = scmp.eq.s32.totalorder %s19, 2
    %p115 = por %p113, %p114
    %p116 = scmp.ne.s32.totalorder %s105, %s106
    %p117 = scmp.eq.s32.totalorder %s19, 0
    %p118 = por %p116, %p117
    %p119 = scmp.ne.s32.totalorder %s105, %s106
    %p120 = scmp.eq.s32.totalorder %s20, 2
    %p121 = por %p119, %p120
    %p123 = scmp.ne.s32.totalorder %s106, %s122
    %p124 = scmp.eq.s32.totalorder %s20, 0
    %p125 = por %p123, %p124
    %s126 = ssub.s32 %s14, %s21
    %p127 = scmp.eq.s32.totalorder %s126, 0
    %s129 = sadd.s32 %s128, 1
    %s130 = scalar_select %p127, %s128, %s129
    %p133 = pneg %p127
    %p134 = scmp.eq.s32.totalorder %s14, 2
    %p135 = por %p133, %p134
    %p136 = scmp.ne.s32.totalorder %s128, %s131
    %p137 = scmp.eq.s32.totalorder %s14, 0
    %p138 = por %p136, %p137
    %p139 = scmp.ne.s32.totalorder %s128, %s131
    %p140 = scmp.eq.s32.totalorder %s19, 2
    %p141 = por %p139, %p140
    %p142 = scmp.ne.s32.totalorder %s131, %s132
    %p143 = scmp.eq.s32.totalorder %s19, 0
    %p144 = por %p142, %p143
    %p145 = scmp.ne.s32.totalorder %s131, %s132
    %p146 = scmp.eq.s32.totalorder %s20, 2
    %p147 = por %p145, %p146
    %p149 = scmp.ne.s32.totalorder %s132, %s148
    %p150 = scmp.eq.s32.totalorder %s20, 0
    %p151 = por %p149, %p150
    %s152 = ssub.s32 %s14, %s21
    %p153 = scmp.eq.s32.totalorder %s152, 0
    %s155 = sadd.s32 %s154, 1
    %s156 = scalar_select %p153, %s154, %s155
    %p159 = pneg %p153
    %p160 = scmp.eq.s32.totalorder %s14, 2
    %p161 = por %p159, %p160
    %p162 = scmp.ne.s32.totalorder %s154, %s157
    %p163 = scmp.eq.s32.totalorder %s14, 0
    %p164 = por %p162, %p163
    %p165 = scmp.ne.s32.totalorder %s154, %s157
    %p166 = scmp.eq.s32.totalorder %s19, 2
    %p167 = por %p165, %p166
    %p168 = scmp.ne.s32.totalorder %s157, %s158
    %p169 = scmp.eq.s32.totalorder %s19, 0
    %p170 = por %p168, %p169
    %p171 = scmp.ne.s32.totalorder %s157, %s158
    %p172 = scmp.eq.s32.totalorder %s20, 2
    %p173 = por %p171, %p172
    %p175 = scmp.ne.s32.totalorder %s158, %s174
    %p176 = scmp.eq.s32.totalorder %s20, 0
    %p177 = por %p175, %p176
    %s178 = ssub.s32 %s14, %s21
    %p179 = scmp.eq.s32.totalorder %s178, 0
    %s181 = sadd.s32 %s180, 1
    %s182 = scalar_select %p179, %s180, %s181
    %p185 = pneg %p179
    %p186 = scmp.eq.s32.totalorder %s14, 2
    %p187 = por %p185, %p186
    %p188 = scmp.ne.s32.totalorder %s180, %s183
    %p189 = scmp.eq.s32.totalorder %s14, 0
    %p190 = por %p188, %p189
    %p191 = scmp.ne.s32.totalorder %s180, %s183
    %p192 = scmp.eq.s32.totalorder %s19, 2
    %p193 = por %p191, %p192
    %p194 = scmp.ne.s32.totalorder %s183, %s184
    %p195 = scmp.eq.s32.totalorder %s19, 0
    %p196 = por %p194, %p195
    %p197 = scmp.ne.s32.totalorder %s183, %s184
    %p198 = scmp.eq.s32.totalorder %s20, 2
    %p199 = por %p197, %p198
    %p201 = scmp.ne.s32.totalorder %s184, %s200
    %p202 = scmp.eq.s32.totalorder %s20, 0
    %p203 = por %p201, %p202
    %s204 = ssub.s32 %s14, %s21
    %p205 = scmp.eq.s32.totalorder %s204, 0
    %s207 = sadd.s32 %s206, 1
    %s208 = scalar_select %p205, %s206, %s207
    %p211 = pneg %p205
    %p212 = scmp.eq.s32.totalorder %s14, 2
    %p213 = por %p211, %p212
    %p214 = scmp.ne.s32.totalorder %s206, %s209
    %p215 = scmp.eq.s32.totalorder %s14, 0
    %p216 = por %p214, %p215
    %p217 = scmp.ne.s32.totalorder %s206, %s209
    %p218 = scmp.eq.s32.totalorder %s19, 2
    %p219 = por %p217, %p218
    %p220 = scmp.ne.s32.totalorder %s209, %s210
    %p221 = scmp.eq.s32.totalorder %s19, 0
    %p222 = por %p220, %p221
    %p223 = scmp.ne.s32.totalorder %s209, %s210
    %p224 = scmp.eq.s32.totalorder %s20, 2
    %p225 = por %p223, %p224
    %p227 = scmp.ne.s32.totalorder %s210, %s226
    %p228 = scmp.eq.s32.totalorder %s20, 0
    %p229 = por %p227, %p228
    %s230 = ssub.s32 %s14, %s21
    %p231 = scmp.eq.s32.totalorder %s230, 0
    %s233 = sadd.s32 %s232, 1
    %s234 = scalar_select %p231, %s232, %s233
    %p237 = pneg %p231
    %p238 = scmp.eq.s32.totalorder %s14, 2
    %p239 = por %p237, %p238
    %p240 = scmp.ne.s32.totalorder %s232, %s235
    %p241 = scmp.eq.s32.totalorder %s14, 0
    %p242 = por %p240, %p241
    %p243 = scmp.ne.s32.totalorder %s232, %s235
    %p244 = scmp.eq.s32.totalorder %s19, 2
    %p245 = por %p243, %p244
    %p246 = scmp.ne.s32.totalorder %s235, %s236
    %p247 = scmp.eq.s32.totalorder %s19, 0
    %p248 = por %p246, %p247
    %p249 = scmp.ne.s32.totalorder %s235, %s236
    %p250 = scmp.eq.s32.totalorder %s20, 2
    %p251 = por %p249, %p250
    %p253 = scmp.ne.s32.totalorder %s236, %s252
    %p254 = scmp.eq.s32.totalorder %s20, 0
    %p255 = por %p253, %p254
    %p256 = scmp.le.s32.totalorder 1, %s14
    %p257 = scmp.lt.s32.totalorder %s14, 4
    %p258 = pnand %p256, %p257
    %p259 = pneg %p258
    // Predicated region
    $region9: #{nslstm_forward.1} parent=5 // pred_check
      _
    $region10: #{nslstm_forward.1} parent=5 // pred_check_branch
      %261 = sbr.rel (%p258) target = $region12
    $region11: #{nslstm_forward.1} parent=5 // pred_region
      %s262 = ssub.s32 %s14, 1
    $region12: #{nslstm_forward.1} parent=5 // pred_fallthru
      _
    %p263 = scmp.lt.s32.totalorder %s14, 3
    // Predicated region
    $region13: #{nslstm_forward.1} parent=5 // pred_check
      %p264 = pneg %p263
    $region14: #{nslstm_forward.1} parent=5 // pred_check_branch
      %266 = sbr.rel (%p264) target = $region16
    $region15: #{nslstm_forward.1} parent=5 // pred_region
      // Predicated region
      $region17: #{nslstm_forward.1} parent=15 // pred_check
        %p267 = pneg %p34
      $region18: #{nslstm_forward.1} parent=15 // pred_check_branch
        %269 = sbr.rel (%p267) target = $region20
      $region19: #{nslstm_forward.1} parent=15 // pred_region
        %p270 = scmp.lt.s32.totalorder %s14, 2
        %s271 = scalar_select %p270, %s14, 2
        %s272 = smul.addr %s271, 4
        %s273 = smul.addr %s272, 8
        %s274 = scalar_lea.vmem %s0, %s273
      $region20: #{nslstm_forward.1} parent=15 // pred_fallthru
        _
      // Predicated region
      $region21: #{nslstm_forward.1} parent=15 // pred_check
        %p275 = pneg %p60
      $region22: #{nslstm_forward.1} parent=15 // pred_check_branch
        %277 = sbr.rel (%p275) target = $region24
      $region23: #{nslstm_forward.1} parent=15 // pred_region
        %p278 = scmp.lt.s32.totalorder %s14, 2
        %s279 = scalar_select %p278, %s14, 2
        %s280 = smul.addr %s279, 2
        %s281 = smul.addr %s280, 8
        %s282 = scalar_lea.vmem %s1, %s281
      $region24: #{nslstm_forward.1} parent=15 // pred_fallthru
        _
      // Predicated region
      $region25: #{nslstm_forward.1} parent=15 // pred_check
        %p283 = pneg %p86
      $region26: #{nslstm_forward.1} parent=15 // pred_check_branch
        %285 = sbr.rel (%p283) target = $region28
      $region27: #{nslstm_forward.1} parent=15 // pred_region
        %p286 = scmp.lt.s32.totalorder %s14, 2
        %s287 = scalar_select %p286, %s14, 2
        %s288 = smul.addr %s287, 4
        %s289 = smul.addr %s288, 8
        %s290 = scalar_lea.vmem %s2, %s289
      $region28: #{nslstm_forward.1} parent=15 // pred_fallthru
        _
      // Predicated region
      $region29: #{nslstm_forward.1} parent=15 // pred_check
        %p291 = pneg %p112
      $region30: #{nslstm_forward.1} parent=15 // pred_check_branch
        %293 = sbr.rel (%p291) target = $region32
      $region31: #{nslstm_forward.1} parent=15 // pred_region
        %p294 = scmp.lt.s32.totalorder %s14, 2
        %s295 = scalar_select %p294, %s14, 2
        %s296 = scalar_lea.vmem %s3, %s295
      $region32: #{nslstm_forward.1} parent=15 // pred_fallthru
        _
      // Predicated region
      $region33: #{nslstm_forward.1} parent=15 // pred_check
        %p297 = pneg %p138
      $region34: #{nslstm_forward.1} parent=15 // pred_check_branch
        %299 = sbr.rel (%p297) target = $region36
      $region35: #{nslstm_forward.1} parent=15 // pred_region
        %p300 = scmp.lt.s32.totalorder %s14, 2
        %s301 = scalar_select %p300, %s14, 2
        %s302 = smul.addr %s301, 4
        %s303 = smul.addr %s302, 8
        %s304 = scalar_lea.vmem %s4, %s303
      $region36: #{nslstm_forward.1} parent=15 // pred_fallthru
        _
      // Predicated region
      $region37: #{nslstm_forward.1} parent=15 // pred_check
        %p305 = pneg %p164
      $region38: #{nslstm_forward.1} parent=15 // pred_check_branch
        %307 = sbr.rel (%p305) target = $region40
      $region39: #{nslstm_forward.1} parent=15 // pred_region
        %p308 = scmp.lt.s32.totalorder %s14, 2
        %s309 = scalar_select %p308, %s14, 2
        %s310 = smul.addr %s309, 8
        %s311 = smul.addr %s310, 8
        %s312 = scalar_lea.vmem %s5, %s311
      $region40: #{nslstm_forward.1} parent=15 // pred_fallthru
        _
      // Predicated region
      $region41: #{nslstm_forward.1} parent=15 // pred_check
        %p313 = pneg %p190
      $region42: #{nslstm_forward.1} parent=15 // pred_check_branch
        %315 = sbr.rel (%p313) target = $region44
      $region43: #{nslstm_forward.1} parent=15 // pred_region
        %p316 = scmp.lt.s32.totalorder %s14, 2
        %s317 = scalar_select %p316, %s14, 2
        %s318 = smul.addr %s317, 12
        %s319 = smul.addr %s318, 8
        %s320 = scalar_lea.vmem %s6, %s319
      $region44: #{nslstm_forward.1} parent=15 // pred_fallthru
        _
      // Predicated region
      $region45: #{nslstm_forward.1} parent=15 // pred_check
        %p321 = pneg %p216
      $region46: #{nslstm_forward.1} parent=15 // pred_check_branch
        %323 = sbr.rel (%p321) target = $region48
      $region47: #{nslstm_forward.1} parent=15 // pred_region
        %p324 = scmp.lt.s32.totalorder %s14, 2
        %s325 = scalar_select %p324, %s14, 2
        %s326 = smul.addr %s325, 3
        %s327 = scalar_lea.vmem %s7, %s326
      $region48: #{nslstm_forward.1} parent=15 // pred_fallthru
        _
    $region16: #{nslstm_forward.1} parent=5 // pred_fallthru
      _
    %p328 = scmp.le.s32.totalorder 1, %s14
    %p329 = scmp.lt.s32.totalorder %s14, 4
    %p330 = pnand %p328, %p329
    %p331 = pneg %p330
    // Predicated region
    $region49: #{nslstm_forward.1} parent=5 // pred_check
      _
    $region50: #{nslstm_forward.1} parent=5 // pred_check_branch
      %333 = sbr.rel (%p330) target = $region52
    $region51: #{nslstm_forward.1} parent=5 // pred_region
      %s334 = ssub.s32 %s14, 1
      %p335 = scmp.lt.s32.totalorder %s19, 2
      %s336 = scalar_select %p335, %s19, 2
      %s337 = smul.addr %s336, 4
      %s338 = smul.addr %s337, 8
      %s339 = scalar_lea.vmem %s0, %s338
      %p340 = pneg %p40
      %p341 = pneg %p37
      %p342 = scmp.lt.s32.totalorder %s19, 2
      %s343 = scalar_select %p342, %s19, 2
      %s344 = smul.addr %s343, 2
      %s345 = smul.addr %s344, 8
      %s346 = scalar_lea.vmem %s1, %s345
      %p347 = pneg %p66
      %p348 = pneg %p63
      %p349 = scmp.lt.s32.totalorder %s19, 2
      %s350 = scalar_select %p349, %s19, 2
      %s351 = smul.addr %s350, 4
      %s352 = smul.addr %s351, 8
      %s353 = scalar_lea.vmem %s2, %s352
      %p354 = pneg %p92
      %p355 = pneg %p89
      %p356 = scmp.lt.s32.totalorder %s19, 2
      %s357 = scalar_select %p356, %s19, 2
      %s358 = scalar_lea.vmem %s3, %s357
      %p359 = pneg %p118
      %p360 = pneg %p115
      %p361 = scmp.lt.s32.totalorder %s19, 2
      %s362 = scalar_select %p361, %s19, 2
      %s363 = smul.addr %s362, 4
      %s364 = smul.addr %s363, 8
      %s365 = scalar_lea.vmem %s4, %s364
      %p366 = pneg %p144
      %p367 = pneg %p141
      %p368 = scmp.lt.s32.totalorder %s19, 2
      %s369 = scalar_select %p368, %s19, 2
      %s370 = smul.addr %s369, 8
      %s371 = smul.addr %s370, 8
      %s372 = scalar_lea.vmem %s5, %s371
      %p373 = pneg %p170
      %p374 = pneg %p167
      %p375 = scmp.lt.s32.totalorder %s19, 2
      %s376 = scalar_select %p375, %s19, 2
      %s377 = smul.addr %s376, 12
      %s378 = smul.addr %s377, 8
      %s379 = scalar_lea.vmem %s6, %s378
      %p380 = pneg %p196
      %p381 = pneg %p193
      %p382 = scmp.lt.s32.totalorder %s19, 2
      %s383 = scalar_select %p382, %s19, 2
      %s384 = smul.addr %s383, 3
      %s385 = scalar_lea.vmem %s7, %s384
      %p386 = pneg %p222
      %p387 = pneg %p219
      %p388 = pneg %p248
      %p389 = pneg %p245
      %p390 = scmp.lt.s32.totalorder %s19, 2
      %s391 = scalar_select %p390, %s19, 2
      %s392 = smul.addr %s391, 4
      %s393 = smul.addr %s392, 8
      %s394 = scalar_lea.vmem %s8, %s393
      %p395 = scmp.lt.s32.totalorder %s19, 2
      %s396 = scalar_select %p395, %s19, 2
      %s397 = smul.addr %s396, 4
      %s398 = smul.addr %s397, 8
      %s399 = scalar_lea.vmem %s0, %s398
      %p400 = scmp.lt.s32.totalorder %s19, 2
      %s401 = scalar_select %p400, %s19, 2
      %s402 = smul.addr %s401, 2
      %s403 = smul.addr %s402, 8
      %s404 = scalar_lea.vmem %s1, %s403
      %p405 = scmp.lt.s32.totalorder %s19, 2
      %s406 = scalar_select %p405, %s19, 2
      %s407 = smul.addr %s406, 4
      %s408 = smul.addr %s407, 8
      %s409 = scalar_lea.vmem %s2, %s408
      %p410 = scmp.lt.s32.totalorder %s19, 2
      %s411 = scalar_select %p410, %s19, 2
      %s412 = scalar_lea.vmem %s3, %s411
      %p413 = scmp.lt.s32.totalorder %s19, 2
      %s414 = scalar_select %p413, %s19, 2
      %s415 = smul.addr %s414, 4
      %s416 = smul.addr %s415, 8
      %s417 = scalar_lea.vmem %s4, %s416
      %p418 = scmp.lt.s32.totalorder %s19, 2
      %s419 = scalar_select %p418, %s19, 2
      %s420 = smul.addr %s419, 8
      %s421 = smul.addr %s420, 8
      %s422 = scalar_lea.vmem %s5, %s421
      %p423 = scmp.lt.s32.totalorder %s19, 2
      %s424 = scalar_select %p423, %s19, 2
      %s425 = smul.addr %s424, 12
      %s426 = smul.addr %s425, 8
      %s427 = scalar_lea.vmem %s6, %s426
      %p428 = scmp.lt.s32.totalorder %s19, 2
      %s429 = scalar_select %p428, %s19, 2
      %s430 = smul.addr %s429, 3
      %s431 = scalar_lea.vmem %s7, %s430
      %p432 = scmp.lt.s32.totalorder %s19, 2
      %s433 = scalar_select %p432, %s19, 2
      %s434 = smul.addr %s433, 4
      %s435 = smul.addr %s434, 8
      %s436 = scalar_lea.vmem %s8, %s435
      %v437 = vld [vmem:[%s404] sm:$0xff]
      %v438 = vld [vmem:[%s404 + $0x8] sm:$0xf]
      %v439 = vld [vmem:[%s409] sm:$0xff]
      %v440 = vld [vmem:[%s409 + $0x8] sm:$0xff]
      %v441 = vld [vmem:[%s409 + $0x10] sm:$0xff]
      %v442 = vld [vmem:[%s409 + $0x18] sm:$0xff]
      %v443 = vld [vmem:[%s412] sm:$0x1]
      %v445 = vperm.slane %v443, 0
      %vm447 = vcmask 261120
      %v449 = vsel %vm447, %v437, 0
      %v452 = vsel %vm447, %v438, 0
      %454 = vmatpush.msra.mxu0 0.0
      %455 = vmatpush.msra.mxu0 0.0
      %456 = vmatpush.msra.mxu0 0.0
      %457 = vmatpush.msra.mxu0 0.0
      %458 = vmatpush.msra.mxu0 0.0
      %459 = vmatpush.msra.mxu0 0.0
      %460 = vmatpush.msra.mxu0 0.0
      %461 = vmatpush.msra.mxu0 0.0
      %462 = vmatpush.msra.mxu0 0.0
      %463 = vmatpush.msra.mxu0 0.0
      %464 = vmatpush.msra.mxu0 0.0
      %465 = vmatpush.msra.mxu0 0.0
      %466 = vmatpush.msra.mxu0 %v442
      %467 = vmatpush.msra.mxu0 %v441
      %468 = vmatpush.msra.mxu0 %v440
      %469 = vmatpush.msra.mxu0 %v439
      %470 = vmatmul.f32.gmra.mxu0 %v449
      %v471 = vpop.f32.mrf.mxu0
      %v472 = vadd.f32 %v445, %v471
      %473 = vmatmul.f32.gmra.mxu0 %v452
      %v474 = vpop.f32.mrf.mxu0
      %v475 = vadd.f32 %v445, %v474
      %476 = vdwg.mxu0
      %v477 = vld [vmem:[%s399] sm:$0xff]
      %v478 = vld [vmem:[%s399 + $0x8] sm:$0xff]
      %v479 = vld [vmem:[%s399 + $0x10] sm:$0xff]
      %v480 = vld [vmem:[%s399 + $0x18] sm:$0xff]
      %v481 = vld [vmem:[%s417] sm:$0xff]
      %v482 = vld [vmem:[%s417 + $0x8] sm:$0xff]
      %v483 = vld [vmem:[%s417 + $0x10] sm:$0xff]
      %v484 = vld [vmem:[%s417 + $0x18] sm:$0xff]
      %v485 = vld [vmem:[%s427] sm:$0xff]
      %v486 = vld [vmem:[%s427 + $0x8] sm:$0xff]
      %v487 = vld [vmem:[%s427 + $0x10] sm:$0xff]
      %v488 = vld [vmem:[%s427 + $0x18] sm:$0xff]
      %v489 = vld [vmem:[%s431] sm:$0x1]
      %v491 = vperm.slane %v489, 0
      %v494 = vsel %vm447, %v477, 0
      %v497 = vsel %vm447, %v478, 0
      %v500 = vsel %vm447, %v479, 0
      %v503 = vsel %vm447, %v480, 0
      %505 = vmatpush.msra.mxu0 0.0
      %506 = vmatpush.msra.mxu0 0.0
      %507 = vmatpush.msra.mxu0 0.0
      %508 = vmatpush.msra.mxu0 0.0
      %509 = vmatpush.msra.mxu0 0.0
      %510 = vmatpush.msra.mxu0 0.0
      %511 = vmatpush.msra.mxu0 0.0
      %512 = vmatpush.msra.mxu0 0.0
      %513 = vmatpush.msra.mxu0 0.0
      %514 = vmatpush.msra.mxu0 0.0
      %515 = vmatpush.msra.mxu0 0.0
      %516 = vmatpush.msra.mxu0 0.0
      %517 = vmatpush.msra.mxu0 %v484
      %518 = vmatpush.msra.mxu0 %v483
      %519 = vmatpush.msra.mxu0 %v482
      %520 = vmatpush.msra.mxu0 %v481
      %521 = vmatmul.f32.gmra.mxu0 %v494
      %v522 = vpop.f32.mrf.mxu0
      %v523 = vadd.f32 %v491, %v522
      %524 = vmatmul.f32.gmra.mxu0 %v497
      %v525 = vpop.f32.mrf.mxu0
      %v526 = vadd.f32 %v491, %v525
      %527 = vmatmul.f32.gmra.mxu0 %v500
      %v528 = vpop.f32.mrf.mxu0
      %v529 = vadd.f32 %v491, %v528
      %530 = vmatmul.f32.gmra.mxu0 %v503
      %v531 = vpop.f32.mrf.mxu0
      %v532 = vadd.f32 %v491, %v531
      %533 = vdwg.mxu0
      %v535 = vsel %vm447, %v472, 0
      %537 = vmatpush.msra.mxu0 0.0
      %538 = vmatpush.msra.mxu0 0.0
      %539 = vmatpush.msra.mxu0 0.0
      %540 = vmatpush.msra.mxu0 0.0
      %541 = vmatpush.msra.mxu0 0.0
      %542 = vmatpush.msra.mxu0 0.0
      %543 = vmatpush.msra.mxu0 0.0
      %544 = vmatpush.msra.mxu0 0.0
      %545 = vmatpush.msra.mxu0 0.0
      %546 = vmatpush.msra.mxu0 0.0
      %547 = vmatpush.msra.mxu0 0.0
      %548 = vmatpush.msra.mxu0 0.0
      %549 = vmatpush.msra.mxu0 %v488
      %550 = vmatpush.msra.mxu0 %v487
      %551 = vmatpush.msra.mxu0 %v486
      %552 = vmatpush.msra.mxu0 %v485
      %553 = vmatmul.f32.gmra.mxu0 %v535
      %v554 = vpop.f32.mrf.mxu0
      %v555 = vadd.f32 0.0, %v554
      %556 = vdwg.mxu0
      %v557 = vadd.f32 %v523, %v555
      %v558 = vxor.u32 %v557, 2147483648
      %v559 = vmul.f32 %v558, 1.442695
      %v560 = vpow.pop %v559
      %v561 = vadd.f32 %v560, 1.0
      %v562 = vrcp.pop %v561
      %v563 = vmul.f32 %v561, %v562
      %v564 = vsub.f32 1.0, %v563
      %v565 = vmul.f32 %v562, %v564
      %v566 = vadd.f32 %v562, %v565
      %vm567 = vweird.f32 %v561
      %vm568 = vweird.f32 %v562
      %vm569 = vmor %vm567, %vm568
      %v570 = vsel %vm569, %v562, %v566
      %v571 = vand.u32 2147483647, %v561
      %vm572 = vcmp.eq.f32.partialorder %v571, 8.507059e+37
      %v573 = vand.u32 %v561, 2147483648
      %v574 = vor.u32 1.1754944e-38, %v573
      %v575 = vsel %vm572, %v574, %v570
      %v576 = vmul.f32 1.0, %v575
      %v577 = vtanh.pop %v557
      %578 = vrot.lane.b32.xlu0 %v472, 32
      %v579 = vpop.permute.xlu0 %578
      %v581 = vmul.f32 %v576, %v579
      %583 = vrot.lane.b32.xlu0 %v577, 64
      %v584 = vpop.permute.xlu0 %583
      %v586 = vmul.f32 %v576, %v584
      %588 = vrot.lane.b32.xlu0 %v586, 32
      %v589 = vpop.permute.xlu0 %588
      %v591 = vadd.f32 %v581, %v589
      %v592 = vtanh.pop %v591
      %594 = vrot.lane.b32.xlu0 %v592, 64
      %v595 = vpop.permute.xlu0 %594
      %v597 = vmul.f32 %v576, %v595
      %599 = vrot.lane.b32.xlu0 %v597, 32
      %v600 = vpop.permute.xlu0 %599
      %vm602 = vcmask 257024
      %603 = vst.msk [vmem:[#allocation2] sm:$0xf] %vm602, %v600
      %v604 = vsel %vm447, %v600, 0
      %606 = vmatpush.msra.mxu0 0.0
      %607 = vmatpush.msra.mxu0 0.0
      %608 = vmatpush.msra.mxu0 0.0
      %609 = vmatpush.msra.mxu0 0.0
      %610 = vmatpush.msra.mxu0 0.0
      %611 = vmatpush.msra.mxu0 0.0
      %612 = vmatpush.msra.mxu0 0.0
      %613 = vmatpush.msra.mxu0 0.0
      %614 = vmatpush.msra.mxu0 0.0
      %615 = vmatpush.msra.mxu0 0.0
      %616 = vmatpush.msra.mxu0 0.0
      %617 = vmatpush.msra.mxu0 0.0
      %618 = vmatpush.msra.mxu0 %v488
      %619 = vmatpush.msra.mxu0 %v487
      %620 = vmatpush.msra.mxu0 %v486
      %621 = vmatpush.msra.mxu0 %v485
      %622 = vmatmul.f32.gmra.mxu0 %v604
      %v623 = vpop.f32.mrf.mxu0
      %v624 = vadd.f32 0.0, %v623
      %625 = vdwg.mxu0
      %v627 = vrot.slane %v624, 4
      %v629 = vadd.f32 %v523, %v627
      %v630 = vxor.u32 %v629, 2147483648
      %v631 = vmul.f32 %v630, 1.442695
      %v632 = vpow.pop %v631
      %v633 = vadd.f32 %v632, 1.0
      %v634 = vrcp.pop %v633
      %v635 = vmul.f32 %v633, %v634
      %v636 = vsub.f32 1.0, %v635
      %v637 = vmul.f32 %v634, %v636
      %v638 = vadd.f32 %v634, %v637
      %vm639 = vweird.f32 %v633
      %vm640 = vweird.f32 %v634
      %vm641 = vmor %vm639, %vm640
      %v642 = vsel %vm641, %v634, %v638
      %v643 = vand.u32 2147483647, %v633
      %vm644 = vcmp.eq.f32.partialorder %v643, 8.507059e+37
      %v645 = vand.u32 %v633, 2147483648
      %v646 = vor.u32 1.1754944e-38, %v645
      %v647 = vsel %vm644, %v646, %v642
      %v648 = vmul.f32 1.0, %v647
      %v649 = vtanh.pop %v629
      %v651 = vrot.slane %v591, 4
      %v653 = vmul.f32 %v648, %v651
      %655 = vrot.lane.b32.xlu0 %v649, 64
      %v656 = vpop.permute.xlu0 %655
      %v658 = vmul.f32 %v648, %v656
      %660 = vrot.lane.b32.xlu0 %v658, 32
      %v661 = vpop.permute.xlu0 %660
      %v663 = vadd.f32 %v653, %v661
      %v664 = vtanh.pop %v663
      %666 = vrot.lane.b32.xlu0 %v664, 64
      %v667 = vpop.permute.xlu0 %666
      %v669 = vmul.f32 %v648, %v667
      %671 = vrot.lane.b32.xlu0 %v669, 32
      %v672 = vpop.permute.xlu0 %671
      %vm674 = vcmask 261124
      %675 = vst.msk [vmem:[#allocation2] sm:$0xf0] %vm674, %v672
      %v676 = vrot.slane %v669, 4
      %677 = vrot.lane.b32.xlu0 %v676, 32
      %v678 = vpop.permute.xlu0 %677
      %v679 = vsel %vm447, %v678, 0
      %681 = vmatpush.msra.mxu0 0.0
      %682 = vmatpush.msra.mxu0 0.0
      %683 = vmatpush.msra.mxu0 0.0
      %684 = vmatpush.msra.mxu0 0.0
      %685 = vmatpush.msra.mxu0 0.0
      %686 = vmatpush.msra.mxu0 0.0
      %687 = vmatpush.msra.mxu0 0.0
      %688 = vmatpush.msra.mxu0 0.0
      %689 = vmatpush.msra.mxu0 0.0
      %690 = vmatpush.msra.mxu0 0.0
      %691 = vmatpush.msra.mxu0 0.0
      %692 = vmatpush.msra.mxu0 0.0
      %693 = vmatpush.msra.mxu0 %v488
      %694 = vmatpush.msra.mxu0 %v487
      %695 = vmatpush.msra.mxu0 %v486
      %696 = vmatpush.msra.mxu0 %v485
      %697 = vmatmul.f32.gmra.mxu0 %v679
      %v698 = vpop.f32.mrf.mxu0
      %v699 = vadd.f32 0.0, %v698
      %700 = vdwg.mxu0
      %v701 = vadd.f32 %v526, %v699
      %v702 = vxor.u32 %v701, 2147483648
      %v703 = vmul.f32 %v702, 1.442695
      %v704 = vpow.pop %v703
      %v705 = vadd.f32 %v704, 1.0
      %v706 = vrcp.pop %v705
      %v707 = vmul.f32 %v705, %v706
      %v708 = vsub.f32 1.0, %v707
      %v709 = vmul.f32 %v706, %v708
      %v710 = vadd.f32 %v706, %v709
      %vm711 = vweird.f32 %v705
      %vm712 = vweird.f32 %v706
      %vm713 = vmor %vm711, %vm712
      %v714 = vsel %vm713, %v706, %v710
      %v715 = vand.u32 2147483647, %v705
      %vm716 = vcmp.eq.f32.partialorder %v715, 8.507059e+37
      %v717 = vand.u32 %v705, 2147483648
      %v718 = vor.u32 1.1754944e-38, %v717
      %v719 = vsel %vm716, %v718, %v714
      %v720 = vmul.f32 1.0, %v719
      %v721 = vtanh.pop %v701
      %v723 = vrot.slane %v663, 4
      %v725 = vmul.f32 %v720, %v723
      %727 = vrot.lane.b32.xlu0 %v721, 64
      %v728 = vpop.permute.xlu0 %727
      %v730 = vmul.f32 %v720, %v728
      %732 = vrot.lane.b32.xlu0 %v730, 32
      %v733 = vpop.permute.xlu0 %732
      %v735 = vadd.f32 %v725, %v733
      %v736 = vtanh.pop %v735
      %738 = vrot.lane.b32.xlu0 %v736, 64
      %v739 = vpop.permute.xlu0 %738
      %v741 = vmul.f32 %v720, %v739
      %743 = vrot.lane.b32.xlu0 %v741, 32
      %v744 = vpop.permute.xlu0 %743
      %746 = vst.msk [vmem:[#allocation2 + $0x8] sm:$0xf] %vm602, %v744
      %v747 = vsel %vm447, %v744, 0
      %749 = vmatpush.msra.mxu0 0.0
      %750 = vmatpush.msra.mxu0 0.0
      %751 = vmatpush.msra.mxu0 0.0
      %752 = vmatpush.msra.mxu0 0.0
      %753 = vmatpush.msra.mxu0 0.0
      %754 = vmatpush.msra.mxu0 0.0
      %755 = vmatpush.msra.mxu0 0.0
      %756 = vmatpush.msra.mxu0 0.0
      %757 = vmatpush.msra.mxu0 0.0
      %758 = vmatpush.msra.mxu0 0.0
      %759 = vmatpush.msra.mxu0 0.0
      %760 = vmatpush.msra.mxu0 0.0
      %761 = vmatpush.msra.mxu0 %v488
      %762 = vmatpush.msra.mxu0 %v487
      %763 = vmatpush.msra.mxu0 %v486
      %764 = vmatpush.msra.mxu0 %v485
      %765 = vmatmul.f32.gmra.mxu0 %v747
      %v766 = vpop.f32.mrf.mxu0
      %v767 = vadd.f32 0.0, %v766
      %768 = vdwg.mxu0
      %v770 = vrot.slane %v767, 4
      %v772 = vadd.f32 %v526, %v770
      %v773 = vxor.u32 %v772, 2147483648
      %v774 = vmul.f32 %v773, 1.442695
      %v775 = vpow.pop %v774
      %v776 = vadd.f32 %v775, 1.0
      %v777 = vrcp.pop %v776
      %v778 = vmul.f32 %v776, %v777
      %v779 = vsub.f32 1.0, %v778
      %v780 = vmul.f32 %v777, %v779
      %v781 = vadd.f32 %v777, %v780
      %vm782 = vweird.f32 %v776
      %vm783 = vweird.f32 %v777
      %vm784 = vmor %vm782, %vm783
      %v785 = vsel %vm784, %v777, %v781
      %v786 = vand.u32 2147483647, %v776
      %vm787 = vcmp.eq.f32.partialorder %v786, 8.507059e+37
      %v788 = vand.u32 %v776, 2147483648
      %v789 = vor.u32 1.1754944e-38, %v788
      %v790 = vsel %vm787, %v789, %v785
      %v791 = vmul.f32 1.0, %v790
      %v792 = vtanh.pop %v772
      %v794 = vrot.slane %v735, 4
      %v796 = vmul.f32 %v791, %v794
      %798 = vrot.lane.b32.xlu0 %v792, 64
      %v799 = vpop.permute.xlu0 %798
      %v801 = vmul.f32 %v791, %v799
      %803 = vrot.lane.b32.xlu0 %v801, 32
      %v804 = vpop.permute.xlu0 %803
      %v806 = vadd.f32 %v796, %v804
      %v807 = vtanh.pop %v806
      %809 = vrot.lane.b32.xlu0 %v807, 64
      %v810 = vpop.permute.xlu0 %809
      %v812 = vmul.f32 %v791, %v810
      %814 = vrot.lane.b32.xlu0 %v812, 32
      %v815 = vpop.permute.xlu0 %814
      %817 = vst.msk [vmem:[#allocation2 + $0x8] sm:$0xf0] %vm674, %v815
      %v818 = vrot.slane %v812, 4
      %819 = vrot.lane.b32.xlu0 %v818, 32
      %v820 = vpop.permute.xlu0 %819
      %v821 = vsel %vm447, %v820, 0
      %823 = vmatpush.msra.mxu0 0.0
      %824 = vmatpush.msra.mxu0 0.0
      %825 = vmatpush.msra.mxu0 0.0
      %826 = vmatpush.msra.mxu0 0.0
      %827 = vmatpush.msra.mxu0 0.0
      %828 = vmatpush.msra.mxu0 0.0
      %829 = vmatpush.msra.mxu0 0.0
      %830 = vmatpush.msra.mxu0 0.0
      %831 = vmatpush.msra.mxu0 0.0
      %832 = vmatpush.msra.mxu0 0.0
      %833 = vmatpush.msra.mxu0 0.0
      %834 = vmatpush.msra.mxu0 0.0
      %835 = vmatpush.msra.mxu0 %v488
      %836 = vmatpush.msra.mxu0 %v487
      %837 = vmatpush.msra.mxu0 %v486
      %838 = vmatpush.msra.mxu0 %v485
      %839 = vmatmul.f32.gmra.mxu0 %v821
      %v840 = vpop.f32.mrf.mxu0
      %v841 = vadd.f32 0.0, %v840
      %842 = vdwg.mxu0
      %v843 = vadd.f32 %v529, %v841
      %v844 = vxor.u32 %v843, 2147483648
      %v845 = vmul.f32 %v844, 1.442695
      %v846 = vpow.pop %v845
      %v847 = vadd.f32 %v846, 1.0
      %v848 = vrcp.pop %v847
      %v849 = vmul.f32 %v847, %v848
      %v850 = vsub.f32 1.0, %v849
      %v851 = vmul.f32 %v848, %v850
      %v852 = vadd.f32 %v848, %v851
      %vm853 = vweird.f32 %v847
      %vm854 = vweird.f32 %v848
      %vm855 = vmor %vm853, %vm854
      %v856 = vsel %vm855, %v848, %v852
      %v857 = vand.u32 2147483647, %v847
      %vm858 = vcmp.eq.f32.partialorder %v857, 8.507059e+37
      %v859 = vand.u32 %v847, 2147483648
      %v860 = vor.u32 1.1754944e-38, %v859
      %v861 = vsel %vm858, %v860, %v856
      %v862 = vmul.f32 1.0, %v861
      %v863 = vtanh.pop %v843
      %v865 = vrot.slane %v806, 4
      %v867 = vmul.f32 %v862, %v865
      %869 = vrot.lane.b32.xlu0 %v863, 64
      %v870 = vpop.permute.xlu0 %869
      %v872 = vmul.f32 %v862, %v870
      %874 = vrot.lane.b32.xlu0 %v872, 32
      %v875 = vpop.permute.xlu0 %874
      %v877 = vadd.f32 %v867, %v875
      %v878 = vtanh.pop %v877
      %880 = vrot.lane.b32.xlu0 %v878, 64
      %v881 = vpop.permute.xlu0 %880
      %v883 = vmul.f32 %v862, %v881
      %885 = vrot.lane.b32.xlu0 %v883, 32
      %v886 = vpop.permute.xlu0 %885
      %888 = vst.msk [vmem:[#allocation2 + $0x10] sm:$0xf] %vm602, %v886
      %v889 = vsel %vm447, %v886, 0
      %891 = vmatpush.msra.mxu0 0.0
      %892 = vmatpush.msra.mxu0 0.0
      %893 = vmatpush.msra.mxu0 0.0
      %894 = vmatpush.msra.mxu0 0.0
      %895 = vmatpush.msra.mxu0 0.0
      %896 = vmatpush.msra.mxu0 0.0
      %897 = vmatpush.msra.mxu0 0.0
      %898 = vmatpush.msra.mxu0 0.0
      %899 = vmatpush.msra.mxu0 0.0
      %900 = vmatpush.msra.mxu0 0.0
      %901 = vmatpush.msra.mxu0 0.0
      %902 = vmatpush.msra.mxu0 0.0
      %903 = vmatpush.msra.mxu0 %v488
      %904 = vmatpush.msra.mxu0 %v487
      %905 = vmatpush.msra.mxu0 %v486
      %906 = vmatpush.msra.mxu0 %v485
      %907 = vmatmul.f32.gmra.mxu0 %v889
      %v908 = vpop.f32.mrf.mxu0
      %v909 = vadd.f32 0.0, %v908
      %910 = vdwg.mxu0
      %v912 = vrot.slane %v909, 4
      %v914 = vadd.f32 %v529, %v912
      %v915 = vxor.u32 %v914, 2147483648
      %v916 = vmul.f32 %v915, 1.442695
      %v917 = vpow.pop %v916
      %v918 = vadd.f32 %v917, 1.0
      %v919 = vrcp.pop %v918
      %v920 = vmul.f32 %v918, %v919
      %v921 = vsub.f32 1.0, %v920
      %v922 = vmul.f32 %v919, %v921
      %v923 = vadd.f32 %v919, %v922
      %vm924 = vweird.f32 %v918
      %vm925 = vweird.f32 %v919
      %vm926 = vmor %vm924, %vm925
      %v927 = vsel %vm926, %v919, %v923
      %v928 = vand.u32 2147483647, %v918
      %vm929 = vcmp.eq.f32.partialorder %v928, 8.507059e+37
      %v930 = vand.u32 %v918, 2147483648
      %v931 = vor.u32 1.1754944e-38, %v930
      %v932 = vsel %vm929, %v931, %v927
      %v933 = vmul.f32 1.0, %v932
      %v934 = vtanh.pop %v914
      %v936 = vrot.slane %v877, 4
      %v938 = vmul.f32 %v933, %v936
      %940 = vrot.lane.b32.xlu0 %v934, 64
      %v941 = vpop.permute.xlu0 %940
      %v943 = vmul.f32 %v933, %v941
      %945 = vrot.lane.b32.xlu0 %v943, 32
      %v946 = vpop.permute.xlu0 %945
      %v948 = vadd.f32 %v938, %v946
      %v949 = vtanh.pop %v948
      %951 = vrot.lane.b32.xlu0 %v949, 64
      %v952 = vpop.permute.xlu0 %951
      %v954 = vmul.f32 %v933, %v952
      %956 = vrot.lane.b32.xlu0 %v954, 32
      %v957 = vpop.permute.xlu0 %956
      %959 = vst.msk [vmem:[#allocation2 + $0x10] sm:$0xf0] %vm674, %v957
      %v960 = vrot.slane %v954, 4
      %961 = vrot.lane.b32.xlu0 %v960, 32
      %v962 = vpop.permute.xlu0 %961
      %v963 = vsel %vm447, %v962, 0
      %965 = vmatpush.msra.mxu0 0.0
      %966 = vmatpush.msra.mxu0 0.0
      %967 = vmatpush.msra.mxu0 0.0
      %968 = vmatpush.msra.mxu0 0.0
      %969 = vmatpush.msra.mxu0 0.0
      %970 = vmatpush.msra.mxu0 0.0
      %971 = vmatpush.msra.mxu0 0.0
      %972 = vmatpush.msra.mxu0 0.0
      %973 = vmatpush.msra.mxu0 0.0
      %974 = vmatpush.msra.mxu0 0.0
      %975 = vmatpush.msra.mxu0 0.0
      %976 = vmatpush.msra.mxu0 0.0
      %977 = vmatpush.msra.mxu0 %v488
      %978 = vmatpush.msra.mxu0 %v487
      %979 = vmatpush.msra.mxu0 %v486
      %980 = vmatpush.msra.mxu0 %v485
      %981 = vmatmul.f32.gmra.mxu0 %v963
      %v982 = vpop.f32.mrf.mxu0
      %v983 = vadd.f32 0.0, %v982
      %984 = vdwg.mxu0
      %v985 = vadd.f32 %v532, %v983
      %v986 = vxor.u32 %v985, 2147483648
      %v987 = vmul.f32 %v986, 1.442695
      %v988 = vpow.pop %v987
      %v989 = vadd.f32 %v988, 1.0
      %v990 = vrcp.pop %v989
      %v991 = vmul.f32 %v989, %v990
      %v992 = vsub.f32 1.0, %v991
      %v993 = vmul.f32 %v990, %v992
      %v994 = vadd.f32 %v990, %v993
      %vm995 = vweird.f32 %v989
      %vm996 = vweird.f32 %v990
      %vm997 = vmor %vm995, %vm996
      %v998 = vsel %vm997, %v990, %v994
      %v999 = vand.u32 2147483647, %v989
      %vm1000 = vcmp.eq.f32.partialorder %v999, 8.507059e+37
      %v1001 = vand.u32 %v989, 2147483648
      %v1002 = vor.u32 1.1754944e-38, %v1001
      %v1003 = vsel %vm1000, %v1002, %v998
      %v1004 = vmul.f32 1.0, %v1003
      %v1005 = vtanh.pop %v985
      %v1007 = vrot.slane %v948, 4
      %v1009 = vmul.f32 %v1004, %v1007
      %1011 = vrot.lane.b32.xlu0 %v1005, 64
      %v1012 = vpop.permute.xlu0 %1011
      %v1014 = vmul.f32 %v1004, %v1012
      %1016 = vrot.lane.b32.xlu0 %v1014, 32
      %v1017 = vpop.permute.xlu0 %1016
      %v1019 = vadd.f32 %v1009, %v1017
      %v1020 = vtanh.pop %v1019
      %1022 = vrot.lane.b32.xlu0 %v1020, 64
      %v1023 = vpop.permute.xlu0 %1022
      %v1025 = vmul.f32 %v1004, %v1023
      %1027 = vrot.lane.b32.xlu0 %v1025, 32
      %v1028 = vpop.permute.xlu0 %1027
      %1030 = vst.msk [vmem:[#allocation2 + $0x18] sm:$0xf] %vm602, %v1028
      %v1031 = vsel %vm447, %v1028, 0
      %1033 = vmatpush.msra.mxu0 0.0
      %1034 = vmatpush.msra.mxu0 0.0
      %1035 = vmatpush.msra.mxu0 0.0
      %1036 = vmatpush.msra.mxu0 0.0
      %1037 = vmatpush.msra.mxu0 0.0
      %1038 = vmatpush.msra.mxu0 0.0
      %1039 = vmatpush.msra.mxu0 0.0
      %1040 = vmatpush.msra.mxu0 0.0
      %1041 = vmatpush.msra.mxu0 0.0
      %1042 = vmatpush.msra.mxu0 0.0
      %1043 = vmatpush.msra.mxu0 0.0
      %1044 = vmatpush.msra.mxu0 0.0
      %1045 = vmatpush.msra.mxu0 %v488
      %1046 = vmatpush.msra.mxu0 %v487
      %1047 = vmatpush.msra.mxu0 %v486
      %1048 = vmatpush.msra.mxu0 %v485
      %1049 = vmatmul.f32.gmra.mxu0 %v1031
      %v1050 = vpop.f32.mrf.mxu0
      %v1051 = vadd.f32 0.0, %v1050
      %1052 = vdwg.mxu0
      %v1054 = vrot.slane %v1051, 4
      %v1056 = vadd.f32 %v532, %v1054
      %v1057 = vxor.u32 %v1056, 2147483648
      %v1058 = vmul.f32 %v1057, 1.442695
      %v1059 = vpow.pop %v1058
      %v1060 = vadd.f32 %v1059, 1.0
      %v1061 = vrcp.pop %v1060
      %v1062 = vmul.f32 %v1060, %v1061
      %v1063 = vsub.f32 1.0, %v1062
      %v1064 = vmul.f32 %v1061, %v1063
      %v1065 = vadd.f32 %v1061, %v1064
      %vm1066 = vweird.f32 %v1060
      %vm1067 = vweird.f32 %v1061
      %vm1068 = vmor %vm1066, %vm1067
      %v1069 = vsel %vm1068, %v1061, %v1065
      %v1070 = vand.u32 2147483647, %v1060
      %vm1071 = vcmp.eq.f32.partialorder %v1070, 8.507059e+37
      %v1072 = vand.u32 %v1060, 2147483648
      %v1073 = vor.u32 1.1754944e-38, %v1072
      %v1074 = vsel %vm1071, %v1073, %v1069
      %v1075 = vmul.f32 1.0, %v1074
      %v1076 = vtanh.pop %v1056
      %v1078 = vrot.slane %v1019, 4
      %v1080 = vmul.f32 %v1075, %v1078
      %1082 = vrot.lane.b32.xlu0 %v1076, 64
      %v1083 = vpop.permute.xlu0 %1082
      %v1085 = vmul.f32 %v1075, %v1083
      %1087 = vrot.lane.b32.xlu0 %v1085, 32
      %v1088 = vpop.permute.xlu0 %1087
      %v1090 = vadd.f32 %v1080, %v1088
      %v1091 = vtanh.pop %v1090
      %1093 = vrot.lane.b32.xlu0 %v1091, 64
      %v1094 = vpop.permute.xlu0 %1093
      %v1096 = vmul.f32 %v1075, %v1094
      %1098 = vrot.lane.b32.xlu0 %v1096, 32
      %v1099 = vpop.permute.xlu0 %1098
      %1101 = vst.msk [vmem:[#allocation2 + $0x18] sm:$0xf0] %vm674, %v1099
      %v1102 = vld [vmem:[#allocation2] sm:$0xff]
      %v1103 = vld [vmem:[#allocation2 + $0x8] sm:$0xff]
      %v1104 = vld [vmem:[#allocation2 + $0x10] sm:$0xff]
      %v1105 = vld [vmem:[#allocation2 + $0x18] sm:$0xff]
      %v1106 = vld [vmem:[%s422] sm:$0xff]
      %v1107 = vld [vmem:[%s422 + $0x8] sm:$0xff]
      %v1108 = vld [vmem:[%s422 + $0x10] sm:$0xff]
      %v1109 = vld [vmem:[%s422 + $0x18] sm:$0xff]
      %s1110 = scalar_lea.vmem %s427, 32
      %v1111 = vld [vmem:[%s1110] sm:$0xff]
      %v1112 = vld [vmem:[%s1110 + $0x8] sm:$0xff]
      %v1113 = vld [vmem:[%s1110 + $0x10] sm:$0xff]
      %v1114 = vld [vmem:[%s1110 + $0x18] sm:$0xff]
      %s1115 = scalar_lea.vmem %s431, 1
      %v1116 = vld [vmem:[%s1115] sm:$0x1]
      %v1118 = vperm.slane %v1116, 0
      %v1121 = vsel %vm447, %v1102, 0
      %v1124 = vsel %vm447, %v1103, 0
      %v1127 = vsel %vm447, %v1104, 0
      %v1130 = vsel %vm447, %v1105, 0
      %1132 = vmatpush.msra.mxu0 0.0
      %1133 = vmatpush.msra.mxu0 0.0
      %1134 = vmatpush.msra.mxu0 0.0
      %1135 = vmatpush.msra.mxu0 0.0
      %1136 = vmatpush.msra.mxu0 0.0
      %1137 = vmatpush.msra.mxu0 0.0
      %1138 = vmatpush.msra.mxu0 0.0
      %1139 = vmatpush.msra.mxu0 0.0
      %1140 = vmatpush.msra.mxu0 0.0
      %1141 = vmatpush.msra.mxu0 0.0
      %1142 = vmatpush.msra.mxu0 0.0
      %1143 = vmatpush.msra.mxu0 0.0
      %1144 = vmatpush.msra.mxu0 %v1109
      %1145 = vmatpush.msra.mxu0 %v1108
      %1146 = vmatpush.msra.mxu0 %v1107
      %1147 = vmatpush.msra.mxu0 %v1106
      %1148 = vmatmul.f32.gmra.mxu0 %v1121
      %v1149 = vpop.f32.mrf.mxu0
      %v1150 = vadd.f32 %v1118, %v1149
      %1151 = vmatmul.f32.gmra.mxu0 %v1124
      %v1152 = vpop.f32.mrf.mxu0
      %v1153 = vadd.f32 %v1118, %v1152
      %1154 = vmatmul.f32.gmra.mxu0 %v1127
      %v1155 = vpop.f32.mrf.mxu0
      %v1156 = vadd.f32 %v1118, %v1155
      %1157 = vmatmul.f32.gmra.mxu0 %v1130
      %v1158 = vpop.f32.mrf.mxu0
      %v1159 = vadd.f32 %v1118, %v1158
      %1160 = vdwg.mxu0
      %v1161 = vrot.slane %v472, 4
      %v1162 = vsel %vm447, %v1161, 0
      %1164 = vmatpush.msra.mxu0 0.0
      %1165 = vmatpush.msra.mxu0 0.0
      %1166 = vmatpush.msra.mxu0 0.0
      %1167 = vmatpush.msra.mxu0 0.0
      %1168 = vmatpush.msra.mxu0 0.0
      %1169 = vmatpush.msra.mxu0 0.0
      %1170 = vmatpush.msra.mxu0 0.0
      %1171 = vmatpush.msra.mxu0 0.0
      %1172 = vmatpush.msra.mxu0 0.0
      %1173 = vmatpush.msra.mxu0 0.0
      %1174 = vmatpush.msra.mxu0 0.0
      %1175 = vmatpush.msra.mxu0 0.0
      %1176 = vmatpush.msra.mxu0 %v1114
      %1177 = vmatpush.msra.mxu0 %v1113
      %1178 = vmatpush.msra.mxu0 %v1112
      %1179 = vmatpush.msra.mxu0 %v1111
      %1180 = vmatmul.f32.gmra.mxu0 %v1162
      %v1181 = vpop.f32.mrf.mxu0
      %v1182 = vadd.f32 0.0, %v1181
      %1183 = vdwg.mxu0
      %v1184 = vadd.f32 %v1150, %v1182
      %v1185 = vxor.u32 %v1184, 2147483648
      %v1186 = vmul.f32 %v1185, 1.442695
      %v1187 = vpow.pop %v1186
      %v1188 = vadd.f32 %v1187, 1.0
      %v1189 = vrcp.pop %v1188
      %v1190 = vmul.f32 %v1188, %v1189
      %v1191 = vsub.f32 1.0, %v1190
      %v1192 = vmul.f32 %v1189, %v1191
      %v1193 = vadd.f32 %v1189, %v1192
      %vm1194 = vweird.f32 %v1188
      %vm1195 = vweird.f32 %v1189
      %vm1196 = vmor %vm1194, %vm1195
      %v1197 = vsel %vm1196, %v1189, %v1193
      %v1198 = vand.u32 2147483647, %v1188
      %vm1199 = vcmp.eq.f32.partialorder %v1198, 8.507059e+37
      %v1200 = vand.u32 %v1188, 2147483648
      %v1201 = vor.u32 1.1754944e-38, %v1200
      %v1202 = vsel %vm1199, %v1201, %v1197
      %v1203 = vmul.f32 1.0, %v1202
      %v1204 = vtanh.pop %v1184
      %1205 = vrot.lane.b32.xlu0 %v1161, 32
      %v1206 = vpop.permute.xlu0 %1205
      %v1208 = vmul.f32 %v1203, %v1206
      %1210 = vrot.lane.b32.xlu0 %v1204, 64
      %v1211 = vpop.permute.xlu0 %1210
      %v1213 = vmul.f32 %v1203, %v1211
      %1215 = vrot.lane.b32.xlu0 %v1213, 32
      %v1216 = vpop.permute.xlu0 %1215
      %v1218 = vadd.f32 %v1208, %v1216
      %v1219 = vtanh.pop %v1218
      %1221 = vrot.lane.b32.xlu0 %v1219, 64
      %v1222 = vpop.permute.xlu0 %1221
      %v1224 = vmul.f32 %v1203, %v1222
      %1226 = vrot.lane.b32.xlu0 %v1224, 32
      %v1227 = vpop.permute.xlu0 %1226
      %1229 = vst.msk [vmem:[#allocation2] sm:$0xf] %vm602, %v1227
      %v1230 = vsel %vm447, %v1227, 0
      %1232 = vmatpush.msra.mxu0 0.0
      %1233 = vmatpush.msra.mxu0 0.0
      %1234 = vmatpush.msra.mxu0 0.0
      %1235 = vmatpush.msra.mxu0 0.0
      %1236 = vmatpush.msra.mxu0 0.0
      %1237 = vmatpush.msra.mxu0 0.0
      %1238 = vmatpush.msra.mxu0 0.0
      %1239 = vmatpush.msra.mxu0 0.0
      %1240 = vmatpush.msra.mxu0 0.0
      %1241 = vmatpush.msra.mxu0 0.0
      %1242 = vmatpush.msra.mxu0 0.0
      %1243 = vmatpush.msra.mxu0 0.0
      %1244 = vmatpush.msra.mxu0 %v1114
      %1245 = vmatpush.msra.mxu0 %v1113
      %1246 = vmatpush.msra.mxu0 %v1112
      %1247 = vmatpush.msra.mxu0 %v1111
      %1248 = vmatmul.f32.gmra.mxu0 %v1230
      %v1249 = vpop.f32.mrf.mxu0
      %v1250 = vadd.f32 0.0, %v1249
      %1251 = vdwg.mxu0
      %v1253 = vrot.slane %v1250, 4
      %v1255 = vadd.f32 %v1150, %v1253
      %v1256 = vxor.u32 %v1255, 2147483648
      %v1257 = vmul.f32 %v1256, 1.442695
      %v1258 = vpow.pop %v1257
      %v1259 = vadd.f32 %v1258, 1.0
      %v1260 = vrcp.pop %v1259
      %v1261 = vmul.f32 %v1259, %v1260
      %v1262 = vsub.f32 1.0, %v1261
      %v1263 = vmul.f32 %v1260, %v1262
      %v1264 = vadd.f32 %v1260, %v1263
      %vm1265 = vweird.f32 %v1259
      %vm1266 = vweird.f32 %v1260
      %vm1267 = vmor %vm1265, %vm1266
      %v1268 = vsel %vm1267, %v1260, %v1264
      %v1269 = vand.u32 2147483647, %v1259
      %vm1270 = vcmp.eq.f32.partialorder %v1269, 8.507059e+37
      %v1271 = vand.u32 %v1259, 2147483648
      %v1272 = vor.u32 1.1754944e-38, %v1271
      %v1273 = vsel %vm1270, %v1272, %v1268
      %v1274 = vmul.f32 1.0, %v1273
      %v1275 = vtanh.pop %v1255
      %v1277 = vrot.slane %v1218, 4
      %v1279 = vmul.f32 %v1274, %v1277
      %1281 = vrot.lane.b32.xlu0 %v1275, 64
      %v1282 = vpop.permute.xlu0 %1281
      %v1284 = vmul.f32 %v1274, %v1282
      %1286 = vrot.lane.b32.xlu0 %v1284, 32
      %v1287 = vpop.permute.xlu0 %1286
      %v1289 = vadd.f32 %v1279, %v1287
      %v1290 = vtanh.pop %v1289
      %1292 = vrot.lane.b32.xlu0 %v1290, 64
      %v1293 = vpop.permute.xlu0 %1292
      %v1295 = vmul.f32 %v1274, %v1293
      %1297 = vrot.lane.b32.xlu0 %v1295, 32
      %v1298 = vpop.permute.xlu0 %1297
      %1300 = vst.msk [vmem:[#allocation2] sm:$0xf0] %vm674, %v1298
      %v1301 = vrot.slane %v1295, 4
      %1302 = vrot.lane.b32.xlu0 %v1301, 32
      %v1303 = vpop.permute.xlu0 %1302
      %v1304 = vsel %vm447, %v1303, 0
      %1306 = vmatpush.msra.mxu0 0.0
      %1307 = vmatpush.msra.mxu0 0.0
      %1308 = vmatpush.msra.mxu0 0.0
      %1309 = vmatpush.msra.mxu0 0.0
      %1310 = vmatpush.msra.mxu0 0.0
      %1311 = vmatpush.msra.mxu0 0.0
      %1312 = vmatpush.msra.mxu0 0.0
      %1313 = vmatpush.msra.mxu0 0.0
      %1314 = vmatpush.msra.mxu0 0.0
      %1315 = vmatpush.msra.mxu0 0.0
      %1316 = vmatpush.msra.mxu0 0.0
      %1317 = vmatpush.msra.mxu0 0.0
      %1318 = vmatpush.msra.mxu0 %v1114
      %1319 = vmatpush.msra.mxu0 %v1113
      %1320 = vmatpush.msra.mxu0 %v1112
      %1321 = vmatpush.msra.mxu0 %v1111
      %1322 = vmatmul.f32.gmra.mxu0 %v1304
      %v1323 = vpop.f32.mrf.mxu0
      %v1324 = vadd.f32 0.0, %v1323
      %1325 = vdwg.mxu0
      %v1326 = vadd.f32 %v1153, %v1324
      %v1327 = vxor.u32 %v1326, 2147483648
      %v1328 = vmul.f32 %v1327, 1.442695
      %v1329 = vpow.pop %v1328
      %v1330 = vadd.f32 %v1329, 1.0
      %v1331 = vrcp.pop %v1330
      %v1332 = vmul.f32 %v1330, %v1331
      %v1333 = vsub.f32 1.0, %v1332
      %v1334 = vmul.f32 %v1331, %v1333
      %v1335 = vadd.f32 %v1331, %v1334
      %vm1336 = vweird.f32 %v1330
      %vm1337 = vweird.f32 %v1331
      %vm1338 = vmor %vm1336, %vm1337
      %v1339 = vsel %vm1338, %v1331, %v1335
      %v1340 = vand.u32 2147483647, %v1330
      %vm1341 = vcmp.eq.f32.partialorder %v1340, 8.507059e+37
      %v1342 = vand.u32 %v1330, 2147483648
      %v1343 = vor.u32 1.1754944e-38, %v1342
      %v1344 = vsel %vm1341, %v1343, %v1339
      %v1345 = vmul.f32 1.0, %v1344
      %v1346 = vtanh.pop %v1326
      %v1348 = vrot.slane %v1289, 4
      %v1350 = vmul.f32 %v1345, %v1348
      %1352 = vrot.lane.b32.xlu0 %v1346, 64
      %v1353 = vpop.permute.xlu0 %1352
      %v1355 = vmul.f32 %v1345, %v1353
      %1357 = vrot.lane.b32.xlu0 %v1355, 32
      %v1358 = vpop.permute.xlu0 %1357
      %v1360 = vadd.f32 %v1350, %v1358
      %v1361 = vtanh.pop %v1360
      %1363 = vrot.lane.b32.xlu0 %v1361, 64
      %v1364 = vpop.permute.xlu0 %1363
      %v1366 = vmul.f32 %v1345, %v1364
      %1368 = vrot.lane.b32.xlu0 %v1366, 32
      %v1369 = vpop.permute.xlu0 %1368
      %1371 = vst.msk [vmem:[#allocation2 + $0x8] sm:$0xf] %vm602, %v1369
      %v1372 = vsel %vm447, %v1369, 0
      %1374 = vmatpush.msra.mxu0 0.0
      %1375 = vmatpush.msra.mxu0 0.0
      %1376 = vmatpush.msra.mxu0 0.0
      %1377 = vmatpush.msra.mxu0 0.0
      %1378 = vmatpush.msra.mxu0 0.0
      %1379 = vmatpush.msra.mxu0 0.0
      %1380 = vmatpush.msra.mxu0 0.0
      %1381 = vmatpush.msra.mxu0 0.0
      %1382 = vmatpush.msra.mxu0 0.0
      %1383 = vmatpush.msra.mxu0 0.0
      %1384 = vmatpush.msra.mxu0 0.0
      %1385 = vmatpush.msra.mxu0 0.0
      %1386 = vmatpush.msra.mxu0 %v1114
      %1387 = vmatpush.msra.mxu0 %v1113
      %1388 = vmatpush.msra.mxu0 %v1112
      %1389 = vmatpush.msra.mxu0 %v1111
      %1390 = vmatmul.f32.gmra.mxu0 %v1372
      %v1391 = vpop.f32.mrf.mxu0
      %v1392 = vadd.f32 0.0, %v1391
      %1393 = vdwg.mxu0
      %v1395 = vrot.slane %v1392, 4
      %v1397 = vadd.f32 %v1153, %v1395
      %v1398 = vxor.u32 %v1397, 2147483648
      %v1399 = vmul.f32 %v1398, 1.442695
      %v1400 = vpow.pop %v1399
      %v1401 = vadd.f32 %v1400, 1.0
      %v1402 = vrcp.pop %v1401
      %v1403 = vmul.f32 %v1401, %v1402
      %v1404 = vsub.f32 1.0, %v1403
      %v1405 = vmul.f32 %v1402, %v1404
      %v1406 = vadd.f32 %v1402, %v1405
      %vm1407 = vweird.f32 %v1401
      %vm1408 = vweird.f32 %v1402
      %vm1409 = vmor %vm1407, %vm1408
      %v1410 = vsel %vm1409, %v1402, %v1406
      %v1411 = vand.u32 2147483647, %v1401
      %vm1412 = vcmp.eq.f32.partialorder %v1411, 8.507059e+37
      %v1413 = vand.u32 %v1401, 2147483648
      %v1414 = vor.u32 1.1754944e-38, %v1413
      %v1415 = vsel %vm1412, %v1414, %v1410
      %v1416 = vmul.f32 1.0, %v1415
      %v1417 = vtanh.pop %v1397
      %v1419 = vrot.slane %v1360, 4
      %v1421 = vmul.f32 %v1416, %v1419
      %1423 = vrot.lane.b32.xlu0 %v1417, 64
      %v1424 = vpop.permute.xlu0 %1423
      %v1426 = vmul.f32 %v1416, %v1424
      %1428 = vrot.lane.b32.xlu0 %v1426, 32
      %v1429 = vpop.permute.xlu0 %1428
      %v1431 = vadd.f32 %v1421, %v1429
      %v1432 = vtanh.pop %v1431
      %1434 = vrot.lane.b32.xlu0 %v1432, 64
      %v1435 = vpop.permute.xlu0 %1434
      %v1437 = vmul.f32 %v1416, %v1435
      %1439 = vrot.lane.b32.xlu0 %v1437, 32
      %v1440 = vpop.permute.xlu0 %1439
      %1442 = vst.msk [vmem:[#allocation2 + $0x8] sm:$0xf0] %vm674, %v1440
      %v1443 = vrot.slane %v1437, 4
      %1444 = vrot.lane.b32.xlu0 %v1443, 32
      %v1445 = vpop.permute.xlu0 %1444
      %v1446 = vsel %vm447, %v1445, 0
      %1448 = vmatpush.msra.mxu0 0.0
      %1449 = vmatpush.msra.mxu0 0.0
      %1450 = vmatpush.msra.mxu0 0.0
      %1451 = vmatpush.msra.mxu0 0.0
      %1452 = vmatpush.msra.mxu0 0.0
      %1453 = vmatpush.msra.mxu0 0.0
      %1454 = vmatpush.msra.mxu0 0.0
      %1455 = vmatpush.msra.mxu0 0.0
      %1456 = vmatpush.msra.mxu0 0.0
      %1457 = vmatpush.msra.mxu0 0.0
      %1458 = vmatpush.msra.mxu0 0.0
      %1459 = vmatpush.msra.mxu0 0.0
      %1460 = vmatpush.msra.mxu0 %v1114
      %1461 = vmatpush.msra.mxu0 %v1113
      %1462 = vmatpush.msra.mxu0 %v1112
      %1463 = vmatpush.msra.mxu0 %v1111
      %1464 = vmatmul.f32.gmra.mxu0 %v1446
      %v1465 = vpop.f32.mrf.mxu0
      %v1466 = vadd.f32 0.0, %v1465
      %1467 = vdwg.mxu0
      %v1468 = vadd.f32 %v1156, %v1466
      %v1469 = vxor.u32 %v1468, 2147483648
      %v1470 = vmul.f32 %v1469, 1.442695
      %v1471 = vpow.pop %v1470
      %v1472 = vadd.f32 %v1471, 1.0
      %v1473 = vrcp.pop %v1472
      %v1474 = vmul.f32 %v1472, %v1473
      %v1475 = vsub.f32 1.0, %v1474
      %v1476 = vmul.f32 %v1473, %v1475
      %v1477 = vadd.f32 %v1473, %v1476
      %vm1478 = vweird.f32 %v1472
      %vm1479 = vweird.f32 %v1473
      %vm1480 = vmor %vm1478, %vm1479
      %v1481 = vsel %vm1480, %v1473, %v1477
      %v1482 = vand.u32 2147483647, %v1472
      %vm1483 = vcmp.eq.f32.partialorder %v1482, 8.507059e+37
      %v1484 = vand.u32 %v1472, 2147483648
      %v1485 = vor.u32 1.1754944e-38, %v1484
      %v1486 = vsel %vm1483, %v1485, %v1481
      %v1487 = vmul.f32 1.0, %v1486
      %v1488 = vtanh.pop %v1468
      %v1490 = vrot.slane %v1431, 4
      %v1492 = vmul.f32 %v1487, %v1490
      %1494 = vrot.lane.b32.xlu0 %v1488, 64
      %v1495 = vpop.permute.xlu0 %1494
      %v1497 = vmul.f32 %v1487, %v1495
      %1499 = vrot.lane.b32.xlu0 %v1497, 32
      %v1500 = vpop.permute.xlu0 %1499
      %v1502 = vadd.f32 %v1492, %v1500
      %v1503 = vtanh.pop %v1502
      %1505 = vrot.lane.b32.xlu0 %v1503, 64
      %v1506 = vpop.permute.xlu0 %1505
      %v1508 = vmul.f32 %v1487, %v1506
      %1510 = vrot.lane.b32.xlu0 %v1508, 32
      %v1511 = vpop.permute.xlu0 %1510
      %1513 = vst.msk [vmem:[#allocation2 + $0x10] sm:$0xf] %vm602, %v1511
      %v1514 = vsel %vm447, %v1511, 0
      %1516 = vmatpush.msra.mxu0 0.0
      %1517 = vmatpush.msra.mxu0 0.0
      %1518 = vmatpush.msra.mxu0 0.0
      %1519 = vmatpush.msra.mxu0 0.0
      %1520 = vmatpush.msra.mxu0 0.0
      %1521 = vmatpush.msra.mxu0 0.0
      %1522 = vmatpush.msra.mxu0 0.0
      %1523 = vmatpush.msra.mxu0 0.0
      %1524 = vmatpush.msra.mxu0 0.0
      %1525 = vmatpush.msra.mxu0 0.0
      %1526 = vmatpush.msra.mxu0 0.0
      %1527 = vmatpush.msra.mxu0 0.0
      %1528 = vmatpush.msra.mxu0 %v1114
      %1529 = vmatpush.msra.mxu0 %v1113
      %1530 = vmatpush.msra.mxu0 %v1112
      %1531 = vmatpush.msra.mxu0 %v1111
      %1532 = vmatmul.f32.gmra.mxu0 %v1514
      %v1533 = vpop.f32.mrf.mxu0
      %v1534 = vadd.f32 0.0, %v1533
      %1535 = vdwg.mxu0
      %v1537 = vrot.slane %v1534, 4
      %v1539 = vadd.f32 %v1156, %v1537
      %v1540 = vxor.u32 %v1539, 2147483648
      %v1541 = vmul.f32 %v1540, 1.442695
      %v1542 = vpow.pop %v1541
      %v1543 = vadd.f32 %v1542, 1.0
      %v1544 = vrcp.pop %v1543
      %v1545 = vmul.f32 %v1543, %v1544
      %v1546 = vsub.f32 1.0, %v1545
      %v1547 = vmul.f32 %v1544, %v1546
      %v1548 = vadd.f32 %v1544, %v1547
      %vm1549 = vweird.f32 %v1543
      %vm1550 = vweird.f32 %v1544
      %vm1551 = vmor %vm1549, %vm1550
      %v1552 = vsel %vm1551, %v1544, %v1548
      %v1553 = vand.u32 2147483647, %v1543
      %vm1554 = vcmp.eq.f32.partialorder %v1553, 8.507059e+37
      %v1555 = vand.u32 %v1543, 2147483648
      %v1556 = vor.u32 1.1754944e-38, %v1555
      %v1557 = vsel %vm1554, %v1556, %v1552
      %v1558 = vmul.f32 1.0, %v1557
      %v1559 = vtanh.pop %v1539
      %v1561 = vrot.slane %v1502, 4
      %v1563 = vmul.f32 %v1558, %v1561
      %1565 = vrot.lane.b32.xlu0 %v1559, 64
      %v1566 = vpop.permute.xlu0 %1565
      %v1568 = vmul.f32 %v1558, %v1566
      %1570 = vrot.lane.b32.xlu0 %v1568, 32
      %v1571 = vpop.permute.xlu0 %1570
      %v1573 = vadd.f32 %v1563, %v1571
      %v1574 = vtanh.pop %v1573
      %1576 = vrot.lane.b32.xlu0 %v1574, 64
      %v1577 = vpop.permute.xlu0 %1576
      %v1579 = vmul.f32 %v1558, %v1577
      %1581 = vrot.lane.b32.xlu0 %v1579, 32
      %v1582 = vpop.permute.xlu0 %1581
      %1584 = vst.msk [vmem:[#allocation2 + $0x10] sm:$0xf0] %vm674, %v1582
      %v1585 = vrot.slane %v1579, 4
      %1586 = vrot.lane.b32.xlu0 %v1585, 32
      %v1587 = vpop.permute.xlu0 %1586
      %v1588 = vsel %vm447, %v1587, 0
      %1590 = vmatpush.msra.mxu0 0.0
      %1591 = vmatpush.msra.mxu0 0.0
      %1592 = vmatpush.msra.mxu0 0.0
      %1593 = vmatpush.msra.mxu0 0.0
      %1594 = vmatpush.msra.mxu0 0.0
      %1595 = vmatpush.msra.mxu0 0.0
      %1596 = vmatpush.msra.mxu0 0.0
      %1597 = vmatpush.msra.mxu0 0.0
      %1598 = vmatpush.msra.mxu0 0.0
      %1599 = vmatpush.msra.mxu0 0.0
      %1600 = vmatpush.msra.mxu0 0.0
      %1601 = vmatpush.msra.mxu0 0.0
      %1602 = vmatpush.msra.mxu0 %v1114
      %1603 = vmatpush.msra.mxu0 %v1113
      %1604 = vmatpush.msra.mxu0 %v1112
      %1605 = vmatpush.msra.mxu0 %v1111
      %1606 = vmatmul.f32.gmra.mxu0 %v1588
      %v1607 = vpop.f32.mrf.mxu0
      %v1608 = vadd.f32 0.0, %v1607
      %1609 = vdwg.mxu0
      %v1610 = vadd.f32 %v1159, %v1608
      %v1611 = vxor.u32 %v1610, 2147483648
      %v1612 = vmul.f32 %v1611, 1.442695
      %v1613 = vpow.pop %v1612
      %v1614 = vadd.f32 %v1613, 1.0
      %v1615 = vrcp.pop %v1614
      %v1616 = vmul.f32 %v1614, %v1615
      %v1617 = vsub.f32 1.0, %v1616
      %v1618 = vmul.f32 %v1615, %v1617
      %v1619 = vadd.f32 %v1615, %v1618
      %vm1620 = vweird.f32 %v1614
      %vm1621 = vweird.f32 %v1615
      %vm1622 = vmor %vm1620, %vm1621
      %v1623 = vsel %vm1622, %v1615, %v1619
      %v1624 = vand.u32 2147483647, %v1614
      %vm1625 = vcmp.eq.f32.partialorder %v1624, 8.507059e+37
      %v1626 = vand.u32 %v1614, 2147483648
      %v1627 = vor.u32 1.1754944e-38, %v1626
      %v1628 = vsel %vm1625, %v1627, %v1623
      %v1629 = vmul.f32 1.0, %v1628
      %v1630 = vtanh.pop %v1610
      %v1632 = vrot.slane %v1573, 4
      %v1634 = vmul.f32 %v1629, %v1632
      %1636 = vrot.lane.b32.xlu0 %v1630, 64
      %v1637 = vpop.permute.xlu0 %1636
      %v1639 = vmul.f32 %v1629, %v1637
      %1641 = vrot.lane.b32.xlu0 %v1639, 32
      %v1642 = vpop.permute.xlu0 %1641
      %v1644 = vadd.f32 %v1634, %v1642
      %v1645 = vtanh.pop %v1644
      %1647 = vrot.lane.b32.xlu0 %v1645, 64
      %v1648 = vpop.permute.xlu0 %1647
      %v1650 = vmul.f32 %v1629, %v1648
      %1652 = vrot.lane.b32.xlu0 %v1650, 32
      %v1653 = vpop.permute.xlu0 %1652
      %1655 = vst.msk [vmem:[#allocation2 + $0x18] sm:$0xf] %vm602, %v1653
      %v1656 = vsel %vm447, %v1653, 0
      %1658 = vmatpush.msra.mxu0 0.0
      %1659 = vmatpush.msra.mxu0 0.0
      %1660 = vmatpush.msra.mxu0 0.0
      %1661 = vmatpush.msra.mxu0 0.0
      %1662 = vmatpush.msra.mxu0 0.0
      %1663 = vmatpush.msra.mxu0 0.0
      %1664 = vmatpush.msra.mxu0 0.0
      %1665 = vmatpush.msra.mxu0 0.0
      %1666 = vmatpush.msra.mxu0 0.0
      %1667 = vmatpush.msra.mxu0 0.0
      %1668 = vmatpush.msra.mxu0 0.0
      %1669 = vmatpush.msra.mxu0 0.0
      %1670 = vmatpush.msra.mxu0 %v1114
      %1671 = vmatpush.msra.mxu0 %v1113
      %1672 = vmatpush.msra.mxu0 %v1112
      %1673 = vmatpush.msra.mxu0 %v1111
      %1674 = vmatmul.f32.gmra.mxu0 %v1656
      %v1675 = vpop.f32.mrf.mxu0
      %v1676 = vadd.f32 0.0, %v1675
      %1677 = vdwg.mxu0
      %v1679 = vrot.slane %v1676, 4
      %v1681 = vadd.f32 %v1159, %v1679
      %v1682 = vxor.u32 %v1681, 2147483648
      %v1683 = vmul.f32 %v1682, 1.442695
      %v1684 = vpow.pop %v1683
      %v1685 = vadd.f32 %v1684, 1.0
      %v1686 = vrcp.pop %v1685
      %v1687 = vmul.f32 %v1685, %v1686
      %v1688 = vsub.f32 1.0, %v1687
      %v1689 = vmul.f32 %v1686, %v1688
      %v1690 = vadd.f32 %v1686, %v1689
      %vm1691 = vweird.f32 %v1685
      %vm1692 = vweird.f32 %v1686
      %vm1693 = vmor %vm1691, %vm1692
      %v1694 = vsel %vm1693, %v1686, %v1690
      %v1695 = vand.u32 2147483647, %v1685
      %vm1696 = vcmp.eq.f32.partialorder %v1695, 8.507059e+37
      %v1697 = vand.u32 %v1685, 2147483648
      %v1698 = vor.u32 1.1754944e-38, %v1697
      %v1699 = vsel %vm1696, %v1698, %v1694
      %v1700 = vmul.f32 1.0, %v1699
      %v1701 = vtanh.pop %v1681
      %v1703 = vrot.slane %v1644, 4
      %v1705 = vmul.f32 %v1700, %v1703
      %1707 = vrot.lane.b32.xlu0 %v1701, 64
      %v1708 = vpop.permute.xlu0 %1707
      %v1710 = vmul.f32 %v1700, %v1708
      %1712 = vrot.lane.b32.xlu0 %v1710, 32
      %v1713 = vpop.permute.xlu0 %1712
      %v1715 = vadd.f32 %v1705, %v1713
      %v1716 = vtanh.pop %v1715
      %1718 = vrot.lane.b32.xlu0 %v1716, 64
      %v1719 = vpop.permute.xlu0 %1718
      %v1721 = vmul.f32 %v1700, %v1719
      %1723 = vrot.lane.b32.xlu0 %v1721, 32
      %v1724 = vpop.permute.xlu0 %1723
      %1726 = vst.msk [vmem:[#allocation2 + $0x18] sm:$0xf0] %vm674, %v1724
      %v1727 = vld [vmem:[#allocation2] sm:$0xff]
      %v1728 = vld [vmem:[#allocation2 + $0x8] sm:$0xff]
      %v1729 = vld [vmem:[#allocation2 + $0x10] sm:$0xff]
      %v1730 = vld [vmem:[#allocation2 + $0x18] sm:$0xff]
      %s1731 = scalar_lea.vmem %s422, 32
      %v1732 = vld [vmem:[%s1731] sm:$0xff]
      %v1733 = vld [vmem:[%s1731 + $0x8] sm:$0xff]
      %v1734 = vld [vmem:[%s1731 + $0x10] sm:$0xff]
      %v1735 = vld [vmem:[%s1731 + $0x18] sm:$0xff]
      %s1736 = scalar_lea.vmem %s427, 64
      %v1737 = vld [vmem:[%s1736] sm:$0xff]
      %v1738 = vld [vmem:[%s1736 + $0x8] sm:$0xff]
      %v1739 = vld [vmem:[%s1736 + $0x10] sm:$0xff]
      %v1740 = vld [vmem:[%s1736 + $0x18] sm:$0xff]
      %s1741 = scalar_lea.vmem %s431, 2
      %v1742 = vld [vmem:[%s1741] sm:$0x1]
      %v1744 = vperm.slane %v1742, 0
      %v1747 = vsel %vm447, %v1727, 0
      %v1750 = vsel %vm447, %v1728, 0
      %v1753 = vsel %vm447, %v1729, 0
      %v1756 = vsel %vm447, %v1730, 0
      %1758 = vmatpush.msra.mxu0 0.0
      %1759 = vmatpush.msra.mxu0 0.0
      %1760 = vmatpush.msra.mxu0 0.0
      %1761 = vmatpush.msra.mxu0 0.0
      %1762 = vmatpush.msra.mxu0 0.0
      %1763 = vmatpush.msra.mxu0 0.0
      %1764 = vmatpush.msra.mxu0 0.0
      %1765 = vmatpush.msra.mxu0 0.0
      %1766 = vmatpush.msra.mxu0 0.0
      %1767 = vmatpush.msra.mxu0 0.0
      %1768 = vmatpush.msra.mxu0 0.0
      %1769 = vmatpush.msra.mxu0 0.0
      %1770 = vmatpush.msra.mxu0 %v1735
      %1771 = vmatpush.msra.mxu0 %v1734
      %1772 = vmatpush.msra.mxu0 %v1733
      %1773 = vmatpush.msra.mxu0 %v1732
      %1774 = vmatmul.f32.gmra.mxu0 %v1747
      %v1775 = vpop.f32.mrf.mxu0
      %v1776 = vadd.f32 %v1744, %v1775
      %1777 = vmatmul.f32.gmra.mxu0 %v1750
      %v1778 = vpop.f32.mrf.mxu0
      %v1779 = vadd.f32 %v1744, %v1778
      %1780 = vmatmul.f32.gmra.mxu0 %v1753
      %v1781 = vpop.f32.mrf.mxu0
      %v1782 = vadd.f32 %v1744, %v1781
      %1783 = vmatmul.f32.gmra.mxu0 %v1756
      %v1784 = vpop.f32.mrf.mxu0
      %v1785 = vadd.f32 %v1744, %v1784
      %1786 = vdwg.mxu0
      %v1788 = vsel %vm447, %v475, 0
      %1790 = vmatpush.msra.mxu0 0.0
      %1791 = vmatpush.msra.mxu0 0.0
      %1792 = vmatpush.msra.mxu0 0.0
      %1793 = vmatpush.msra.mxu0 0.0
      %1794 = vmatpush.msra.mxu0 0.0
      %1795 = vmatpush.msra.mxu0 0.0
      %1796 = vmatpush.msra.mxu0 0.0
      %1797 = vmatpush.msra.mxu0 0.0
      %1798 = vmatpush.msra.mxu0 0.0
      %1799 = vmatpush.msra.mxu0 0.0
      %1800 = vmatpush.msra.mxu0 0.0
      %1801 = vmatpush.msra.mxu0 0.0
      %1802 = vmatpush.msra.mxu0 %v1740
      %1803 = vmatpush.msra.mxu0 %v1739
      %1804 = vmatpush.msra.mxu0 %v1738
      %1805 = vmatpush.msra.mxu0 %v1737
      %1806 = vmatmul.f32.gmra.mxu0 %v1788
      %v1807 = vpop.f32.mrf.mxu0
      %v1808 = vadd.f32 0.0, %v1807
      %1809 = vdwg.mxu0
      %v1810 = vadd.f32 %v1776, %v1808
      %v1811 = vxor.u32 %v1810, 2147483648
      %v1812 = vmul.f32 %v1811, 1.442695
      %v1813 = vpow.pop %v1812
      %v1814 = vadd.f32 %v1813, 1.0
      %v1815 = vrcp.pop %v1814
      %v1816 = vmul.f32 %v1814, %v1815
      %v1817 = vsub.f32 1.0, %v1816
      %v1818 = vmul.f32 %v1815, %v1817
      %v1819 = vadd.f32 %v1815, %v1818
      %vm1820 = vweird.f32 %v1814
      %vm1821 = vweird.f32 %v1815
      %vm1822 = vmor %vm1820, %vm1821
      %v1823 = vsel %vm1822, %v1815, %v1819
      %v1824 = vand.u32 2147483647, %v1814
      %vm1825 = vcmp.eq.f32.partialorder %v1824, 8.507059e+37
      %v1826 = vand.u32 %v1814, 2147483648
      %v1827 = vor.u32 1.1754944e-38, %v1826
      %v1828 = vsel %vm1825, %v1827, %v1823
      %v1829 = vmul.f32 1.0, %v1828
      %v1830 = vtanh.pop %v1810
      %1831 = vrot.lane.b32.xlu0 %v475, 32
      %v1832 = vpop.permute.xlu0 %1831
      %v1834 = vmul.f32 %v1829, %v1832
      %1836 = vrot.lane.b32.xlu0 %v1830, 64
      %v1837 = vpop.permute.xlu0 %1836
      %v1839 = vmul.f32 %v1829, %v1837
      %1841 = vrot.lane.b32.xlu0 %v1839, 32
      %v1842 = vpop.permute.xlu0 %1841
      %v1844 = vadd.f32 %v1834, %v1842
      %v1845 = vtanh.pop %v1844
      %1847 = vrot.lane.b32.xlu0 %v1845, 64
      %v1848 = vpop.permute.xlu0 %1847
      %v1850 = vmul.f32 %v1829, %v1848
      %1852 = vrot.lane.b32.xlu0 %v1850, 32
      %v1853 = vpop.permute.xlu0 %1852
      %1855 = vst.msk [vmem:[%s436] sm:$0xf] %vm602, %v1853
      %v1856 = vsel %vm447, %v1853, 0
      %1858 = vmatpush.msra.mxu0 0.0
      %1859 = vmatpush.msra.mxu0 0.0
      %1860 = vmatpush.msra.mxu0 0.0
      %1861 = vmatpush.msra.mxu0 0.0
      %1862 = vmatpush.msra.mxu0 0.0
      %1863 = vmatpush.msra.mxu0 0.0
      %1864 = vmatpush.msra.mxu0 0.0
      %1865 = vmatpush.msra.mxu0 0.0
      %1866 = vmatpush.msra.mxu0 0.0
      %1867 = vmatpush.msra.mxu0 0.0
      %1868 = vmatpush.msra.mxu0 0.0
      %1869 = vmatpush.msra.mxu0 0.0
      %1870 = vmatpush.msra.mxu0 %v1740
      %1871 = vmatpush.msra.mxu0 %v1739
      %1872 = vmatpush.msra.mxu0 %v1738
      %1873 = vmatpush.msra.mxu0 %v1737
      %1874 = vmatmul.f32.gmra.mxu0 %v1856
      %v1875 = vpop.f32.mrf.mxu0
      %v1876 = vadd.f32 0.0, %v1875
      %1877 = vdwg.mxu0
      %v1879 = vrot.slane %v1876, 4
      %v1881 = vadd.f32 %v1776, %v1879
      %v1882 = vxor.u32 %v1881, 2147483648
      %v1883 = vmul.f32 %v1882, 1.442695
      %v1884 = vpow.pop %v1883
      %v1885 = vadd.f32 %v1884, 1.0
      %v1886 = vrcp.pop %v1885
      %v1887 = vmul.f32 %v1885, %v1886
      %v1888 = vsub.f32 1.0, %v1887
      %v1889 = vmul.f32 %v1886, %v1888
      %v1890 = vadd.f32 %v1886, %v1889
      %vm1891 = vweird.f32 %v1885
      %vm1892 = vweird.f32 %v1886
      %vm1893 = vmor %vm1891, %vm1892
      %v1894 = vsel %vm1893, %v1886, %v1890
      %v1895 = vand.u32 2147483647, %v1885
      %vm1896 = vcmp.eq.f32.partialorder %v1895, 8.507059e+37
      %v1897 = vand.u32 %v1885, 2147483648
      %v1898 = vor.u32 1.1754944e-38, %v1897
      %v1899 = vsel %vm1896, %v1898, %v1894
      %v1900 = vmul.f32 1.0, %v1899
      %v1901 = vtanh.pop %v1881
      %v1903 = vrot.slane %v1844, 4
      %v1905 = vmul.f32 %v1900, %v1903
      %1907 = vrot.lane.b32.xlu0 %v1901, 64
      %v1908 = vpop.permute.xlu0 %1907
      %v1910 = vmul.f32 %v1900, %v1908
      %1912 = vrot.lane.b32.xlu0 %v1910, 32
      %v1913 = vpop.permute.xlu0 %1912
      %v1915 = vadd.f32 %v1905, %v1913
      %v1916 = vtanh.pop %v1915
      %1918 = vrot.lane.b32.xlu0 %v1916, 64
      %v1919 = vpop.permute.xlu0 %1918
      %v1921 = vmul.f32 %v1900, %v1919
      %1923 = vrot.lane.b32.xlu0 %v1921, 32
      %v1924 = vpop.permute.xlu0 %1923
      %1926 = vst.msk [vmem:[%s436] sm:$0xf0] %vm674, %v1924
      %v1927 = vrot.slane %v1921, 4
      %1928 = vrot.lane.b32.xlu0 %v1927, 32
      %v1929 = vpop.permute.xlu0 %1928
      %v1930 = vsel %vm447, %v1929, 0
      %1932 = vmatpush.msra.mxu0 0.0
      %1933 = vmatpush.msra.mxu0 0.0
      %1934 = vmatpush.msra.mxu0 0.0
      %1935 = vmatpush.msra.mxu0 0.0
      %1936 = vmatpush.msra.mxu0 0.0
      %1937 = vmatpush.msra.mxu0 0.0
      %1938 = vmatpush.msra.mxu0 0.0
      %1939 = vmatpush.msra.mxu0 0.0
      %1940 = vmatpush.msra.mxu0 0.0
      %1941 = vmatpush.msra.mxu0 0.0
      %1942 = vmatpush.msra.mxu0 0.0
      %1943 = vmatpush.msra.mxu0 0.0
      %1944 = vmatpush.msra.mxu0 %v1740
      %1945 = vmatpush.msra.mxu0 %v1739
      %1946 = vmatpush.msra.mxu0 %v1738
      %1947 = vmatpush.msra.mxu0 %v1737
      %1948 = vmatmul.f32.gmra.mxu0 %v1930
      %v1949 = vpop.f32.mrf.mxu0
      %v1950 = vadd.f32 0.0, %v1949
      %1951 = vdwg.mxu0
      %v1952 = vadd.f32 %v1779, %v1950
      %v1953 = vxor.u32 %v1952, 2147483648
      %v1954 = vmul.f32 %v1953, 1.442695
      %v1955 = vpow.pop %v1954
      %v1956 = vadd.f32 %v1955, 1.0
      %v1957 = vrcp.pop %v1956
      %v1958 = vmul.f32 %v1956, %v1957
      %v1959 = vsub.f32 1.0, %v1958
      %v1960 = vmul.f32 %v1957, %v1959
      %v1961 = vadd.f32 %v1957, %v1960
      %vm1962 = vweird.f32 %v1956
      %vm1963 = vweird.f32 %v1957
      %vm1964 = vmor %vm1962, %vm1963
      %v1965 = vsel %vm1964, %v1957, %v1961
      %v1966 = vand.u32 2147483647, %v1956
      %vm1967 = vcmp.eq.f32.partialorder %v1966, 8.507059e+37
      %v1968 = vand.u32 %v1956, 2147483648
      %v1969 = vor.u32 1.1754944e-38, %v1968
      %v1970 = vsel %vm1967, %v1969, %v1965
      %v1971 = vmul.f32 1.0, %v1970
      %v1972 = vtanh.pop %v1952
      %v1974 = vrot.slane %v1915, 4
      %v1976 = vmul.f32 %v1971, %v1974
      %1978 = vrot.lane.b32.xlu0 %v1972, 64
      %v1979 = vpop.permute.xlu0 %1978
      %v1981 = vmul.f32 %v1971, %v1979
      %1983 = vrot.lane.b32.xlu0 %v1981, 32
      %v1984 = vpop.permute.xlu0 %1983
      %v1986 = vadd.f32 %v1976, %v1984
      %v1987 = vtanh.pop %v1986
      %1989 = vrot.lane.b32.xlu0 %v1987, 64
      %v1990 = vpop.permute.xlu0 %1989
      %v1992 = vmul.f32 %v1971, %v1990
      %1994 = vrot.lane.b32.xlu0 %v1992, 32
      %v1995 = vpop.permute.xlu0 %1994
      %1997 = vst.msk [vmem:[%s436 + $0x8] sm:$0xf] %vm602, %v1995
      %v1998 = vsel %vm447, %v1995, 0
      %2000 = vmatpush.msra.mxu0 0.0
      %2001 = vmatpush.msra.mxu0 0.0
      %2002 = vmatpush.msra.mxu0 0.0
      %2003 = vmatpush.msra.mxu0 0.0
      %2004 = vmatpush.msra.mxu0 0.0
      %2005 = vmatpush.msra.mxu0 0.0
      %2006 = vmatpush.msra.mxu0 0.0
      %2007 = vmatpush.msra.mxu0 0.0
      %2008 = vmatpush.msra.mxu0 0.0
      %2009 = vmatpush.msra.mxu0 0.0
      %2010 = vmatpush.msra.mxu0 0.0
      %2011 = vmatpush.msra.mxu0 0.0
      %2012 = vmatpush.msra.mxu0 %v1740
      %2013 = vmatpush.msra.mxu0 %v1739
      %2014 = vmatpush.msra.mxu0 %v1738
      %2015 = vmatpush.msra.mxu0 %v1737
      %2016 = vmatmul.f32.gmra.mxu0 %v1998
      %v2017 = vpop.f32.mrf.mxu0
      %v2018 = vadd.f32 0.0, %v2017
      %2019 = vdwg.mxu0
      %v2021 = vrot.slane %v2018, 4
      %v2023 = vadd.f32 %v1779, %v2021
      %v2024 = vxor.u32 %v2023, 2147483648
      %v2025 = vmul.f32 %v2024, 1.442695
      %v2026 = vpow.pop %v2025
      %v2027 = vadd.f32 %v2026, 1.0
      %v2028 = vrcp.pop %v2027
      %v2029 = vmul.f32 %v2027, %v2028
      %v2030 = vsub.f32 1.0, %v2029
      %v2031 = vmul.f32 %v2028, %v2030
      %v2032 = vadd.f32 %v2028, %v2031
      %vm2033 = vweird.f32 %v2027
      %vm2034 = vweird.f32 %v2028
      %vm2035 = vmor %vm2033, %vm2034
      %v2036 = vsel %vm2035, %v2028, %v2032
      %v2037 = vand.u32 2147483647, %v2027
      %vm2038 = vcmp.eq.f32.partialorder %v2037, 8.507059e+37
      %v2039 = vand.u32 %v2027, 2147483648
      %v2040 = vor.u32 1.1754944e-38, %v2039
      %v2041 = vsel %vm2038, %v2040, %v2036
      %v2042 = vmul.f32 1.0, %v2041
      %v2043 = vtanh.pop %v2023
      %v2045 = vrot.slane %v1986, 4
      %v2047 = vmul.f32 %v2042, %v2045
      %2049 = vrot.lane.b32.xlu0 %v2043, 64
      %v2050 = vpop.permute.xlu0 %2049
      %v2052 = vmul.f32 %v2042, %v2050
      %2054 = vrot.lane.b32.xlu0 %v2052, 32
      %v2055 = vpop.permute.xlu0 %2054
      %v2057 = vadd.f32 %v2047, %v2055
      %v2058 = vtanh.pop %v2057
      %2060 = vrot.lane.b32.xlu0 %v2058, 64
      %v2061 = vpop.permute.xlu0 %2060
      %v2063 = vmul.f32 %v2042, %v2061
      %2065 = vrot.lane.b32.xlu0 %v2063, 32
      %v2066 = vpop.permute.xlu0 %2065
      %2068 = vst.msk [vmem:[%s436 + $0x8] sm:$0xf0] %vm674, %v2066
      %v2069 = vrot.slane %v2063, 4
      %2070 = vrot.lane.b32.xlu0 %v2069, 32
      %v2071 = vpop.permute.xlu0 %2070
      %v2072 = vsel %vm447, %v2071, 0
      %2074 = vmatpush.msra.mxu0 0.0
      %2075 = vmatpush.msra.mxu0 0.0
      %2076 = vmatpush.msra.mxu0 0.0
      %2077 = vmatpush.msra.mxu0 0.0
      %2078 = vmatpush.msra.mxu0 0.0
      %2079 = vmatpush.msra.mxu0 0.0
      %2080 = vmatpush.msra.mxu0 0.0
      %2081 = vmatpush.msra.mxu0 0.0
      %2082 = vmatpush.msra.mxu0 0.0
      %2083 = vmatpush.msra.mxu0 0.0
      %2084 = vmatpush.msra.mxu0 0.0
      %2085 = vmatpush.msra.mxu0 0.0
      %2086 = vmatpush.msra.mxu0 %v1740
      %2087 = vmatpush.msra.mxu0 %v1739
      %2088 = vmatpush.msra.mxu0 %v1738
      %2089 = vmatpush.msra.mxu0 %v1737
      %2090 = vmatmul.f32.gmra.mxu0 %v2072
      %v2091 = vpop.f32.mrf.mxu0
      %v2092 = vadd.f32 0.0, %v2091
      %2093 = vdwg.mxu0
      %v2094 = vadd.f32 %v1782, %v2092
      %v2095 = vxor.u32 %v2094, 2147483648
      %v2096 = vmul.f32 %v2095, 1.442695
      %v2097 = vpow.pop %v2096
      %v2098 = vadd.f32 %v2097, 1.0
      %v2099 = vrcp.pop %v2098
      %v2100 = vmul.f32 %v2098, %v2099
      %v2101 = vsub.f32 1.0, %v2100
      %v2102 = vmul.f32 %v2099, %v2101
      %v2103 = vadd.f32 %v2099, %v2102
      %vm2104 = vweird.f32 %v2098
      %vm2105 = vweird.f32 %v2099
      %vm2106 = vmor %vm2104, %vm2105
      %v2107 = vsel %vm2106, %v2099, %v2103
      %v2108 = vand.u32 2147483647, %v2098
      %vm2109 = vcmp.eq.f32.partialorder %v2108, 8.507059e+37
      %v2110 = vand.u32 %v2098, 2147483648
      %v2111 = vor.u32 1.1754944e-38, %v2110
      %v2112 = vsel %vm2109, %v2111, %v2107
      %v2113 = vmul.f32 1.0, %v2112
      %v2114 = vtanh.pop %v2094
      %v2116 = vrot.slane %v2057, 4
      %v2118 = vmul.f32 %v2113, %v2116
      %2120 = vrot.lane.b32.xlu0 %v2114, 64
      %v2121 = vpop.permute.xlu0 %2120
      %v2123 = vmul.f32 %v2113, %v2121
      %2125 = vrot.lane.b32.xlu0 %v2123, 32
      %v2126 = vpop.permute.xlu0 %2125
      %v2128 = vadd.f32 %v2118, %v2126
      %v2129 = vtanh.pop %v2128
      %2131 = vrot.lane.b32.xlu0 %v2129, 64
      %v2132 = vpop.permute.xlu0 %2131
      %v2134 = vmul.f32 %v2113, %v2132
      %2136 = vrot.lane.b32.xlu0 %v2134, 32
      %v2137 = vpop.permute.xlu0 %2136
      %2139 = vst.msk [vmem:[%s436 + $0x10] sm:$0xf] %vm602, %v2137
      %v2140 = vsel %vm447, %v2137, 0
      %2142 = vmatpush.msra.mxu0 0.0
      %2143 = vmatpush.msra.mxu0 0.0
      %2144 = vmatpush.msra.mxu0 0.0
      %2145 = vmatpush.msra.mxu0 0.0
      %2146 = vmatpush.msra.mxu0 0.0
      %2147 = vmatpush.msra.mxu0 0.0
      %2148 = vmatpush.msra.mxu0 0.0
      %2149 = vmatpush.msra.mxu0 0.0
      %2150 = vmatpush.msra.mxu0 0.0
      %2151 = vmatpush.msra.mxu0 0.0
      %2152 = vmatpush.msra.mxu0 0.0
      %2153 = vmatpush.msra.mxu0 0.0
      %2154 = vmatpush.msra.mxu0 %v1740
      %2155 = vmatpush.msra.mxu0 %v1739
      %2156 = vmatpush.msra.mxu0 %v1738
      %2157 = vmatpush.msra.mxu0 %v1737
      %2158 = vmatmul.f32.gmra.mxu0 %v2140
      %v2159 = vpop.f32.mrf.mxu0
      %v2160 = vadd.f32 0.0, %v2159
      %2161 = vdwg.mxu0
      %v2163 = vrot.slane %v2160, 4
      %v2165 = vadd.f32 %v1782, %v2163
      %v2166 = vxor.u32 %v2165, 2147483648
      %v2167 = vmul.f32 %v2166, 1.442695
      %v2168 = vpow.pop %v2167
      %v2169 = vadd.f32 %v2168, 1.0
      %v2170 = vrcp.pop %v2169
      %v2171 = vmul.f32 %v2169, %v2170
      %v2172 = vsub.f32 1.0, %v2171
      %v2173 = vmul.f32 %v2170, %v2172
      %v2174 = vadd.f32 %v2170, %v2173
      %vm2175 = vweird.f32 %v2169
      %vm2176 = vweird.f32 %v2170
      %vm2177 = vmor %vm2175, %vm2176
      %v2178 = vsel %vm2177, %v2170, %v2174
      %v2179 = vand.u32 2147483647, %v2169
      %vm2180 = vcmp.eq.f32.partialorder %v2179, 8.507059e+37
      %v2181 = vand.u32 %v2169, 2147483648
      %v2182 = vor.u32 1.1754944e-38, %v2181
      %v2183 = vsel %vm2180, %v2182, %v2178
      %v2184 = vmul.f32 1.0, %v2183
      %v2185 = vtanh.pop %v2165
      %v2187 = vrot.slane %v2128, 4
      %v2189 = vmul.f32 %v2184, %v2187
      %2191 = vrot.lane.b32.xlu0 %v2185, 64
      %v2192 = vpop.permute.xlu0 %2191
      %v2194 = vmul.f32 %v2184, %v2192
      %2196 = vrot.lane.b32.xlu0 %v2194, 32
      %v2197 = vpop.permute.xlu0 %2196
      %v2199 = vadd.f32 %v2189, %v2197
      %v2200 = vtanh.pop %v2199
      %2202 = vrot.lane.b32.xlu0 %v2200, 64
      %v2203 = vpop.permute.xlu0 %2202
      %v2205 = vmul.f32 %v2184, %v2203
      %2207 = vrot.lane.b32.xlu0 %v2205, 32
      %v2208 = vpop.permute.xlu0 %2207
      %2210 = vst.msk [vmem:[%s436 + $0x10] sm:$0xf0] %vm674, %v2208
      %v2211 = vrot.slane %v2205, 4
      %2212 = vrot.lane.b32.xlu0 %v2211, 32
      %v2213 = vpop.permute.xlu0 %2212
      %v2214 = vsel %vm447, %v2213, 0
      %2216 = vmatpush.msra.mxu0 0.0
      %2217 = vmatpush.msra.mxu0 0.0
      %2218 = vmatpush.msra.mxu0 0.0
      %2219 = vmatpush.msra.mxu0 0.0
      %2220 = vmatpush.msra.mxu0 0.0
      %2221 = vmatpush.msra.mxu0 0.0
      %2222 = vmatpush.msra.mxu0 0.0
      %2223 = vmatpush.msra.mxu0 0.0
      %2224 = vmatpush.msra.mxu0 0.0
      %2225 = vmatpush.msra.mxu0 0.0
      %2226 = vmatpush.msra.mxu0 0.0
      %2227 = vmatpush.msra.mxu0 0.0
      %2228 = vmatpush.msra.mxu0 %v1740
      %2229 = vmatpush.msra.mxu0 %v1739
      %2230 = vmatpush.msra.mxu0 %v1738
      %2231 = vmatpush.msra.mxu0 %v1737
      %2232 = vmatmul.f32.gmra.mxu0 %v2214
      %v2233 = vpop.f32.mrf.mxu0
      %v2234 = vadd.f32 0.0, %v2233
      %2235 = vdwg.mxu0
      %v2236 = vadd.f32 %v1785, %v2234
      %v2237 = vxor.u32 %v2236, 2147483648
      %v2238 = vmul.f32 %v2237, 1.442695
      %v2239 = vpow.pop %v2238
      %v2240 = vadd.f32 %v2239, 1.0
      %v2241 = vrcp.pop %v2240
      %v2242 = vmul.f32 %v2240, %v2241
      %v2243 = vsub.f32 1.0, %v2242
      %v2244 = vmul.f32 %v2241, %v2243
      %v2245 = vadd.f32 %v2241, %v2244
      %vm2246 = vweird.f32 %v2240
      %vm2247 = vweird.f32 %v2241
      %vm2248 = vmor %vm2246, %vm2247
      %v2249 = vsel %vm2248, %v2241, %v2245
      %v2250 = vand.u32 2147483647, %v2240
      %vm2251 = vcmp.eq.f32.partialorder %v2250, 8.507059e+37
      %v2252 = vand.u32 %v2240, 2147483648
      %v2253 = vor.u32 1.1754944e-38, %v2252
      %v2254 = vsel %vm2251, %v2253, %v2249
      %v2255 = vmul.f32 1.0, %v2254
      %v2256 = vtanh.pop %v2236
      %v2258 = vrot.slane %v2199, 4
      %v2260 = vmul.f32 %v2255, %v2258
      %2262 = vrot.lane.b32.xlu0 %v2256, 64
      %v2263 = vpop.permute.xlu0 %2262
      %v2265 = vmul.f32 %v2255, %v2263
      %2267 = vrot.lane.b32.xlu0 %v2265, 32
      %v2268 = vpop.permute.xlu0 %2267
      %v2270 = vadd.f32 %v2260, %v2268
      %v2271 = vtanh.pop %v2270
      %2273 = vrot.lane.b32.xlu0 %v2271, 64
      %v2274 = vpop.permute.xlu0 %2273
      %v2276 = vmul.f32 %v2255, %v2274
      %2278 = vrot.lane.b32.xlu0 %v2276, 32
      %v2279 = vpop.permute.xlu0 %2278
      %2281 = vst.msk [vmem:[%s436 + $0x18] sm:$0xf] %vm602, %v2279
      %v2282 = vsel %vm447, %v2279, 0
      %2284 = vmatpush.msra.mxu0 0.0
      %2285 = vmatpush.msra.mxu0 0.0
      %2286 = vmatpush.msra.mxu0 0.0
      %2287 = vmatpush.msra.mxu0 0.0
      %2288 = vmatpush.msra.mxu0 0.0
      %2289 = vmatpush.msra.mxu0 0.0
      %2290 = vmatpush.msra.mxu0 0.0
      %2291 = vmatpush.msra.mxu0 0.0
      %2292 = vmatpush.msra.mxu0 0.0
      %2293 = vmatpush.msra.mxu0 0.0
      %2294 = vmatpush.msra.mxu0 0.0
      %2295 = vmatpush.msra.mxu0 0.0
      %2296 = vmatpush.msra.mxu0 %v1740
      %2297 = vmatpush.msra.mxu0 %v1739
      %2298 = vmatpush.msra.mxu0 %v1738
      %2299 = vmatpush.msra.mxu0 %v1737
      %2300 = vmatmul.f32.gmra.mxu0 %v2282
      %v2301 = vpop.f32.mrf.mxu0
      %v2302 = vadd.f32 0.0, %v2301
      %2303 = vdwg.mxu0
      %v2305 = vrot.slane %v2302, 4
      %v2307 = vadd.f32 %v1785, %v2305
      %v2308 = vxor.u32 %v2307, 2147483648
      %v2309 = vmul.f32 %v2308, 1.442695
      %v2310 = vpow.pop %v2309
      %v2311 = vadd.f32 %v2310, 1.0
      %v2312 = vrcp.pop %v2311
      %v2313 = vmul.f32 %v2311, %v2312
      %v2314 = vsub.f32 1.0, %v2313
      %v2315 = vmul.f32 %v2312, %v2314
      %v2316 = vadd.f32 %v2312, %v2315
      %vm2317 = vweird.f32 %v2311
      %vm2318 = vweird.f32 %v2312
      %vm2319 = vmor %vm2317, %vm2318
      %v2320 = vsel %vm2319, %v2312, %v2316
      %v2321 = vand.u32 2147483647, %v2311
      %vm2322 = vcmp.eq.f32.partialorder %v2321, 8.507059e+37
      %v2323 = vand.u32 %v2311, 2147483648
      %v2324 = vor.u32 1.1754944e-38, %v2323
      %v2325 = vsel %vm2322, %v2324, %v2320
      %v2326 = vmul.f32 1.0, %v2325
      %v2327 = vtanh.pop %v2307
      %v2329 = vrot.slane %v2270, 4
      %v2331 = vmul.f32 %v2326, %v2329
      %2333 = vrot.lane.b32.xlu0 %v2327, 64
      %v2334 = vpop.permute.xlu0 %2333
      %v2336 = vmul.f32 %v2326, %v2334
      %2338 = vrot.lane.b32.xlu0 %v2336, 32
      %v2339 = vpop.permute.xlu0 %2338
      %v2341 = vadd.f32 %v2331, %v2339
      %v2342 = vtanh.pop %v2341
      %2344 = vrot.lane.b32.xlu0 %v2342, 64
      %v2345 = vpop.permute.xlu0 %2344
      %v2347 = vmul.f32 %v2326, %v2345
      %2349 = vrot.lane.b32.xlu0 %v2347, 32
      %v2350 = vpop.permute.xlu0 %2349
      %2352 = vst.msk [vmem:[%s436 + $0x18] sm:$0xf0] %vm674, %v2350
      %p2353 = scmp.lt.s32.totalorder %s19, 2
      %s2354 = scalar_select %p2353, %s19, 2
      %s2355 = smul.addr %s2354, 4
      %s2356 = smul.addr %s2355, 8
      %s2357 = scalar_lea.vmem %s8, %s2356
      // Predicated region
      $region53: #{nslstm_forward.1} parent=51 // pred_check
        %p2358 = pneg %p245
      $region54: #{nslstm_forward.1} parent=51 // pred_check_branch
        %2360 = sbr.rel (%p2358) target = $region56
      $region55: #{nslstm_forward.1} parent=51 // pred_region
        _
      $region56: #{nslstm_forward.1} parent=51 // pred_fallthru
        _
    $region52: #{nslstm_forward.1} parent=5 // pred_fallthru
      _
    %p2361 = scmp.le.s32.totalorder 2, %s14
    // Predicated region
    $region57: #{nslstm_forward.1} parent=5 // pred_check
      %p2362 = pneg %p2361
    $region58: #{nslstm_forward.1} parent=5 // pred_check_branch
      %2364 = sbr.rel (%p2362) target = $region60
    $region59: #{nslstm_forward.1} parent=5 // pred_region
      %s2365 = ssub.s32 %s14, 2
      // Predicated region
      $region61: #{nslstm_forward.1} parent=59 // pred_check
        %p2366 = pneg %p251
      $region62: #{nslstm_forward.1} parent=59 // pred_check_branch
        %2368 = sbr.rel (%p2366) target = $region64
      $region63: #{nslstm_forward.1} parent=59 // pred_region
        %p2369 = scmp.lt.s32.totalorder %s20, 2
        %s2370 = scalar_select %p2369, %s20, 2
        %s2371 = smul.addr %s2370, 4
        %s2372 = smul.addr %s2371, 8
        %s2373 = scalar_lea.vmem %s8, %s2372
      $region64: #{nslstm_forward.1} parent=59 // pred_fallthru
        _
    $region60: #{nslstm_forward.1} parent=5 // pred_fallthru
      _
  $region6: #{nslstm_forward.1} parent=0 // loop_footer
    %s18 = sadd.s32 1, %s14
  $region7: #{nslstm_forward.1} parent=0 // loop_footer_branch
    %13 = sbr.rel target = $region3
  $region8: #{nslstm_forward.1} parent=0 // loop_exit
    _

</llo_original>
